<compile_context>
chip_gen: v7x
topology: tpu7x:2x2x1
jax: 0.10.0
libtpu: 0.0.40
codegen_flags: <defaults>
</compile_context>

<pallas_src>
import functools

import jax
import jax.numpy as jnp
from jax import lax
from jax.experimental import pallas as pl
from jax.experimental.pallas import tpu as pltpu

EPS = 1e-6
NEG_INF = -1e9


# ------------------------------ fused kernel -------------------------------- #

def decoder_block_kernel(
    x_ref, enc_ref, maskb_ref, ln_ref,
    sa_wq_ref, sa_bq_ref, sa_wkv_ref, sa_bkv_ref, sa_wo_ref, sa_bo_ref,
    ca_wq_ref, ca_bq_ref, ca_wkv_ref, ca_bkv_ref, ca_wo_ref, ca_bo_ref,
    ff_w1_ref, ff_b1_ref, ff_w2_ref, ff_b2_ref,
    o_ref, *, nheads):
    x = x_ref[0]                    # (S, D)       current batch element
    enc = enc_ref[0]                # (S_enc, D)
    ln = ln_ref[...]                # (3, 2)       rows = [gain, bias] per LN
    mask_bias = maskb_ref[...]      # (S, S)       additive bias: 0 or -1e9

    d = x.shape[-1]
    dk = d // nheads
    scale = 1.0 / (dk ** 0.5)

    def recip(v):
        # EUP approximate reciprocal + one Newton step -> ~f32 precision.
        r = pl.reciprocal(v, approx=True)
        return r * (2.0 - v * r)

    def layer_norm(v, idx):
        g = ln[idx:idx + 1, 0:1]    # (1, 1) broadcastable scalar gain
        b = ln[idx:idx + 1, 1:2]    # (1, 1) broadcastable scalar bias
        mean = jnp.mean(v, axis=-1, keepdims=True)
        diff = v - mean
        # unbiased std (matches torch.std), then (x - mean) / (std + eps)
        var = jnp.sum(diff * diff, axis=-1, keepdims=True) * (1.0 / (d - 1))
        inv = recip(jnp.sqrt(var) + EPS)
        return diff * inv * g + b

    def mha(q_in, kv_in, wq, bq, wkv, bkv, wo, bo, bias):
        # projections: one Q matmul, one fused K/V matmul (lane-dense 2*d out)
        q = jnp.dot(q_in, wq, preferred_element_type=jnp.float32) + bq       # (Sq, D)
        kv = jnp.dot(kv_in, wkv, preferred_element_type=jnp.float32) + bkv   # (Skv, 2D)
        k = kv[:, :d]
        v = kv[:, d:]
        ctx = []
        for h in range(nheads):                       # static unrolled head loop
            lo = h * dk
            qh = q[:, lo:lo + dk]
            kh = k[:, lo:lo + dk]
            vh = v[:, lo:lo + dk]
            # q @ k^T without materializing k.T (contract last dims).
            sc = lax.dot_general(qh, kh, (((1,), (1,)), ((), ())),
                                 preferred_element_type=jnp.float32) * scale
            if bias is not None:
                sc = sc + bias
            sc = sc - jnp.max(sc, axis=-1, keepdims=True)
            p = jnp.exp(sc)
            p = p * recip(jnp.sum(p, axis=-1, keepdims=True))
            ctx.append(jnp.dot(p, vh, preferred_element_type=jnp.float32))
        ctx = jnp.concatenate(ctx, axis=-1)                                   # (Sq, D)
        return jnp.dot(ctx, wo, preferred_element_type=jnp.float32) + bo

    # --- residual connection 0: masked self-attention ---
    n = layer_norm(x, 0)
    x = x + mha(n, n, sa_wq_ref[...], sa_bq_ref[...], sa_wkv_ref[...],
                sa_bkv_ref[...], sa_wo_ref[...], sa_bo_ref[...], mask_bias)

    # --- residual connection 1: cross-attention over encoder output (mask=None) ---
    n = layer_norm(x, 1)
    x = x + mha(n, enc, ca_wq_ref[...], ca_bq_ref[...], ca_wkv_ref[...],
                ca_bkv_ref[...], ca_wo_ref[...], ca_bo_ref[...], None)

    # --- residual connection 2: feed-forward (relu) ---
    n = layer_norm(x, 2)
    h = jnp.dot(n, ff_w1_ref[...], preferred_element_type=jnp.float32) + ff_b1_ref[...]
    h = jnp.maximum(h, 0.0)
    x = x + jnp.dot(h, ff_w2_ref[...], preferred_element_type=jnp.float32) + ff_b2_ref[...]

    o_ref[0] = x


# --------------------------------- wrapper ----------------------------------- #

def decoder_block_forward(x, encoder_out, src_mask, tgt_mask, params, nheads):
    """Single fused pallas_call for the whole DecoderBlock forward."""
    # src_mask intentionally unused: the reference module calls the
    # cross-attention block with mask=None.
    del src_mask
    b, s, d = x.shape
    s_enc = encoder_out.shape[1]
    sa, ca, ff = params["self_attn"], params["cross_attn"], params["ff"]
    d_ff = ff["w1"].shape[1]

    # Host/XLA-side one-time prep: fused K/V weights, additive mask bias, LN scalars.
    sa_wkv = jnp.concatenate([sa["wk"], sa["wv"]], axis=1)     # (d, 2d)
    sa_bkv = jnp.concatenate([sa["bk"], sa["bv"]], axis=1)     # (1, 2d)
    ca_wkv = jnp.concatenate([ca["wk"], ca["wv"]], axis=1)
    ca_bkv = jnp.concatenate([ca["bk"], ca["bv"]], axis=1)
    mask_bias = jnp.where(tgt_mask == 0.0, NEG_INF, 0.0).astype(jnp.float32)
    ln_params = jnp.stack([
        jnp.concatenate([params["ln0_g"], params["ln0_b"]]),
        jnp.concatenate([params["ln1_g"], params["ln1_b"]]),
        jnp.concatenate([params["ln2_g"], params["ln2_b"]]),
    ])                                                          # (3, 2)

    def const2(i):
        return (0, 0)

    in_specs = [
        pl.BlockSpec((1, s, d), lambda i: (i, 0, 0)),           # x
        pl.BlockSpec((1, s_enc, d), lambda i: (i, 0, 0)),       # encoder_out
        pl.BlockSpec((s, s), const2),                           # additive tgt-mask bias
        pl.BlockSpec((3, 2), const2),                           # LN gain/bias scalars
        # self-attention weights (VMEM-resident across the batch grid)
        pl.BlockSpec((d, d), const2), pl.BlockSpec((1, d), const2),
        pl.BlockSpec((d, 2 * d), const2), pl.BlockSpec((1, 2 * d), const2),
        pl.BlockSpec((d, d), const2), pl.BlockSpec((1, d), const2),
        # cross-attention weights
        pl.BlockSpec((d, d), const2), pl.BlockSpec((1, d), const2),
        pl.BlockSpec((d, 2 * d), const2), pl.BlockSpec((1, 2 * d), const2),
        pl.BlockSpec((d, d), const2), pl.BlockSpec((1, d), const2),
        # feed-forward weights
        pl.BlockSpec((d, d_ff), const2), pl.BlockSpec((1, d_ff), const2),
        pl.BlockSpec((d_ff, d), const2), pl.BlockSpec((1, d), const2),
    ]

    kern = functools.partial(decoder_block_kernel, nheads=nheads)
    return pl.pallas_call(
        kern,
        out_shape=jax.ShapeDtypeStruct((b, s, d), jnp.float32),
        grid=(b,),
        in_specs=in_specs,
        out_specs=pl.BlockSpec((1, s, d), lambda i: (i, 0, 0)),
        compiler_params=pltpu.CompilerParams(
            dimension_semantics=("parallel",)),
    )(x, encoder_out, mask_bias, ln_params,
      sa["wq"], sa["bq"], sa_wkv, sa_bkv, sa["wo"], sa["bo"],
      ca["wq"], ca["bq"], ca_wkv, ca_bkv, ca["wo"], ca["bo"],
      ff["w1"], ff["b1"], ff["w2"], ff["b2"])


# --------------------------- pure-JAX reference ------------------------------ #

def _ref_layernorm(x, g, bias):
    d = x.shape[-1]
    mean = jnp.mean(x, axis=-1, keepdims=True)
    diff = x - mean
    std = jnp.sqrt(jnp.sum(diff * diff, axis=-1, keepdims=True) / (d - 1))
    return diff / (std + EPS) * g[0] + bias[0]


def _ref_mha(x_q, x_kv, mask, p, nheads):
    b, sq, d = x_q.shape
    skv = x_kv.shape[1]
    dk = d // nheads
    q = (x_q.reshape(-1, d) @ p["wq"] + p["bq"]).reshape(b, sq, nheads, dk).transpose(0, 2, 1, 3)
    k = (x_kv.reshape(-1, d) @ p["wk"] + p["bk"]).reshape(b, skv, nheads, dk).transpose(0, 2, 1, 3)
    v = (x_kv.reshape(-1, d) @ p["wv"] + p["bv"]).reshape(b, skv, nheads, dk).transpose(0, 2, 1, 3)
    sc = jnp.einsum("bhqd,bhkd->bhqk", q, k) / (dk ** 0.5)
    if mask is not None:
        sc = jnp.where(mask == 0.0, NEG_INF, sc)   # masked_fill semantics (torch)
    p_attn = jax.nn.softmax(sc, axis=-1)
    o = jnp.einsum("bhqk,bhkd->bhqd", p_attn, v).transpose(0, 2, 1, 3).reshape(b * sq, d)
    return (o @ p["wo"] + p["bo"]).reshape(b, sq, d)


def _ref_decoder(x, enc, tgt_mask, params, nheads):
    n = _ref_layernorm(x, params["ln0_g"], params["ln0_b"])
    x = x + _ref_mha(n, n, tgt_mask, params["self_attn"], nheads)
    n = _ref_layernorm(x, params["ln1_g"], params["ln1_b"])
    x = x + _ref_mha(n, enc, None, params["cross_attn"], nheads)
    n = _ref_layernorm(x, params["ln2_g"], params["ln2_b"])
    h = jnp.maximum(n.reshape(-1, n.shape[-1]) @ params["ff"]["w1"] + params["ff"]["b1"], 0.0)
    x = x + (h @ params["ff"]["w2"] + params["ff"]["b2"]).reshape(x.shape)
    return x


# ----------------------------------- main ------------------------------------ #

def _init_params(key, d_model, d_ff):
    def lin(k, din, dout, scale=0.1):
        kw, kb = jax.random.split(k)
        return (scale * jax.random.normal(kw, (din, dout), jnp.float32),
                scale * jax.random.normal(kb, (1, dout), jnp.float32))

    keys = jax.random.split(key, 16)
    p = {}
    for i, name in enumerate(["self_attn", "cross_attn"]):
        base = 4 * i
        wq, bq = lin(keys[base + 0], d_model, d_model)
        wk, bk = lin(keys[base + 1], d_model, d_model)
        wv, bv = lin(keys[base + 2], d_model, d_model)
        wo, bo = lin(keys[base + 3], d_model, d_model)
        p[name] = dict(wq=wq, bq=bq, wk=wk, bk=bk, wv=wv, bv=bv, wo=wo, bo=bo)
    w1, b1 = lin(keys[8], d_model, d_ff)
    w2, b2 = lin(keys[9], d_ff, d_model)
    p["ff"] = dict(w1=w1, b1=b1, w2=w2, b2=b2)
    # LayerNormalization params: scalar gain=1, bias=0 (as in the torch init).
    for i in range(3):
        p[f"ln{i}_g"] = jnp.ones((1,), jnp.float32)
        p[f"ln{i}_b"] = jnp.zeros((1,), jnp.float32)
    return p


if __name__ == "__main__":
    B, S, S_ENC, D_MODEL, N_HEADS, D_FF = 2, 8, 8, 32, 4, 64

    key = jax.random.PRNGKey(0)
    kx, kenc, kparams = jax.random.split(key, 3)
    x = jax.random.normal(kx, (B, S, D_MODEL), jnp.float32)
    encoder_out = jax.random.normal(kenc, (B, S_ENC, D_MODEL), jnp.float32)
    tgt_mask = jnp.tril(jnp.ones((S, S), jnp.float32))        # causal mask
    src_mask = jnp.ones((S, S_ENC), jnp.float32)              # unused (module passes None)
    params = _init_params(kparams, D_MODEL, D_FF)

    out = decoder_block_forward(x, encoder_out, src_mask, tgt_mask, params, N_HEADS)
    out = jax.block_until_ready(out)

    ref = _ref_decoder(x, encoder_out, tgt_mask, params, N_HEADS)
    assert out.shape == (B, S, D_MODEL)
    assert jnp.allclose(out, ref, rtol=5e-4, atol=5e-4), \
        f"max abs err {jnp.max(jnp.abs(out - ref))}"

    # TODO(synk): dropout layers are identity here (eval mode / p=0).
    print("KERNEL_OK")
</pallas_src>

<mosaic_0001>
module attributes {stable_mosaic.version = 11 : i64} {
  func.func @decoder_block_kernel(%arg0: i32, %arg1: memref<1x8x32xf32, #tpu.memory_space<vmem>>, %arg2: memref<1x8x32xf32, #tpu.memory_space<vmem>>, %arg3: memref<8x8xf32, #tpu.memory_space<vmem>>, %arg4: memref<3x2xf32, #tpu.memory_space<vmem>>, %arg5: memref<32x32xf32, #tpu.memory_space<vmem>>, %arg6: memref<1x32xf32, #tpu.memory_space<vmem>>, %arg7: memref<32x64xf32, #tpu.memory_space<vmem>>, %arg8: memref<1x64xf32, #tpu.memory_space<vmem>>, %arg9: memref<32x32xf32, #tpu.memory_space<vmem>>, %arg10: memref<1x32xf32, #tpu.memory_space<vmem>>, %arg11: memref<32x32xf32, #tpu.memory_space<vmem>>, %arg12: memref<1x32xf32, #tpu.memory_space<vmem>>, %arg13: memref<32x64xf32, #tpu.memory_space<vmem>>, %arg14: memref<1x64xf32, #tpu.memory_space<vmem>>, %arg15: memref<32x32xf32, #tpu.memory_space<vmem>>, %arg16: memref<1x32xf32, #tpu.memory_space<vmem>>, %arg17: memref<32x64xf32, #tpu.memory_space<vmem>>, %arg18: memref<1x64xf32, #tpu.memory_space<vmem>>, %arg19: memref<64x32xf32, #tpu.memory_space<vmem>>, %arg20: memref<1x32xf32, #tpu.memory_space<vmem>>, %arg21: memref<1x8x32xf32, #tpu.memory_space<vmem>>) attributes {dimension_semantics = [#tpu.dimension_semantics<parallel>], iteration_bounds = array<i64: 2>, scalar_prefetch = 0 : i64, scratch_operands = 0 : i64, tpu.core_type = #tpu.core_type<tc>, window_params = [{transform_indices = @transform_0, window_bounds = array<i64: 1, 8, 32>}, {transform_indices = @transform_1, window_bounds = array<i64: 1, 8, 32>}, {pipeline_mode = #tpu.pipeline_mode<synchronous>, transform_indices = @transform_2, window_bounds = array<i64: 8, 8>}, {pipeline_mode = #tpu.pipeline_mode<synchronous>, transform_indices = @transform_3, window_bounds = array<i64: 3, 2>}, {pipeline_mode = #tpu.pipeline_mode<synchronous>, transform_indices = @transform_4, window_bounds = array<i64: 32, 32>}, {pipeline_mode = #tpu.pipeline_mode<synchronous>, transform_indices = @transform_5, window_bounds = array<i64: 1, 32>}, {pipeline_mode = #tpu.pipeline_mode<synchronous>, transform_indices = @transform_6, window_bounds = array<i64: 32, 64>}, {pipeline_mode = #tpu.pipeline_mode<synchronous>, transform_indices = @transform_7, window_bounds = array<i64: 1, 64>}, {pipeline_mode = #tpu.pipeline_mode<synchronous>, transform_indices = @transform_8, window_bounds = array<i64: 32, 32>}, {pipeline_mode = #tpu.pipeline_mode<synchronous>, transform_indices = @transform_9, window_bounds = array<i64: 1, 32>}, {pipeline_mode = #tpu.pipeline_mode<synchronous>, transform_indices = @transform_10, window_bounds = array<i64: 32, 32>}, {pipeline_mode = #tpu.pipeline_mode<synchronous>, transform_indices = @transform_11, window_bounds = array<i64: 1, 32>}, {pipeline_mode = #tpu.pipeline_mode<synchronous>, transform_indices = @transform_12, window_bounds = array<i64: 32, 64>}, {pipeline_mode = #tpu.pipeline_mode<synchronous>, transform_indices = @transform_13, window_bounds = array<i64: 1, 64>}, {pipeline_mode = #tpu.pipeline_mode<synchronous>, transform_indices = @transform_14, window_bounds = array<i64: 32, 32>}, {pipeline_mode = #tpu.pipeline_mode<synchronous>, transform_indices = @transform_15, window_bounds = array<i64: 1, 32>}, {pipeline_mode = #tpu.pipeline_mode<synchronous>, transform_indices = @transform_16, window_bounds = array<i64: 32, 64>}, {pipeline_mode = #tpu.pipeline_mode<synchronous>, transform_indices = @transform_17, window_bounds = array<i64: 1, 64>}, {pipeline_mode = #tpu.pipeline_mode<synchronous>, transform_indices = @transform_18, window_bounds = array<i64: 64, 32>}, {pipeline_mode = #tpu.pipeline_mode<synchronous>, transform_indices = @transform_19, window_bounds = array<i64: 1, 32>}, {transform_indices = @transform_20, window_bounds = array<i64: 1, 8, 32>}]} {
    %c0 = arith.constant 0 : index
    %c0_0 = arith.constant 0 : index
    %c0_1 = arith.constant 0 : index
    %0 = vector.load %arg1[%c0, %c0_0, %c0_1] : memref<1x8x32xf32, #tpu.memory_space<vmem>>, vector<1x8x32xf32>
    %1 = vector.shape_cast %0 : vector<1x8x32xf32> to vector<8x32xf32>
    %c0_2 = arith.constant 0 : index
    %c0_3 = arith.constant 0 : index
    %c0_4 = arith.constant 0 : index
    %2 = vector.load %arg2[%c0_2, %c0_3, %c0_4] : memref<1x8x32xf32, #tpu.memory_space<vmem>>, vector<1x8x32xf32>
    %3 = vector.shape_cast %2 : vector<1x8x32xf32> to vector<8x32xf32>
    %c0_5 = arith.constant 0 : index
    %c0_6 = arith.constant 0 : index
    %4 = vector.load %arg4[%c0_5, %c0_6] : memref<3x2xf32, #tpu.memory_space<vmem>>, vector<3x2xf32>
    %c0_7 = arith.constant 0 : index
    %c0_8 = arith.constant 0 : index
    %5 = vector.load %arg3[%c0_7, %c0_8] : memref<8x8xf32, #tpu.memory_space<vmem>>, vector<8x8xf32>
    %6 = vector.extract_strided_slice %4 {offsets = [0, 0], sizes = [1, 1], strides = [1, 1]} : vector<3x2xf32> to vector<1x1xf32>
    %7 = vector.extract_strided_slice %4 {offsets = [0, 1], sizes = [1, 1], strides = [1, 1]} : vector<3x2xf32> to vector<1x1xf32>
    %cst = arith.constant dense<0.000000e+00> : vector<8xf32>
    %8 = vector.multi_reduction <add>, %1, %cst [1] : vector<8x32xf32> to vector<8xf32>
    %9 = vector.shape_cast %8 : vector<8xf32> to vector<8x1xf32>
    %cst_9 = arith.constant 3.200000e+01 : f32
    %10 = vector.broadcast %cst_9 : f32 to vector<8x1xf32>
    %11 = arith.divf %9, %10 : vector<8x1xf32>
    %12 = vector.broadcast %11 : vector<8x1xf32> to vector<8x32xf32>
    %13 = arith.subf %1, %12 : vector<8x32xf32>
    %14 = arith.mulf %13, %13 : vector<8x32xf32>
    %cst_10 = arith.constant dense<0.000000e+00> : vector<8xf32>
    %15 = vector.multi_reduction <add>, %14, %cst_10 [1] : vector<8x32xf32> to vector<8xf32>
    %16 = vector.shape_cast %15 : vector<8xf32> to vector<8x1xf32>
    %cst_11 = arith.constant 0.0322580636 : f32
    %17 = vector.broadcast %cst_11 : f32 to vector<8x1xf32>
    %18 = arith.mulf %16, %17 : vector<8x1xf32>
    %19 = math.sqrt %18 : vector<8x1xf32>
    %cst_12 = arith.constant 9.99999997E-7 : f32
    %20 = vector.broadcast %cst_12 : f32 to vector<8x1xf32>
    %21 = arith.addf %19, %20 : vector<8x1xf32>
    %22 = tpu.reciprocal %21 {approx = true} : vector<8x1xf32> -> vector<8x1xf32>
    %23 = arith.mulf %21, %22 : vector<8x1xf32>
    %cst_13 = arith.constant 2.000000e+00 : f32
    %24 = vector.broadcast %cst_13 : f32 to vector<8x1xf32>
    %25 = arith.subf %24, %23 : vector<8x1xf32>
    %26 = arith.mulf %22, %25 : vector<8x1xf32>
    %27 = vector.broadcast %26 : vector<8x1xf32> to vector<8x32xf32>
    %28 = arith.mulf %13, %27 : vector<8x32xf32>
    %29 = vector.broadcast %6 : vector<1x1xf32> to vector<8x32xf32>
    %30 = arith.mulf %28, %29 : vector<8x32xf32>
    %31 = vector.broadcast %7 : vector<1x1xf32> to vector<8x32xf32>
    %32 = arith.addf %30, %31 : vector<8x32xf32>
    %c0_14 = arith.constant 0 : index
    %c0_15 = arith.constant 0 : index
    %33 = vector.load %arg5[%c0_14, %c0_15] : memref<32x32xf32, #tpu.memory_space<vmem>>, vector<32x32xf32>
    %c0_16 = arith.constant 0 : index
    %c0_17 = arith.constant 0 : index
    %34 = vector.load %arg6[%c0_16, %c0_17] : memref<1x32xf32, #tpu.memory_space<vmem>>, vector<1x32xf32>
    %c0_18 = arith.constant 0 : index
    %c0_19 = arith.constant 0 : index
    %35 = vector.load %arg7[%c0_18, %c0_19] : memref<32x64xf32, #tpu.memory_space<vmem>>, vector<32x64xf32>
    %c0_20 = arith.constant 0 : index
    %c0_21 = arith.constant 0 : index
    %36 = vector.load %arg8[%c0_20, %c0_21] : memref<1x64xf32, #tpu.memory_space<vmem>>, vector<1x64xf32>
    %c0_22 = arith.constant 0 : index
    %c0_23 = arith.constant 0 : index
    %37 = vector.load %arg9[%c0_22, %c0_23] : memref<32x32xf32, #tpu.memory_space<vmem>>, vector<32x32xf32>
    %c0_24 = arith.constant 0 : index
    %c0_25 = arith.constant 0 : index
    %38 = vector.load %arg10[%c0_24, %c0_25] : memref<1x32xf32, #tpu.memory_space<vmem>>, vector<1x32xf32>
    %cst_26 = arith.constant dense<0.000000e+00> : vector<8x32xf32>
    %39 = tpu.matmul %32, %33, %cst_26 {dimension_numbers = #tpu.dot_dimension_numbers<[1], [0], [0], [1], [0, 0, 1, 1], [], []>} : vector<8x32xf32>, vector<32x32xf32>, vector<8x32xf32> -> vector<8x32xf32>
    %40 = vector.broadcast %34 : vector<1x32xf32> to vector<8x32xf32>
    %41 = arith.addf %39, %40 : vector<8x32xf32>
    %cst_27 = arith.constant dense<0.000000e+00> : vector<8x64xf32>
    %42 = tpu.matmul %32, %35, %cst_27 {dimension_numbers = #tpu.dot_dimension_numbers<[1], [0], [0], [1], [0, 0, 1, 1], [], []>} : vector<8x32xf32>, vector<32x64xf32>, vector<8x64xf32> -> vector<8x64xf32>
    %43 = vector.broadcast %36 : vector<1x64xf32> to vector<8x64xf32>
    %44 = arith.addf %42, %43 : vector<8x64xf32>
    %45 = vector.extract_strided_slice %44 {offsets = [0, 0], sizes = [8, 32], strides = [1, 1]} : vector<8x64xf32> to vector<8x32xf32>
    %46 = vector.extract_strided_slice %44 {offsets = [0, 32], sizes = [8, 32], strides = [1, 1]} : vector<8x64xf32> to vector<8x32xf32>
    %47 = vector.extract_strided_slice %41 {offsets = [0, 0], sizes = [8, 8], strides = [1, 1]} : vector<8x32xf32> to vector<8x8xf32>
    %48 = vector.extract_strided_slice %45 {offsets = [0, 0], sizes = [8, 8], strides = [1, 1]} : vector<8x32xf32> to vector<8x8xf32>
    %49 = vector.extract_strided_slice %46 {offsets = [0, 0], sizes = [8, 8], strides = [1, 1]} : vector<8x32xf32> to vector<8x8xf32>
    %cst_28 = arith.constant dense<0.000000e+00> : vector<8x8xf32>
    %50 = tpu.matmul %47, %48, %cst_28 {dimension_numbers = #tpu.dot_dimension_numbers<[1], [1], [0], [0], [0, 0, 1, 0], [], []>} : vector<8x8xf32>, vector<8x8xf32>, vector<8x8xf32> -> vector<8x8xf32>
    %cst_29 = arith.constant 0.353553385 : f32
    %51 = vector.broadcast %cst_29 : f32 to vector<8x8xf32>
    %52 = arith.mulf %50, %51 : vector<8x8xf32>
    %53 = arith.addf %52, %5 : vector<8x8xf32>
    %cst_30 = arith.constant dense<0xFF800000> : vector<8xf32>
    %54 = vector.multi_reduction <maximumf>, %53, %cst_30 [1] : vector<8x8xf32> to vector<8xf32>
    %55 = vector.shape_cast %54 : vector<8xf32> to vector<8x1xf32>
    %56 = vector.broadcast %55 : vector<8x1xf32> to vector<8x8xf32>
    %57 = arith.subf %53, %56 : vector<8x8xf32>
    %58 = math.exp %57 : vector<8x8xf32>
    %cst_31 = arith.constant dense<0.000000e+00> : vector<8xf32>
    %59 = vector.multi_reduction <add>, %58, %cst_31 [1] : vector<8x8xf32> to vector<8xf32>
    %60 = vector.shape_cast %59 : vector<8xf32> to vector<8x1xf32>
    %61 = tpu.reciprocal %60 {approx = true} : vector<8x1xf32> -> vector<8x1xf32>
    %62 = arith.mulf %60, %61 : vector<8x1xf32>
    %cst_32 = arith.constant 2.000000e+00 : f32
    %63 = vector.broadcast %cst_32 : f32 to vector<8x1xf32>
    %64 = arith.subf %63, %62 : vector<8x1xf32>
    %65 = arith.mulf %61, %64 : vector<8x1xf32>
    %66 = vector.broadcast %65 : vector<8x1xf32> to vector<8x8xf32>
    %67 = arith.mulf %58, %66 : vector<8x8xf32>
    %cst_33 = arith.constant dense<0.000000e+00> : vector<8x8xf32>
    %68 = tpu.matmul %67, %49, %cst_33 {dimension_numbers = #tpu.dot_dimension_numbers<[1], [0], [0], [1], [0, 0, 1, 1], [], []>} : vector<8x8xf32>, vector<8x8xf32>, vector<8x8xf32> -> vector<8x8xf32>
    %69 = vector.extract_strided_slice %41 {offsets = [0, 8], sizes = [8, 8], strides = [1, 1]} : vector<8x32xf32> to vector<8x8xf32>
    %70 = vector.extract_strided_slice %45 {offsets = [0, 8], sizes = [8, 8], strides = [1, 1]} : vector<8x32xf32> to vector<8x8xf32>
    %71 = vector.extract_strided_slice %46 {offsets = [0, 8], sizes = [8, 8], strides = [1, 1]} : vector<8x32xf32> to vector<8x8xf32>
    %cst_34 = arith.constant dense<0.000000e+00> : vector<8x8xf32>
    %72 = tpu.matmul %69, %70, %cst_34 {dimension_numbers = #tpu.dot_dimension_numbers<[1], [1], [0], [0], [0, 0, 1, 0], [], []>} : vector<8x8xf32>, vector<8x8xf32>, vector<8x8xf32> -> vector<8x8xf32>
    %cst_35 = arith.constant 0.353553385 : f32
    %73 = vector.broadcast %cst_35 : f32 to vector<8x8xf32>
    %74 = arith.mulf %72, %73 : vector<8x8xf32>
    %75 = arith.addf %74, %5 : vector<8x8xf32>
    %cst_36 = arith.constant dense<0xFF800000> : vector<8xf32>
    %76 = vector.multi_reduction <maximumf>, %75, %cst_36 [1] : vector<8x8xf32> to vector<8xf32>
    %77 = vector.shape_cast %76 : vector<8xf32> to vector<8x1xf32>
    %78 = vector.broadcast %77 : vector<8x1xf32> to vector<8x8xf32>
    %79 = arith.subf %75, %78 : vector<8x8xf32>
    %80 = math.exp %79 : vector<8x8xf32>
    %cst_37 = arith.constant dense<0.000000e+00> : vector<8xf32>
    %81 = vector.multi_reduction <add>, %80, %cst_37 [1] : vector<8x8xf32> to vector<8xf32>
    %82 = vector.shape_cast %81 : vector<8xf32> to vector<8x1xf32>
    %83 = tpu.reciprocal %82 {approx = true} : vector<8x1xf32> -> vector<8x1xf32>
    %84 = arith.mulf %82, %83 : vector<8x1xf32>
    %cst_38 = arith.constant 2.000000e+00 : f32
    %85 = vector.broadcast %cst_38 : f32 to vector<8x1xf32>
    %86 = arith.subf %85, %84 : vector<8x1xf32>
    %87 = arith.mulf %83, %86 : vector<8x1xf32>
    %88 = vector.broadcast %87 : vector<8x1xf32> to vector<8x8xf32>
    %89 = arith.mulf %80, %88 : vector<8x8xf32>
    %cst_39 = arith.constant dense<0.000000e+00> : vector<8x8xf32>
    %90 = tpu.matmul %89, %71, %cst_39 {dimension_numbers = #tpu.dot_dimension_numbers<[1], [0], [0], [1], [0, 0, 1, 1], [], []>} : vector<8x8xf32>, vector<8x8xf32>, vector<8x8xf32> -> vector<8x8xf32>
    %91 = vector.extract_strided_slice %41 {offsets = [0, 16], sizes = [8, 8], strides = [1, 1]} : vector<8x32xf32> to vector<8x8xf32>
    %92 = vector.extract_strided_slice %45 {offsets = [0, 16], sizes = [8, 8], strides = [1, 1]} : vector<8x32xf32> to vector<8x8xf32>
    %93 = vector.extract_strided_slice %46 {offsets = [0, 16], sizes = [8, 8], strides = [1, 1]} : vector<8x32xf32> to vector<8x8xf32>
    %cst_40 = arith.constant dense<0.000000e+00> : vector<8x8xf32>
    %94 = tpu.matmul %91, %92, %cst_40 {dimension_numbers = #tpu.dot_dimension_numbers<[1], [1], [0], [0], [0, 0, 1, 0], [], []>} : vector<8x8xf32>, vector<8x8xf32>, vector<8x8xf32> -> vector<8x8xf32>
    %cst_41 = arith.constant 0.353553385 : f32
    %95 = vector.broadcast %cst_41 : f32 to vector<8x8xf32>
    %96 = arith.mulf %94, %95 : vector<8x8xf32>
    %97 = arith.addf %96, %5 : vector<8x8xf32>
    %cst_42 = arith.constant dense<0xFF800000> : vector<8xf32>
    %98 = vector.multi_reduction <maximumf>, %97, %cst_42 [1] : vector<8x8xf32> to vector<8xf32>
    %99 = vector.shape_cast %98 : vector<8xf32> to vector<8x1xf32>
    %100 = vector.broadcast %99 : vector<8x1xf32> to vector<8x8xf32>
    %101 = arith.subf %97, %100 : vector<8x8xf32>
    %102 = math.exp %101 : vector<8x8xf32>
    %cst_43 = arith.constant dense<0.000000e+00> : vector<8xf32>
    %103 = vector.multi_reduction <add>, %102, %cst_43 [1] : vector<8x8xf32> to vector<8xf32>
    %104 = vector.shape_cast %103 : vector<8xf32> to vector<8x1xf32>
    %105 = tpu.reciprocal %104 {approx = true} : vector<8x1xf32> -> vector<8x1xf32>
    %106 = arith.mulf %104, %105 : vector<8x1xf32>
    %cst_44 = arith.constant 2.000000e+00 : f32
    %107 = vector.broadcast %cst_44 : f32 to vector<8x1xf32>
    %108 = arith.subf %107, %106 : vector<8x1xf32>
    %109 = arith.mulf %105, %108 : vector<8x1xf32>
    %110 = vector.broadcast %109 : vector<8x1xf32> to vector<8x8xf32>
    %111 = arith.mulf %102, %110 : vector<8x8xf32>
    %cst_45 = arith.constant dense<0.000000e+00> : vector<8x8xf32>
    %112 = tpu.matmul %111, %93, %cst_45 {dimension_numbers = #tpu.dot_dimension_numbers<[1], [0], [0], [1], [0, 0, 1, 1], [], []>} : vector<8x8xf32>, vector<8x8xf32>, vector<8x8xf32> -> vector<8x8xf32>
    %113 = vector.extract_strided_slice %41 {offsets = [0, 24], sizes = [8, 8], strides = [1, 1]} : vector<8x32xf32> to vector<8x8xf32>
    %114 = vector.extract_strided_slice %45 {offsets = [0, 24], sizes = [8, 8], strides = [1, 1]} : vector<8x32xf32> to vector<8x8xf32>
    %115 = vector.extract_strided_slice %46 {offsets = [0, 24], sizes = [8, 8], strides = [1, 1]} : vector<8x32xf32> to vector<8x8xf32>
    %cst_46 = arith.constant dense<0.000000e+00> : vector<8x8xf32>
    %116 = tpu.matmul %113, %114, %cst_46 {dimension_numbers = #tpu.dot_dimension_numbers<[1], [1], [0], [0], [0, 0, 1, 0], [], []>} : vector<8x8xf32>, vector<8x8xf32>, vector<8x8xf32> -> vector<8x8xf32>
    %cst_47 = arith.constant 0.353553385 : f32
    %117 = vector.broadcast %cst_47 : f32 to vector<8x8xf32>
    %118 = arith.mulf %116, %117 : vector<8x8xf32>
    %119 = arith.addf %118, %5 : vector<8x8xf32>
    %cst_48 = arith.constant dense<0xFF800000> : vector<8xf32>
    %120 = vector.multi_reduction <maximumf>, %119, %cst_48 [1] : vector<8x8xf32> to vector<8xf32>
    %121 = vector.shape_cast %120 : vector<8xf32> to vector<8x1xf32>
    %122 = vector.broadcast %121 : vector<8x1xf32> to vector<8x8xf32>
    %123 = arith.subf %119, %122 : vector<8x8xf32>
    %124 = math.exp %123 : vector<8x8xf32>
    %cst_49 = arith.constant dense<0.000000e+00> : vector<8xf32>
    %125 = vector.multi_reduction <add>, %124, %cst_49 [1] : vector<8x8xf32> to vector<8xf32>
    %126 = vector.shape_cast %125 : vector<8xf32> to vector<8x1xf32>
    %127 = tpu.reciprocal %126 {approx = true} : vector<8x1xf32> -> vector<8x1xf32>
    %128 = arith.mulf %126, %127 : vector<8x1xf32>
    %cst_50 = arith.constant 2.000000e+00 : f32
    %129 = vector.broadcast %cst_50 : f32 to vector<8x1xf32>
    %130 = arith.subf %129, %128 : vector<8x1xf32>
    %131 = arith.mulf %127, %130 : vector<8x1xf32>
    %132 = vector.broadcast %131 : vector<8x1xf32> to vector<8x8xf32>
    %133 = arith.mulf %124, %132 : vector<8x8xf32>
    %cst_51 = arith.constant dense<0.000000e+00> : vector<8x8xf32>
    %134 = tpu.matmul %133, %115, %cst_51 {dimension_numbers = #tpu.dot_dimension_numbers<[1], [0], [0], [1], [0, 0, 1, 1], [], []>} : vector<8x8xf32>, vector<8x8xf32>, vector<8x8xf32> -> vector<8x8xf32>
    %135 = tpu.concatenate %68, %90, %112, %134 in 1 : vector<8x8xf32>, vector<8x8xf32>, vector<8x8xf32>, vector<8x8xf32> -> vector<8x32xf32>
    %cst_52 = arith.constant dense<0.000000e+00> : vector<8x32xf32>
    %136 = tpu.matmul %135, %37, %cst_52 {dimension_numbers = #tpu.dot_dimension_numbers<[1], [0], [0], [1], [0, 0, 1, 1], [], []>} : vector<8x32xf32>, vector<32x32xf32>, vector<8x32xf32> -> vector<8x32xf32>
    %137 = vector.broadcast %38 : vector<1x32xf32> to vector<8x32xf32>
    %138 = arith.addf %136, %137 : vector<8x32xf32>
    %139 = arith.addf %1, %138 : vector<8x32xf32>
    %140 = vector.extract_strided_slice %4 {offsets = [1, 0], sizes = [1, 1], strides = [1, 1]} : vector<3x2xf32> to vector<1x1xf32>
    %141 = vector.extract_strided_slice %4 {offsets = [1, 1], sizes = [1, 1], strides = [1, 1]} : vector<3x2xf32> to vector<1x1xf32>
    %cst_53 = arith.constant dense<0.000000e+00> : vector<8xf32>
    %142 = vector.multi_reduction <add>, %139, %cst_53 [1] : vector<8x32xf32> to vector<8xf32>
    %143 = vector.shape_cast %142 : vector<8xf32> to vector<8x1xf32>
    %cst_54 = arith.constant 3.200000e+01 : f32
    %144 = vector.broadcast %cst_54 : f32 to vector<8x1xf32>
    %145 = arith.divf %143, %144 : vector<8x1xf32>
    %146 = vector.broadcast %145 : vector<8x1xf32> to vector<8x32xf32>
    %147 = arith.subf %139, %146 : vector<8x32xf32>
    %148 = arith.mulf %147, %147 : vector<8x32xf32>
    %cst_55 = arith.constant dense<0.000000e+00> : vector<8xf32>
    %149 = vector.multi_reduction <add>, %148, %cst_55 [1] : vector<8x32xf32> to vector<8xf32>
    %150 = vector.shape_cast %149 : vector<8xf32> to vector<8x1xf32>
    %cst_56 = arith.constant 0.0322580636 : f32
    %151 = vector.broadcast %cst_56 : f32 to vector<8x1xf32>
    %152 = arith.mulf %150, %151 : vector<8x1xf32>
    %153 = math.sqrt %152 : vector<8x1xf32>
    %cst_57 = arith.constant 9.99999997E-7 : f32
    %154 = vector.broadcast %cst_57 : f32 to vector<8x1xf32>
    %155 = arith.addf %153, %154 : vector<8x1xf32>
    %156 = tpu.reciprocal %155 {approx = true} : vector<8x1xf32> -> vector<8x1xf32>
    %157 = arith.mulf %155, %156 : vector<8x1xf32>
    %cst_58 = arith.constant 2.000000e+00 : f32
    %158 = vector.broadcast %cst_58 : f32 to vector<8x1xf32>
    %159 = arith.subf %158, %157 : vector<8x1xf32>
    %160 = arith.mulf %156, %159 : vector<8x1xf32>
    %161 = vector.broadcast %160 : vector<8x1xf32> to vector<8x32xf32>
    %162 = arith.mulf %147, %161 : vector<8x32xf32>
    %163 = vector.broadcast %140 : vector<1x1xf32> to vector<8x32xf32>
    %164 = arith.mulf %162, %163 : vector<8x32xf32>
    %165 = vector.broadcast %141 : vector<1x1xf32> to vector<8x32xf32>
    %166 = arith.addf %164, %165 : vector<8x32xf32>
    %c0_59 = arith.constant 0 : index
    %c0_60 = arith.constant 0 : index
    %167 = vector.load %arg11[%c0_59, %c0_60] : memref<32x32xf32, #tpu.memory_space<vmem>>, vector<32x32xf32>
    %c0_61 = arith.constant 0 : index
    %c0_62 = arith.constant 0 : index
    %168 = vector.load %arg12[%c0_61, %c0_62] : memref<1x32xf32, #tpu.memory_space<vmem>>, vector<1x32xf32>
    %c0_63 = arith.constant 0 : index
    %c0_64 = arith.constant 0 : index
    %169 = vector.load %arg13[%c0_63, %c0_64] : memref<32x64xf32, #tpu.memory_space<vmem>>, vector<32x64xf32>
    %c0_65 = arith.constant 0 : index
    %c0_66 = arith.constant 0 : index
    %170 = vector.load %arg14[%c0_65, %c0_66] : memref<1x64xf32, #tpu.memory_space<vmem>>, vector<1x64xf32>
    %c0_67 = arith.constant 0 : index
    %c0_68 = arith.constant 0 : index
    %171 = vector.load %arg15[%c0_67, %c0_68] : memref<32x32xf32, #tpu.memory_space<vmem>>, vector<32x32xf32>
    %c0_69 = arith.constant 0 : index
    %c0_70 = arith.constant 0 : index
    %172 = vector.load %arg16[%c0_69, %c0_70] : memref<1x32xf32, #tpu.memory_space<vmem>>, vector<1x32xf32>
    %cst_71 = arith.constant dense<0.000000e+00> : vector<8x32xf32>
    %173 = tpu.matmul %166, %167, %cst_71 {dimension_numbers = #tpu.dot_dimension_numbers<[1], [0], [0], [1], [0, 0, 1, 1], [], []>} : vector<8x32xf32>, vector<32x32xf32>, vector<8x32xf32> -> vector<8x32xf32>
    %174 = vector.broadcast %168 : vector<1x32xf32> to vector<8x32xf32>
    %175 = arith.addf %173, %174 : vector<8x32xf32>
    %cst_72 = arith.constant dense<0.000000e+00> : vector<8x64xf32>
    %176 = tpu.matmul %3, %169, %cst_72 {dimension_numbers = #tpu.dot_dimension_numbers<[1], [0], [0], [1], [0, 0, 1, 1], [], []>} : vector<8x32xf32>, vector<32x64xf32>, vector<8x64xf32> -> vector<8x64xf32>
    %177 = vector.broadcast %170 : vector<1x64xf32> to vector<8x64xf32>
    %178 = arith.addf %176, %177 : vector<8x64xf32>
    %179 = vector.extract_strided_slice %178 {offsets = [0, 0], sizes = [8, 32], strides = [1, 1]} : vector<8x64xf32> to vector<8x32xf32>
    %180 = vector.extract_strided_slice %178 {offsets = [0, 32], sizes = [8, 32], strides = [1, 1]} : vector<8x64xf32> to vector<8x32xf32>
    %181 = vector.extract_strided_slice %175 {offsets = [0, 0], sizes = [8, 8], strides = [1, 1]} : vector<8x32xf32> to vector<8x8xf32>
    %182 = vector.extract_strided_slice %179 {offsets = [0, 0], sizes = [8, 8], strides = [1, 1]} : vector<8x32xf32> to vector<8x8xf32>
    %183 = vector.extract_strided_slice %180 {offsets = [0, 0], sizes = [8, 8], strides = [1, 1]} : vector<8x32xf32> to vector<8x8xf32>
    %cst_73 = arith.constant dense<0.000000e+00> : vector<8x8xf32>
    %184 = tpu.matmul %181, %182, %cst_73 {dimension_numbers = #tpu.dot_dimension_numbers<[1], [1], [0], [0], [0, 0, 1, 0], [], []>} : vector<8x8xf32>, vector<8x8xf32>, vector<8x8xf32> -> vector<8x8xf32>
    %cst_74 = arith.constant 0.353553385 : f32
    %185 = vector.broadcast %cst_74 : f32 to vector<8x8xf32>
    %186 = arith.mulf %184, %185 : vector<8x8xf32>
    %cst_75 = arith.constant dense<0xFF800000> : vector<8xf32>
    %187 = vector.multi_reduction <maximumf>, %186, %cst_75 [1] : vector<8x8xf32> to vector<8xf32>
    %188 = vector.shape_cast %187 : vector<8xf32> to vector<8x1xf32>
    %189 = vector.broadcast %188 : vector<8x1xf32> to vector<8x8xf32>
    %190 = arith.subf %186, %189 : vector<8x8xf32>
    %191 = math.exp %190 : vector<8x8xf32>
    %cst_76 = arith.constant dense<0.000000e+00> : vector<8xf32>
    %192 = vector.multi_reduction <add>, %191, %cst_76 [1] : vector<8x8xf32> to vector<8xf32>
    %193 = vector.shape_cast %192 : vector<8xf32> to vector<8x1xf32>
    %194 = tpu.reciprocal %193 {approx = true} : vector<8x1xf32> -> vector<8x1xf32>
    %195 = arith.mulf %193, %194 : vector<8x1xf32>
    %cst_77 = arith.constant 2.000000e+00 : f32
    %196 = vector.broadcast %cst_77 : f32 to vector<8x1xf32>
    %197 = arith.subf %196, %195 : vector<8x1xf32>
    %198 = arith.mulf %194, %197 : vector<8x1xf32>
    %199 = vector.broadcast %198 : vector<8x1xf32> to vector<8x8xf32>
    %200 = arith.mulf %191, %199 : vector<8x8xf32>
    %cst_78 = arith.constant dense<0.000000e+00> : vector<8x8xf32>
    %201 = tpu.matmul %200, %183, %cst_78 {dimension_numbers = #tpu.dot_dimension_numbers<[1], [0], [0], [1], [0, 0, 1, 1], [], []>} : vector<8x8xf32>, vector<8x8xf32>, vector<8x8xf32> -> vector<8x8xf32>
    %202 = vector.extract_strided_slice %175 {offsets = [0, 8], sizes = [8, 8], strides = [1, 1]} : vector<8x32xf32> to vector<8x8xf32>
    %203 = vector.extract_strided_slice %179 {offsets = [0, 8], sizes = [8, 8], strides = [1, 1]} : vector<8x32xf32> to vector<8x8xf32>
    %204 = vector.extract_strided_slice %180 {offsets = [0, 8], sizes = [8, 8], strides = [1, 1]} : vector<8x32xf32> to vector<8x8xf32>
    %cst_79 = arith.constant dense<0.000000e+00> : vector<8x8xf32>
    %205 = tpu.matmul %202, %203, %cst_79 {dimension_numbers = #tpu.dot_dimension_numbers<[1], [1], [0], [0], [0, 0, 1, 0], [], []>} : vector<8x8xf32>, vector<8x8xf32>, vector<8x8xf32> -> vector<8x8xf32>
    %cst_80 = arith.constant 0.353553385 : f32
    %206 = vector.broadcast %cst_80 : f32 to vector<8x8xf32>
    %207 = arith.mulf %205, %206 : vector<8x8xf32>
    %cst_81 = arith.constant dense<0xFF800000> : vector<8xf32>
    %208 = vector.multi_reduction <maximumf>, %207, %cst_81 [1] : vector<8x8xf32> to vector<8xf32>
    %209 = vector.shape_cast %208 : vector<8xf32> to vector<8x1xf32>
    %210 = vector.broadcast %209 : vector<8x1xf32> to vector<8x8xf32>
    %211 = arith.subf %207, %210 : vector<8x8xf32>
    %212 = math.exp %211 : vector<8x8xf32>
    %cst_82 = arith.constant dense<0.000000e+00> : vector<8xf32>
    %213 = vector.multi_reduction <add>, %212, %cst_82 [1] : vector<8x8xf32> to vector<8xf32>
    %214 = vector.shape_cast %213 : vector<8xf32> to vector<8x1xf32>
    %215 = tpu.reciprocal %214 {approx = true} : vector<8x1xf32> -> vector<8x1xf32>
    %216 = arith.mulf %214, %215 : vector<8x1xf32>
    %cst_83 = arith.constant 2.000000e+00 : f32
    %217 = vector.broadcast %cst_83 : f32 to vector<8x1xf32>
    %218 = arith.subf %217, %216 : vector<8x1xf32>
    %219 = arith.mulf %215, %218 : vector<8x1xf32>
    %220 = vector.broadcast %219 : vector<8x1xf32> to vector<8x8xf32>
    %221 = arith.mulf %212, %220 : vector<8x8xf32>
    %cst_84 = arith.constant dense<0.000000e+00> : vector<8x8xf32>
    %222 = tpu.matmul %221, %204, %cst_84 {dimension_numbers = #tpu.dot_dimension_numbers<[1], [0], [0], [1], [0, 0, 1, 1], [], []>} : vector<8x8xf32>, vector<8x8xf32>, vector<8x8xf32> -> vector<8x8xf32>
    %223 = vector.extract_strided_slice %175 {offsets = [0, 16], sizes = [8, 8], strides = [1, 1]} : vector<8x32xf32> to vector<8x8xf32>
    %224 = vector.extract_strided_slice %179 {offsets = [0, 16], sizes = [8, 8], strides = [1, 1]} : vector<8x32xf32> to vector<8x8xf32>
    %225 = vector.extract_strided_slice %180 {offsets = [0, 16], sizes = [8, 8], strides = [1, 1]} : vector<8x32xf32> to vector<8x8xf32>
    %cst_85 = arith.constant dense<0.000000e+00> : vector<8x8xf32>
    %226 = tpu.matmul %223, %224, %cst_85 {dimension_numbers = #tpu.dot_dimension_numbers<[1], [1], [0], [0], [0, 0, 1, 0], [], []>} : vector<8x8xf32>, vector<8x8xf32>, vector<8x8xf32> -> vector<8x8xf32>
    %cst_86 = arith.constant 0.353553385 : f32
    %227 = vector.broadcast %cst_86 : f32 to vector<8x8xf32>
    %228 = arith.mulf %226, %227 : vector<8x8xf32>
    %cst_87 = arith.constant dense<0xFF800000> : vector<8xf32>
    %229 = vector.multi_reduction <maximumf>, %228, %cst_87 [1] : vector<8x8xf32> to vector<8xf32>
    %230 = vector.shape_cast %229 : vector<8xf32> to vector<8x1xf32>
    %231 = vector.broadcast %230 : vector<8x1xf32> to vector<8x8xf32>
    %232 = arith.subf %228, %231 : vector<8x8xf32>
    %233 = math.exp %232 : vector<8x8xf32>
    %cst_88 = arith.constant dense<0.000000e+00> : vector<8xf32>
    %234 = vector.multi_reduction <add>, %233, %cst_88 [1] : vector<8x8xf32> to vector<8xf32>
    %235 = vector.shape_cast %234 : vector<8xf32> to vector<8x1xf32>
    %236 = tpu.reciprocal %235 {approx = true} : vector<8x1xf32> -> vector<8x1xf32>
    %237 = arith.mulf %235, %236 : vector<8x1xf32>
    %cst_89 = arith.constant 2.000000e+00 : f32
    %238 = vector.broadcast %cst_89 : f32 to vector<8x1xf32>
    %239 = arith.subf %238, %237 : vector<8x1xf32>
    %240 = arith.mulf %236, %239 : vector<8x1xf32>
    %241 = vector.broadcast %240 : vector<8x1xf32> to vector<8x8xf32>
    %242 = arith.mulf %233, %241 : vector<8x8xf32>
    %cst_90 = arith.constant dense<0.000000e+00> : vector<8x8xf32>
    %243 = tpu.matmul %242, %225, %cst_90 {dimension_numbers = #tpu.dot_dimension_numbers<[1], [0], [0], [1], [0, 0, 1, 1], [], []>} : vector<8x8xf32>, vector<8x8xf32>, vector<8x8xf32> -> vector<8x8xf32>
    %244 = vector.extract_strided_slice %175 {offsets = [0, 24], sizes = [8, 8], strides = [1, 1]} : vector<8x32xf32> to vector<8x8xf32>
    %245 = vector.extract_strided_slice %179 {offsets = [0, 24], sizes = [8, 8], strides = [1, 1]} : vector<8x32xf32> to vector<8x8xf32>
    %246 = vector.extract_strided_slice %180 {offsets = [0, 24], sizes = [8, 8], strides = [1, 1]} : vector<8x32xf32> to vector<8x8xf32>
    %cst_91 = arith.constant dense<0.000000e+00> : vector<8x8xf32>
    %247 = tpu.matmul %244, %245, %cst_91 {dimension_numbers = #tpu.dot_dimension_numbers<[1], [1], [0], [0], [0, 0, 1, 0], [], []>} : vector<8x8xf32>, vector<8x8xf32>, vector<8x8xf32> -> vector<8x8xf32>
    %cst_92 = arith.constant 0.353553385 : f32
    %248 = vector.broadcast %cst_92 : f32 to vector<8x8xf32>
    %249 = arith.mulf %247, %248 : vector<8x8xf32>
    %cst_93 = arith.constant dense<0xFF800000> : vector<8xf32>
    %250 = vector.multi_reduction <maximumf>, %249, %cst_93 [1] : vector<8x8xf32> to vector<8xf32>
    %251 = vector.shape_cast %250 : vector<8xf32> to vector<8x1xf32>
    %252 = vector.broadcast %251 : vector<8x1xf32> to vector<8x8xf32>
    %253 = arith.subf %249, %252 : vector<8x8xf32>
    %254 = math.exp %253 : vector<8x8xf32>
    %cst_94 = arith.constant dense<0.000000e+00> : vector<8xf32>
    %255 = vector.multi_reduction <add>, %254, %cst_94 [1] : vector<8x8xf32> to vector<8xf32>
    %256 = vector.shape_cast %255 : vector<8xf32> to vector<8x1xf32>
    %257 = tpu.reciprocal %256 {approx = true} : vector<8x1xf32> -> vector<8x1xf32>
    %258 = arith.mulf %256, %257 : vector<8x1xf32>
    %cst_95 = arith.constant 2.000000e+00 : f32
    %259 = vector.broadcast %cst_95 : f32 to vector<8x1xf32>
    %260 = arith.subf %259, %258 : vector<8x1xf32>
    %261 = arith.mulf %257, %260 : vector<8x1xf32>
    %262 = vector.broadcast %261 : vector<8x1xf32> to vector<8x8xf32>
    %263 = arith.mulf %254, %262 : vector<8x8xf32>
    %cst_96 = arith.constant dense<0.000000e+00> : vector<8x8xf32>
    %264 = tpu.matmul %263, %246, %cst_96 {dimension_numbers = #tpu.dot_dimension_numbers<[1], [0], [0], [1], [0, 0, 1, 1], [], []>} : vector<8x8xf32>, vector<8x8xf32>, vector<8x8xf32> -> vector<8x8xf32>
    %265 = tpu.concatenate %201, %222, %243, %264 in 1 : vector<8x8xf32>, vector<8x8xf32>, vector<8x8xf32>, vector<8x8xf32> -> vector<8x32xf32>
    %cst_97 = arith.constant dense<0.000000e+00> : vector<8x32xf32>
    %266 = tpu.matmul %265, %171, %cst_97 {dimension_numbers = #tpu.dot_dimension_numbers<[1], [0], [0], [1], [0, 0, 1, 1], [], []>} : vector<8x32xf32>, vector<32x32xf32>, vector<8x32xf32> -> vector<8x32xf32>
    %267 = vector.broadcast %172 : vector<1x32xf32> to vector<8x32xf32>
    %268 = arith.addf %266, %267 : vector<8x32xf32>
    %269 = arith.addf %139, %268 : vector<8x32xf32>
    %270 = vector.extract_strided_slice %4 {offsets = [2, 0], sizes = [1, 1], strides = [1, 1]} : vector<3x2xf32> to vector<1x1xf32>
    %271 = vector.extract_strided_slice %4 {offsets = [2, 1], sizes = [1, 1], strides = [1, 1]} : vector<3x2xf32> to vector<1x1xf32>
    %cst_98 = arith.constant dense<0.000000e+00> : vector<8xf32>
    %272 = vector.multi_reduction <add>, %269, %cst_98 [1] : vector<8x32xf32> to vector<8xf32>
    %273 = vector.shape_cast %272 : vector<8xf32> to vector<8x1xf32>
    %cst_99 = arith.constant 3.200000e+01 : f32
    %274 = vector.broadcast %cst_99 : f32 to vector<8x1xf32>
    %275 = arith.divf %273, %274 : vector<8x1xf32>
    %276 = vector.broadcast %275 : vector<8x1xf32> to vector<8x32xf32>
    %277 = arith.subf %269, %276 : vector<8x32xf32>
    %278 = arith.mulf %277, %277 : vector<8x32xf32>
    %cst_100 = arith.constant dense<0.000000e+00> : vector<8xf32>
    %279 = vector.multi_reduction <add>, %278, %cst_100 [1] : vector<8x32xf32> to vector<8xf32>
    %280 = vector.shape_cast %279 : vector<8xf32> to vector<8x1xf32>
    %cst_101 = arith.constant 0.0322580636 : f32
    %281 = vector.broadcast %cst_101 : f32 to vector<8x1xf32>
    %282 = arith.mulf %280, %281 : vector<8x1xf32>
    %283 = math.sqrt %282 : vector<8x1xf32>
    %cst_102 = arith.constant 9.99999997E-7 : f32
    %284 = vector.broadcast %cst_102 : f32 to vector<8x1xf32>
    %285 = arith.addf %283, %284 : vector<8x1xf32>
    %286 = tpu.reciprocal %285 {approx = true} : vector<8x1xf32> -> vector<8x1xf32>
    %287 = arith.mulf %285, %286 : vector<8x1xf32>
    %cst_103 = arith.constant 2.000000e+00 : f32
    %288 = vector.broadcast %cst_103 : f32 to vector<8x1xf32>
    %289 = arith.subf %288, %287 : vector<8x1xf32>
    %290 = arith.mulf %286, %289 : vector<8x1xf32>
    %291 = vector.broadcast %290 : vector<8x1xf32> to vector<8x32xf32>
    %292 = arith.mulf %277, %291 : vector<8x32xf32>
    %293 = vector.broadcast %270 : vector<1x1xf32> to vector<8x32xf32>
    %294 = arith.mulf %292, %293 : vector<8x32xf32>
    %295 = vector.broadcast %271 : vector<1x1xf32> to vector<8x32xf32>
    %296 = arith.addf %294, %295 : vector<8x32xf32>
    %c0_104 = arith.constant 0 : index
    %c0_105 = arith.constant 0 : index
    %297 = vector.load %arg17[%c0_104, %c0_105] : memref<32x64xf32, #tpu.memory_space<vmem>>, vector<32x64xf32>
    %cst_106 = arith.constant dense<0.000000e+00> : vector<8x64xf32>
    %298 = tpu.matmul %296, %297, %cst_106 {dimension_numbers = #tpu.dot_dimension_numbers<[1], [0], [0], [1], [0, 0, 1, 1], [], []>} : vector<8x32xf32>, vector<32x64xf32>, vector<8x64xf32> -> vector<8x64xf32>
    %c0_107 = arith.constant 0 : index
    %c0_108 = arith.constant 0 : index
    %299 = vector.load %arg18[%c0_107, %c0_108] : memref<1x64xf32, #tpu.memory_space<vmem>>, vector<1x64xf32>
    %300 = vector.broadcast %299 : vector<1x64xf32> to vector<8x64xf32>
    %301 = arith.addf %298, %300 : vector<8x64xf32>
    %cst_109 = arith.constant 0.000000e+00 : f32
    %302 = vector.broadcast %cst_109 : f32 to vector<8x64xf32>
    %303 = arith.maximumf %301, %302 : vector<8x64xf32>
    %c0_110 = arith.constant 0 : index
    %c0_111 = arith.constant 0 : index
    %304 = vector.load %arg19[%c0_110, %c0_111] : memref<64x32xf32, #tpu.memory_space<vmem>>, vector<64x32xf32>
    %cst_112 = arith.constant dense<0.000000e+00> : vector<8x32xf32>
    %305 = tpu.matmul %303, %304, %cst_112 {dimension_numbers = #tpu.dot_dimension_numbers<[1], [0], [0], [1], [0, 0, 1, 1], [], []>} : vector<8x64xf32>, vector<64x32xf32>, vector<8x32xf32> -> vector<8x32xf32>
    %306 = arith.addf %269, %305 : vector<8x32xf32>
    %c0_113 = arith.constant 0 : index
    %c0_114 = arith.constant 0 : index
    %307 = vector.load %arg20[%c0_113, %c0_114] : memref<1x32xf32, #tpu.memory_space<vmem>>, vector<1x32xf32>
    %308 = vector.broadcast %307 : vector<1x32xf32> to vector<8x32xf32>
    %309 = arith.addf %306, %308 : vector<8x32xf32>
    %c0_115 = arith.constant 0 : index
    %c0_116 = arith.constant 0 : index
    %c0_117 = arith.constant 0 : index
    %310 = vector.load %arg21[%c0_115, %c0_116, %c0_117] : memref<1x8x32xf32, #tpu.memory_space<vmem>>, vector<1x8x32xf32>
    %311 = vector.shape_cast %310 : vector<1x8x32xf32> to vector<8x32xf32>
    %312 = vector.shape_cast %309 : vector<8x32xf32> to vector<1x8x32xf32>
    tpu.vector_store %arg21[%c0_115, %c0_116, %c0_117], %312 {strides = array<i32>} : memref<1x8x32xf32, #tpu.memory_space<vmem>>, vector<1x8x32xf32>,
    return
  }
  func.func @transform_0(%arg0: i32) -> (i32, i32, i32) {
    %c0_i32 = arith.constant 0 : i32
    %c0_i32_0 = arith.constant 0 : i32
    %c0_i32_1 = arith.constant 0 : i32
    return %arg0, %c0_i32, %c0_i32_0 : i32, i32, i32
  }
  func.func @transform_1(%arg0: i32) -> (i32, i32, i32) {
    %c0_i32 = arith.constant 0 : i32
    %c0_i32_0 = arith.constant 0 : i32
    %c0_i32_1 = arith.constant 0 : i32
    return %arg0, %c0_i32, %c0_i32_0 : i32, i32, i32
  }
  func.func @transform_2(%arg0: i32) -> (i32, i32) {
    %c0_i32 = arith.constant 0 : i32
    %c0_i32_0 = arith.constant 0 : i32
    %c0_i32_1 = arith.constant 0 : i32
    return %c0_i32, %c0_i32_0 : i32, i32
  }
  func.func @transform_3(%arg0: i32) -> (i32, i32) {
    %c0_i32 = arith.constant 0 : i32
    %c0_i32_0 = arith.constant 0 : i32
    %c0_i32_1 = arith.constant 0 : i32
    return %c0_i32, %c0_i32_0 : i32, i32
  }
  func.func @transform_4(%arg0: i32) -> (i32, i32) {
    %c0_i32 = arith.constant 0 : i32
    %c0_i32_0 = arith.constant 0 : i32
    %c0_i32_1 = arith.constant 0 : i32
    return %c0_i32, %c0_i32_0 : i32, i32
  }
  func.func @transform_5(%arg0: i32) -> (i32, i32) {
    %c0_i32 = arith.constant 0 : i32
    %c0_i32_0 = arith.constant 0 : i32
    %c0_i32_1 = arith.constant 0 : i32
    return %c0_i32, %c0_i32_0 : i32, i32
  }
  func.func @transform_6(%arg0: i32) -> (i32, i32) {
    %c0_i32 = arith.constant 0 : i32
    %c0_i32_0 = arith.constant 0 : i32
    %c0_i32_1 = arith.constant 0 : i32
    return %c0_i32, %c0_i32_0 : i32, i32
  }
  func.func @transform_7(%arg0: i32) -> (i32, i32) {
    %c0_i32 = arith.constant 0 : i32
    %c0_i32_0 = arith.constant 0 : i32
    %c0_i32_1 = arith.constant 0 : i32
    return %c0_i32, %c0_i32_0 : i32, i32
  }
  func.func @transform_8(%arg0: i32) -> (i32, i32) {
    %c0_i32 = arith.constant 0 : i32
    %c0_i32_0 = arith.constant 0 : i32
    %c0_i32_1 = arith.constant 0 : i32
    return %c0_i32, %c0_i32_0 : i32, i32
  }
  func.func @transform_9(%arg0: i32) -> (i32, i32) {
    %c0_i32 = arith.constant 0 : i32
    %c0_i32_0 = arith.constant 0 : i32
    %c0_i32_1 = arith.constant 0 : i32
    return %c0_i32, %c0_i32_0 : i32, i32
  }
  func.func @transform_10(%arg0: i32) -> (i32, i32) {
    %c0_i32 = arith.constant 0 : i32
    %c0_i32_0 = arith.constant 0 : i32
    %c0_i32_1 = arith.constant 0 : i32
    return %c0_i32, %c0_i32_0 : i32, i32
  }
  func.func @transform_11(%arg0: i32) -> (i32, i32) {
    %c0_i32 = arith.constant 0 : i32
    %c0_i32_0 = arith.constant 0 : i32
    %c0_i32_1 = arith.constant 0 : i32
    return %c0_i32, %c0_i32_0 : i32, i32
  }
  func.func @transform_12(%arg0: i32) -> (i32, i32) {
    %c0_i32 = arith.constant 0 : i32
    %c0_i32_0 = arith.constant 0 : i32
    %c0_i32_1 = arith.constant 0 : i32
    return %c0_i32, %c0_i32_0 : i32, i32
  }
  func.func @transform_13(%arg0: i32) -> (i32, i32) {
    %c0_i32 = arith.constant 0 : i32
    %c0_i32_0 = arith.constant 0 : i32
    %c0_i32_1 = arith.constant 0 : i32
    return %c0_i32, %c0_i32_0 : i32, i32
  }
  func.func @transform_14(%arg0: i32) -> (i32, i32) {
    %c0_i32 = arith.constant 0 : i32
    %c0_i32_0 = arith.constant 0 : i32
    %c0_i32_1 = arith.constant 0 : i32
    return %c0_i32, %c0_i32_0 : i32, i32
  }
  func.func @transform_15(%arg0: i32) -> (i32, i32) {
    %c0_i32 = arith.constant 0 : i32
    %c0_i32_0 = arith.constant 0 : i32
    %c0_i32_1 = arith.constant 0 : i32
    return %c0_i32, %c0_i32_0 : i32, i32
  }
  func.func @transform_16(%arg0: i32) -> (i32, i32) {
    %c0_i32 = arith.constant 0 : i32
    %c0_i32_0 = arith.constant 0 : i32
    %c0_i32_1 = arith.constant 0 : i32
    return %c0_i32, %c0_i32_0 : i32, i32
  }
  func.func @transform_17(%arg0: i32) -> (i32, i32) {
    %c0_i32 = arith.constant 0 : i32
    %c0_i32_0 = arith.constant 0 : i32
    %c0_i32_1 = arith.constant 0 : i32
    return %c0_i32, %c0_i32_0 : i32, i32
  }
  func.func @transform_18(%arg0: i32) -> (i32, i32) {
    %c0_i32 = arith.constant 0 : i32
    %c0_i32_0 = arith.constant 0 : i32
    %c0_i32_1 = arith.constant 0 : i32
    return %c0_i32, %c0_i32_0 : i32, i32
  }
  func.func @transform_19(%arg0: i32) -> (i32, i32) {
    %c0_i32 = arith.constant 0 : i32
    %c0_i32_0 = arith.constant 0 : i32
    %c0_i32_1 = arith.constant 0 : i32
    return %c0_i32, %c0_i32_0 : i32, i32
  }
  func.func @transform_20(%arg0: i32) -> (i32, i32, i32) {
    %c0_i32 = arith.constant 0 : i32
    %c0_i32_0 = arith.constant 0 : i32
    %c0_i32_1 = arith.constant 0 : i32
    return %arg0, %c0_i32, %c0_i32_0 : i32, i32, i32
  }
}

</mosaic_0001>

<llo_original>
// kernel: tpu_custom_call.1
$region0: #{tpu_custom_call.1}
  #allocation0 [shape = 'u32[]', space=smem, size = 0x4, offset = 0x4, fixed_abs, tag = 'smem constant byte address 0x4 - core index']
  #allocation1 [shape = 'u32[144,128]{1,0:T(1,128)}', space=vmem, size = 0x12000, scoped, tag = 'internal scratch']
  %s0 = inlined_call_operand.hbm [shape: f32[2,8,32], index: 0, kind: input, shape index: {}]
  %s1 = inlined_call_operand.hbm [shape: f32[2,8,32], index: 1, kind: input, shape index: {}]
  %s2 = inlined_call_operand.hbm [shape: f32[8,8], index: 2, kind: input, shape index: {}]
  %s3 = inlined_call_operand.vmem [shape: f32[3,2], index: 3, kind: input, shape index: {}]
  %s4 = inlined_call_operand.vmem [shape: f32[32,32], index: 4, kind: input, shape index: {}]
  %s5 = inlined_call_operand.vmem [shape: f32[1,32], index: 5, kind: input, shape index: {}]
  %s6 = inlined_call_operand.vmem [shape: f32[32,64], index: 6, kind: input, shape index: {}]
  %s7 = inlined_call_operand.vmem [shape: f32[1,64], index: 7, kind: input, shape index: {}]
  %s8 = inlined_call_operand.vmem [shape: f32[32,32], index: 8, kind: input, shape index: {}]
  %s9 = inlined_call_operand.hbm [shape: f32[1,32], index: 9, kind: input, shape index: {}]
  %s10 = inlined_call_operand.hbm [shape: f32[32,32], index: 10, kind: input, shape index: {}]
  %s11 = inlined_call_operand.hbm [shape: f32[1,32], index: 11, kind: input, shape index: {}]
  %s12 = inlined_call_operand.hbm [shape: f32[32,64], index: 12, kind: input, shape index: {}]
  %s13 = inlined_call_operand.hbm [shape: f32[1,64], index: 13, kind: input, shape index: {}]
  %s14 = inlined_call_operand.hbm [shape: f32[32,32], index: 14, kind: input, shape index: {}]
  %s15 = inlined_call_operand.hbm [shape: f32[1,32], index: 15, kind: input, shape index: {}]
  %s16 = inlined_call_operand.vmem [shape: f32[32,64], index: 16, kind: input, shape index: {}]
  %s17 = inlined_call_operand.vmem [shape: f32[1,64], index: 17, kind: input, shape index: {}]
  %s18 = inlined_call_operand.vmem [shape: f32[64,32], index: 18, kind: input, shape index: {}]
  %s19 = inlined_call_operand.vmem [shape: f32[1,32], index: 19, kind: input, shape index: {}]
  %s20 = inlined_call_operand.hbm [shape: f32[2,8,32], index: 20, kind: output, shape index: {}]
  %s21 = sld [smem:[#allocation0]]
  $region153: #{tpu_custom_call.1} parent=0
    _
  %s23 = ssub.s32 1, %s21
  %s24 = scalar_select 0, %s23, %s21
  $region1: #{tpu_custom_call.1} parent=0
    #allocation2 [shape = 'u8[8192]{0}', space=vmem, size = 0x2000, scoped, tag = 'input window, operand 0']
    #allocation3 [shape = 's32[2]{0}', space=sflag, size = 0x8, scoped, tag = 'scoped memory for tpu_custom_call.1']
    #allocation4 [shape = 's32[2]{0}', space=sflag, size = 0x8, scoped, tag = 'scoped memory for tpu_custom_call.1']
    #allocation5 [shape = 'u8[8192]{0}', space=vmem, size = 0x2000, scoped, tag = 'input window, operand 1']
    #allocation6 [shape = 's32[2]{0}', space=sflag, size = 0x8, scoped, tag = 'scoped memory for tpu_custom_call.1']
    #allocation7 [shape = 'u8[4096]{0}', space=vmem, size = 0x1000, scoped, tag = 'input window, operand 2, single buffered']
    #allocation8 [shape = 'u8[512]{0}', space=vmem, size = 0x400, scoped, tag = 'input window, operand 9, single buffered']
    #allocation9 [shape = 's32[1]{0}', space=sflag, size = 0x4, scoped, tag = 'scoped memory for tpu_custom_call.1']
    #allocation10 [shape = 'u8[16384]{0}', space=vmem, size = 0x4000, scoped, tag = 'input window, operand 10, single buffered']
    #allocation11 [shape = 'u8[512]{0}', space=vmem, size = 0x400, scoped, tag = 'input window, operand 11, single buffered']
    #allocation12 [shape = 's32[1]{0}', space=sflag, size = 0x4, scoped, tag = 'scoped memory for tpu_custom_call.1']
    #allocation13 [shape = 'u8[16384]{0}', space=vmem, size = 0x4000, scoped, tag = 'input window, operand 12, single buffered']
    #allocation14 [shape = 'u8[512]{0}', space=vmem, size = 0x400, scoped, tag = 'input window, operand 13, single buffered']
    #allocation15 [shape = 's32[1]{0}', space=sflag, size = 0x4, scoped, tag = 'scoped memory for tpu_custom_call.1']
    #allocation16 [shape = 'u8[16384]{0}', space=vmem, size = 0x4000, scoped, tag = 'input window, operand 14, single buffered']
    #allocation17 [shape = 'u8[512]{0}', space=vmem, size = 0x400, scoped, tag = 'input window, operand 15, single buffered']
    #allocation18 [shape = 's32[1]{0}', space=sflag, size = 0x4, scoped, tag = 'scoped memory for tpu_custom_call.1']
    #allocation19 [shape = 'u8[8192]{0}', space=vmem, size = 0x2000, scoped, tag = 'output window, operand 0']
    %25 = vsyncpa [#allocation3], 0
    %s26 = scalar_lea.sflag [#allocation3], 1
    %27 = vsyncpa %s26, 0
    %28 = vsyncpa [#allocation6], 0
    %s29 = scalar_lea.sflag [#allocation6], 1
    %30 = vsyncpa %s29, 0
    %31 = vsyncpa [#allocation9], 0
    %32 = vsyncpa [#allocation12], 0
    %33 = vsyncpa [#allocation15], 0
    %34 = vsyncpa [#allocation18], 0
    %35 = vsyncpa [#allocation4], 0
    %s36 = scalar_lea.sflag [#allocation4], 1
    %37 = vsyncpa %s36, 0
    loop: start=0, step=1, limit=4
    $region2: #{tpu_custom_call.1} parent=1 // loop_pre_header
      _
    $region3: #{tpu_custom_call.1} parent=1 // loop_header
      %s39 = sphi 0, %s43
      %p40 = scmp.ge.s32.totalorder %s39, 4
      %s49 = sphi 0, %s51
      %s52 = sphi 0, %s49
      %s53 = sphi 0, %s52
      %s69 = sphi 0, %s53
      %s75 = sphi 0, %s77
      %s78 = sphi 0, %s75
      %s79 = sphi 0, %s78
      %s95 = sphi 0, %s79
      %s99 = sphi 0, %s99
      %s101 = sphi 0, %s99
      %s102 = sphi 0, %s101
      %s116 = sphi 0, %s102
      %s120 = sphi 0, %s120
      %s122 = sphi 0, %s120
      %s123 = sphi 0, %s122
      %s137 = sphi 0, %s123
      %s141 = sphi 0, %s141
      %s143 = sphi 0, %s141
      %s144 = sphi 0, %s143
      %s158 = sphi 0, %s144
      %s162 = sphi 0, %s162
      %s164 = sphi 0, %s162
      %s165 = sphi 0, %s164
      %s179 = sphi 0, %s165
      %s183 = sphi 0, %s183
      %s185 = sphi 0, %s183
      %s186 = sphi 0, %s185
      %s200 = sphi 0, %s186
      %s204 = sphi 0, %s204
      %s206 = sphi 0, %s204
      %s207 = sphi 0, %s206
      %s221 = sphi 0, %s207
      %s225 = sphi 0, %s225
      %s227 = sphi 0, %s225
      %s228 = sphi 0, %s227
      %s242 = sphi 0, %s228
      %s246 = sphi 0, %s246
      %s248 = sphi 0, %s246
      %s249 = sphi 0, %s248
      %s263 = sphi 0, %s249
      %s267 = sphi 0, %s267
      %s269 = sphi 0, %s267
      %s270 = sphi 0, %s269
      %s284 = sphi 0, %s270
      %s288 = sphi 0, %s288
      %s290 = sphi 0, %s288
      %s291 = sphi 0, %s290
      %s305 = sphi 0, %s291
      %s309 = sphi 0, %s309
      %s311 = sphi 0, %s309
      %s312 = sphi 0, %s311
      %s326 = sphi 0, %s312
      %s330 = sphi 0, %s330
      %s332 = sphi 0, %s330
      %s333 = sphi 0, %s332
      %s347 = sphi 0, %s333
      %s351 = sphi 0, %s351
      %s353 = sphi 0, %s351
      %s354 = sphi 0, %s353
      %s368 = sphi 0, %s354
      %s372 = sphi 0, %s372
      %s374 = sphi 0, %s372
      %s375 = sphi 0, %s374
      %s389 = sphi 0, %s375
      %s393 = sphi 0, %s393
      %s395 = sphi 0, %s393
      %s396 = sphi 0, %s395
      %s410 = sphi 0, %s396
      %s414 = sphi 0, %s414
      %s416 = sphi 0, %s414
      %s417 = sphi 0, %s416
      %s431 = sphi 0, %s417
      %s435 = sphi 0, %s435
      %s437 = sphi 0, %s435
      %s438 = sphi 0, %s437
      %s452 = sphi 0, %s438
      %s456 = sphi 0, %s456
      %s458 = sphi 0, %s456
      %s459 = sphi 0, %s458
      %s473 = sphi 0, %s459
      %s479 = sphi 0, %s481
      %s482 = sphi 0, %s479
      %s483 = sphi 0, %s482
      %s499 = sphi 0, %s483
    $region4: #{tpu_custom_call.1} parent=1 // loop_header_branch
      %42 = sbr.rel (%p40) target = $region8
    $region5: #{tpu_custom_call.1} parent=1 // loop_body
      %s44 = ssub.s32 %s39, 1
      %s45 = ssub.s32 %s39, 2
      %s46 = sadd.s32 %s39, 1
      %s47 = ssub.s32 %s39, %s46
      %p48 = scmp.eq.s32.totalorder %s47, 0
      %s50 = sadd.s32 %s49, 1
      %s51 = scalar_select %p48, %s49, %s50
      %p54 = pneg %p48
      %p55 = scmp.eq.s32.totalorder %s39, 1
      %p56 = por %p54, %p55
      %p57 = scmp.ne.s32.totalorder %s49, %s52
      %p58 = scmp.eq.s32.totalorder %s39, 0
      %p59 = por %p57, %p58
      %p60 = scmp.ne.s32.totalorder %s49, %s52
      %p61 = scmp.eq.s32.totalorder %s44, 1
      %p62 = por %p60, %p61
      %p63 = scmp.ne.s32.totalorder %s52, %s53
      %p64 = scmp.eq.s32.totalorder %s44, 0
      %p65 = por %p63, %p64
      %p66 = scmp.ne.s32.totalorder %s52, %s53
      %p67 = scmp.eq.s32.totalorder %s45, 1
      %p68 = por %p66, %p67
      %p70 = scmp.ne.s32.totalorder %s53, %s69
      %p71 = scmp.eq.s32.totalorder %s45, 0
      %p72 = por %p70, %p71
      %s73 = ssub.s32 %s39, %s46
      %p74 = scmp.eq.s32.totalorder %s73, 0
      %s76 = sadd.s32 %s75, 1
      %s77 = scalar_select %p74, %s75, %s76
      %p80 = pneg %p74
      %p81 = scmp.eq.s32.totalorder %s39, 1
      %p82 = por %p80, %p81
      %p83 = scmp.ne.s32.totalorder %s75, %s78
      %p84 = scmp.eq.s32.totalorder %s39, 0
      %p85 = por %p83, %p84
      %p86 = scmp.ne.s32.totalorder %s75, %s78
      %p87 = scmp.eq.s32.totalorder %s44, 1
      %p88 = por %p86, %p87
      %p89 = scmp.ne.s32.totalorder %s78, %s79
      %p90 = scmp.eq.s32.totalorder %s44, 0
      %p91 = por %p89, %p90
      %p92 = scmp.ne.s32.totalorder %s78, %s79
      %p93 = scmp.eq.s32.totalorder %s45, 1
      %p94 = por %p92, %p93
      %p96 = scmp.ne.s32.totalorder %s79, %s95
      %p97 = scmp.eq.s32.totalorder %s45, 0
      %p98 = por %p96, %p97
      %s100 = sadd.s32 %s99, 1
      %p103 = scmp.eq.s32.totalorder %s39, 1
      %p104 = scmp.ne.s32.totalorder %s99, %s101
      %p105 = scmp.eq.s32.totalorder %s39, 0
      %p106 = por %p104, %p105
      %p107 = scmp.ne.s32.totalorder %s99, %s101
      %p108 = scmp.eq.s32.totalorder %s44, 1
      %p109 = por %p107, %p108
      %p110 = scmp.ne.s32.totalorder %s101, %s102
      %p111 = scmp.eq.s32.totalorder %s44, 0
      %p112 = por %p110, %p111
      %p113 = scmp.ne.s32.totalorder %s101, %s102
      %p114 = scmp.eq.s32.totalorder %s45, 1
      %p115 = por %p113, %p114
      %p117 = scmp.ne.s32.totalorder %s102, %s116
      %p118 = scmp.eq.s32.totalorder %s45, 0
      %p119 = por %p117, %p118
      %s121 = sadd.s32 %s120, 1
      %p124 = scmp.eq.s32.totalorder %s39, 1
      %p125 = scmp.ne.s32.totalorder %s120, %s122
      %p126 = scmp.eq.s32.totalorder %s39, 0
      %p127 = por %p125, %p126
      %p128 = scmp.ne.s32.totalorder %s120, %s122
      %p129 = scmp.eq.s32.totalorder %s44, 1
      %p130 = por %p128, %p129
      %p131 = scmp.ne.s32.totalorder %s122, %s123
      %p132 = scmp.eq.s32.totalorder %s44, 0
      %p133 = por %p131, %p132
      %p134 = scmp.ne.s32.totalorder %s122, %s123
      %p135 = scmp.eq.s32.totalorder %s45, 1
      %p136 = por %p134, %p135
      %p138 = scmp.ne.s32.totalorder %s123, %s137
      %p139 = scmp.eq.s32.totalorder %s45, 0
      %p140 = por %p138, %p139
      %s142 = sadd.s32 %s141, 1
      %p145 = scmp.eq.s32.totalorder %s39, 1
      %p146 = scmp.ne.s32.totalorder %s141, %s143
      %p147 = scmp.eq.s32.totalorder %s39, 0
      %p148 = por %p146, %p147
      %p149 = scmp.ne.s32.totalorder %s141, %s143
      %p150 = scmp.eq.s32.totalorder %s44, 1
      %p151 = por %p149, %p150
      %p152 = scmp.ne.s32.totalorder %s143, %s144
      %p153 = scmp.eq.s32.totalorder %s44, 0
      %p154 = por %p152, %p153
      %p155 = scmp.ne.s32.totalorder %s143, %s144
      %p156 = scmp.eq.s32.totalorder %s45, 1
      %p157 = por %p155, %p156
      %p159 = scmp.ne.s32.totalorder %s144, %s158
      %p160 = scmp.eq.s32.totalorder %s45, 0
      %p161 = por %p159, %p160
      %s163 = sadd.s32 %s162, 1
      %p166 = scmp.eq.s32.totalorder %s39, 1
      %p167 = scmp.ne.s32.totalorder %s162, %s164
      %p168 = scmp.eq.s32.totalorder %s39, 0
      %p169 = por %p167, %p168
      %p170 = scmp.ne.s32.totalorder %s162, %s164
      %p171 = scmp.eq.s32.totalorder %s44, 1
      %p172 = por %p170, %p171
      %p173 = scmp.ne.s32.totalorder %s164, %s165
      %p174 = scmp.eq.s32.totalorder %s44, 0
      %p175 = por %p173, %p174
      %p176 = scmp.ne.s32.totalorder %s164, %s165
      %p177 = scmp.eq.s32.totalorder %s45, 1
      %p178 = por %p176, %p177
      %p180 = scmp.ne.s32.totalorder %s165, %s179
      %p181 = scmp.eq.s32.totalorder %s45, 0
      %p182 = por %p180, %p181
      %s184 = sadd.s32 %s183, 1
      %p187 = scmp.eq.s32.totalorder %s39, 1
      %p188 = scmp.ne.s32.totalorder %s183, %s185
      %p189 = scmp.eq.s32.totalorder %s39, 0
      %p190 = por %p188, %p189
      %p191 = scmp.ne.s32.totalorder %s183, %s185
      %p192 = scmp.eq.s32.totalorder %s44, 1
      %p193 = por %p191, %p192
      %p194 = scmp.ne.s32.totalorder %s185, %s186
      %p195 = scmp.eq.s32.totalorder %s44, 0
      %p196 = por %p194, %p195
      %p197 = scmp.ne.s32.totalorder %s185, %s186
      %p198 = scmp.eq.s32.totalorder %s45, 1
      %p199 = por %p197, %p198
      %p201 = scmp.ne.s32.totalorder %s186, %s200
      %p202 = scmp.eq.s32.totalorder %s45, 0
      %p203 = por %p201, %p202
      %s205 = sadd.s32 %s204, 1
      %p208 = scmp.eq.s32.totalorder %s39, 1
      %p209 = scmp.ne.s32.totalorder %s204, %s206
      %p210 = scmp.eq.s32.totalorder %s39, 0
      %p211 = por %p209, %p210
      %p212 = scmp.ne.s32.totalorder %s204, %s206
      %p213 = scmp.eq.s32.totalorder %s44, 1
      %p214 = por %p212, %p213
      %p215 = scmp.ne.s32.totalorder %s206, %s207
      %p216 = scmp.eq.s32.totalorder %s44, 0
      %p217 = por %p215, %p216
      %p218 = scmp.ne.s32.totalorder %s206, %s207
      %p219 = scmp.eq.s32.totalorder %s45, 1
      %p220 = por %p218, %p219
      %p222 = scmp.ne.s32.totalorder %s207, %s221
      %p223 = scmp.eq.s32.totalorder %s45, 0
      %p224 = por %p222, %p223
      %s226 = sadd.s32 %s225, 1
      %p229 = scmp.eq.s32.totalorder %s39, 1
      %p230 = scmp.ne.s32.totalorder %s225, %s227
      %p231 = scmp.eq.s32.totalorder %s39, 0
      %p232 = por %p230, %p231
      %p233 = scmp.ne.s32.totalorder %s225, %s227
      %p234 = scmp.eq.s32.totalorder %s44, 1
      %p235 = por %p233, %p234
      %p236 = scmp.ne.s32.totalorder %s227, %s228
      %p237 = scmp.eq.s32.totalorder %s44, 0
      %p238 = por %p236, %p237
      %p239 = scmp.ne.s32.totalorder %s227, %s228
      %p240 = scmp.eq.s32.totalorder %s45, 1
      %p241 = por %p239, %p240
      %p243 = scmp.ne.s32.totalorder %s228, %s242
      %p244 = scmp.eq.s32.totalorder %s45, 0
      %p245 = por %p243, %p244
      %s247 = sadd.s32 %s246, 1
      %p250 = scmp.eq.s32.totalorder %s39, 1
      %p251 = scmp.ne.s32.totalorder %s246, %s248
      %p252 = scmp.eq.s32.totalorder %s39, 0
      %p253 = por %p251, %p252
      %p254 = scmp.ne.s32.totalorder %s246, %s248
      %p255 = scmp.eq.s32.totalorder %s44, 1
      %p256 = por %p254, %p255
      %p257 = scmp.ne.s32.totalorder %s248, %s249
      %p258 = scmp.eq.s32.totalorder %s44, 0
      %p259 = por %p257, %p258
      %p260 = scmp.ne.s32.totalorder %s248, %s249
      %p261 = scmp.eq.s32.totalorder %s45, 1
      %p262 = por %p260, %p261
      %p264 = scmp.ne.s32.totalorder %s249, %s263
      %p265 = scmp.eq.s32.totalorder %s45, 0
      %p266 = por %p264, %p265
      %s268 = sadd.s32 %s267, 1
      %p271 = scmp.eq.s32.totalorder %s39, 1
      %p272 = scmp.ne.s32.totalorder %s267, %s269
      %p273 = scmp.eq.s32.totalorder %s39, 0
      %p274 = por %p272, %p273
      %p275 = scmp.ne.s32.totalorder %s267, %s269
      %p276 = scmp.eq.s32.totalorder %s44, 1
      %p277 = por %p275, %p276
      %p278 = scmp.ne.s32.totalorder %s269, %s270
      %p279 = scmp.eq.s32.totalorder %s44, 0
      %p280 = por %p278, %p279
      %p281 = scmp.ne.s32.totalorder %s269, %s270
      %p282 = scmp.eq.s32.totalorder %s45, 1
      %p283 = por %p281, %p282
      %p285 = scmp.ne.s32.totalorder %s270, %s284
      %p286 = scmp.eq.s32.totalorder %s45, 0
      %p287 = por %p285, %p286
      %s289 = sadd.s32 %s288, 1
      %p292 = scmp.eq.s32.totalorder %s39, 1
      %p293 = scmp.ne.s32.totalorder %s288, %s290
      %p294 = scmp.eq.s32.totalorder %s39, 0
      %p295 = por %p293, %p294
      %p296 = scmp.ne.s32.totalorder %s288, %s290
      %p297 = scmp.eq.s32.totalorder %s44, 1
      %p298 = por %p296, %p297
      %p299 = scmp.ne.s32.totalorder %s290, %s291
      %p300 = scmp.eq.s32.totalorder %s44, 0
      %p301 = por %p299, %p300
      %p302 = scmp.ne.s32.totalorder %s290, %s291
      %p303 = scmp.eq.s32.totalorder %s45, 1
      %p304 = por %p302, %p303
      %p306 = scmp.ne.s32.totalorder %s291, %s305
      %p307 = scmp.eq.s32.totalorder %s45, 0
      %p308 = por %p306, %p307
      %s310 = sadd.s32 %s309, 1
      %p313 = scmp.eq.s32.totalorder %s39, 1
      %p314 = scmp.ne.s32.totalorder %s309, %s311
      %p315 = scmp.eq.s32.totalorder %s39, 0
      %p316 = por %p314, %p315
      %p317 = scmp.ne.s32.totalorder %s309, %s311
      %p318 = scmp.eq.s32.totalorder %s44, 1
      %p319 = por %p317, %p318
      %p320 = scmp.ne.s32.totalorder %s311, %s312
      %p321 = scmp.eq.s32.totalorder %s44, 0
      %p322 = por %p320, %p321
      %p323 = scmp.ne.s32.totalorder %s311, %s312
      %p324 = scmp.eq.s32.totalorder %s45, 1
      %p325 = por %p323, %p324
      %p327 = scmp.ne.s32.totalorder %s312, %s326
      %p328 = scmp.eq.s32.totalorder %s45, 0
      %p329 = por %p327, %p328
      %s331 = sadd.s32 %s330, 1
      %p334 = scmp.eq.s32.totalorder %s39, 1
      %p335 = scmp.ne.s32.totalorder %s330, %s332
      %p336 = scmp.eq.s32.totalorder %s39, 0
      %p337 = por %p335, %p336
      %p338 = scmp.ne.s32.totalorder %s330, %s332
      %p339 = scmp.eq.s32.totalorder %s44, 1
      %p340 = por %p338, %p339
      %p341 = scmp.ne.s32.totalorder %s332, %s333
      %p342 = scmp.eq.s32.totalorder %s44, 0
      %p343 = por %p341, %p342
      %p344 = scmp.ne.s32.totalorder %s332, %s333
      %p345 = scmp.eq.s32.totalorder %s45, 1
      %p346 = por %p344, %p345
      %p348 = scmp.ne.s32.totalorder %s333, %s347
      %p349 = scmp.eq.s32.totalorder %s45, 0
      %p350 = por %p348, %p349
      %s352 = sadd.s32 %s351, 1
      %p355 = scmp.eq.s32.totalorder %s39, 1
      %p356 = scmp.ne.s32.totalorder %s351, %s353
      %p357 = scmp.eq.s32.totalorder %s39, 0
      %p358 = por %p356, %p357
      %p359 = scmp.ne.s32.totalorder %s351, %s353
      %p360 = scmp.eq.s32.totalorder %s44, 1
      %p361 = por %p359, %p360
      %p362 = scmp.ne.s32.totalorder %s353, %s354
      %p363 = scmp.eq.s32.totalorder %s44, 0
      %p364 = por %p362, %p363
      %p365 = scmp.ne.s32.totalorder %s353, %s354
      %p366 = scmp.eq.s32.totalorder %s45, 1
      %p367 = por %p365, %p366
      %p369 = scmp.ne.s32.totalorder %s354, %s368
      %p370 = scmp.eq.s32.totalorder %s45, 0
      %p371 = por %p369, %p370
      %s373 = sadd.s32 %s372, 1
      %p376 = scmp.eq.s32.totalorder %s39, 1
      %p377 = scmp.ne.s32.totalorder %s372, %s374
      %p378 = scmp.eq.s32.totalorder %s39, 0
      %p379 = por %p377, %p378
      %p380 = scmp.ne.s32.totalorder %s372, %s374
      %p381 = scmp.eq.s32.totalorder %s44, 1
      %p382 = por %p380, %p381
      %p383 = scmp.ne.s32.totalorder %s374, %s375
      %p384 = scmp.eq.s32.totalorder %s44, 0
      %p385 = por %p383, %p384
      %p386 = scmp.ne.s32.totalorder %s374, %s375
      %p387 = scmp.eq.s32.totalorder %s45, 1
      %p388 = por %p386, %p387
      %p390 = scmp.ne.s32.totalorder %s375, %s389
      %p391 = scmp.eq.s32.totalorder %s45, 0
      %p392 = por %p390, %p391
      %s394 = sadd.s32 %s393, 1
      %p397 = scmp.eq.s32.totalorder %s39, 1
      %p398 = scmp.ne.s32.totalorder %s393, %s395
      %p399 = scmp.eq.s32.totalorder %s39, 0
      %p400 = por %p398, %p399
      %p401 = scmp.ne.s32.totalorder %s393, %s395
      %p402 = scmp.eq.s32.totalorder %s44, 1
      %p403 = por %p401, %p402
      %p404 = scmp.ne.s32.totalorder %s395, %s396
      %p405 = scmp.eq.s32.totalorder %s44, 0
      %p406 = por %p404, %p405
      %p407 = scmp.ne.s32.totalorder %s395, %s396
      %p408 = scmp.eq.s32.totalorder %s45, 1
      %p409 = por %p407, %p408
      %p411 = scmp.ne.s32.totalorder %s396, %s410
      %p412 = scmp.eq.s32.totalorder %s45, 0
      %p413 = por %p411, %p412
      %s415 = sadd.s32 %s414, 1
      %p418 = scmp.eq.s32.totalorder %s39, 1
      %p419 = scmp.ne.s32.totalorder %s414, %s416
      %p420 = scmp.eq.s32.totalorder %s39, 0
      %p421 = por %p419, %p420
      %p422 = scmp.ne.s32.totalorder %s414, %s416
      %p423 = scmp.eq.s32.totalorder %s44, 1
      %p424 = por %p422, %p423
      %p425 = scmp.ne.s32.totalorder %s416, %s417
      %p426 = scmp.eq.s32.totalorder %s44, 0
      %p427 = por %p425, %p426
      %p428 = scmp.ne.s32.totalorder %s416, %s417
      %p429 = scmp.eq.s32.totalorder %s45, 1
      %p430 = por %p428, %p429
      %p432 = scmp.ne.s32.totalorder %s417, %s431
      %p433 = scmp.eq.s32.totalorder %s45, 0
      %p434 = por %p432, %p433
      %s436 = sadd.s32 %s435, 1
      %p439 = scmp.eq.s32.totalorder %s39, 1
      %p440 = scmp.ne.s32.totalorder %s435, %s437
      %p441 = scmp.eq.s32.totalorder %s39, 0
      %p442 = por %p440, %p441
      %p443 = scmp.ne.s32.totalorder %s435, %s437
      %p444 = scmp.eq.s32.totalorder %s44, 1
      %p445 = por %p443, %p444
      %p446 = scmp.ne.s32.totalorder %s437, %s438
      %p447 = scmp.eq.s32.totalorder %s44, 0
      %p448 = por %p446, %p447
      %p449 = scmp.ne.s32.totalorder %s437, %s438
      %p450 = scmp.eq.s32.totalorder %s45, 1
      %p451 = por %p449, %p450
      %p453 = scmp.ne.s32.totalorder %s438, %s452
      %p454 = scmp.eq.s32.totalorder %s45, 0
      %p455 = por %p453, %p454
      %s457 = sadd.s32 %s456, 1
      %p460 = scmp.eq.s32.totalorder %s39, 1
      %p461 = scmp.ne.s32.totalorder %s456, %s458
      %p462 = scmp.eq.s32.totalorder %s39, 0
      %p463 = por %p461, %p462
      %p464 = scmp.ne.s32.totalorder %s456, %s458
      %p465 = scmp.eq.s32.totalorder %s44, 1
      %p466 = por %p464, %p465
      %p467 = scmp.ne.s32.totalorder %s458, %s459
      %p468 = scmp.eq.s32.totalorder %s44, 0
      %p469 = por %p467, %p468
      %p470 = scmp.ne.s32.totalorder %s458, %s459
      %p471 = scmp.eq.s32.totalorder %s45, 1
      %p472 = por %p470, %p471
      %p474 = scmp.ne.s32.totalorder %s459, %s473
      %p475 = scmp.eq.s32.totalorder %s45, 0
      %p476 = por %p474, %p475
      %s477 = ssub.s32 %s39, %s46
      %p478 = scmp.eq.s32.totalorder %s477, 0
      %s480 = sadd.s32 %s479, 1
      %s481 = scalar_select %p478, %s479, %s480
      %p484 = pneg %p478
      %p485 = scmp.eq.s32.totalorder %s39, 1
      %p486 = por %p484, %p485
      %p487 = scmp.ne.s32.totalorder %s479, %s482
      %p488 = scmp.eq.s32.totalorder %s39, 0
      %p489 = por %p487, %p488
      %p490 = scmp.ne.s32.totalorder %s479, %s482
      %p491 = scmp.eq.s32.totalorder %s44, 1
      %p492 = por %p490, %p491
      %p493 = scmp.ne.s32.totalorder %s482, %s483
      %p494 = scmp.eq.s32.totalorder %s44, 0
      %p495 = por %p493, %p494
      %p496 = scmp.ne.s32.totalorder %s482, %s483
      %p497 = scmp.eq.s32.totalorder %s45, 1
      %p498 = por %p496, %p497
      %p500 = scmp.ne.s32.totalorder %s483, %s499
      %p501 = scmp.eq.s32.totalorder %s45, 0
      %p502 = por %p500, %p501
      %p503 = scmp.le.s32.totalorder 1, %s39
      %p504 = scmp.lt.s32.totalorder %s39, 3
      %p505 = pnand %p503, %p504
      %p506 = pneg %p505
      // Predicated region
      $region9: #{tpu_custom_call.1} parent=5 // pred_check
        _
      $region10: #{tpu_custom_call.1} parent=5 // pred_check_branch
        %508 = sbr.rel (%p505) target = $region12
      $region11: #{tpu_custom_call.1} parent=5 // pred_region
        %s509 = ssub.s32 %s39, 1
        // Predicated region
        $region13: #{tpu_custom_call.1} parent=11 // pred_check
          %p510 = pneg %p112
        $region14: #{tpu_custom_call.1} parent=11 // pred_check_branch
          %512 = sbr.rel (%p510) target = $region16
        $region15: #{tpu_custom_call.1} parent=11 // pred_region
          %s514 = ssub.s32 128, 128
          %515 = vsyncadd [#allocation6], %s514
          %s517 = sshll.u32 [#allocation7], 4
          %s518 = int_to_ptr.vmem [resolvable:$true] %s517
          %520 = dma.hbm_to_vmem [thread:$0]  %s2, 128, %s518, [#allocation6]
        $region16: #{tpu_custom_call.1} parent=11 // pred_fallthru
          _
        // Predicated region
        $region17: #{tpu_custom_call.1} parent=11 // pred_check
          %p521 = pneg %p133
        $region18: #{tpu_custom_call.1} parent=11 // pred_check_branch
          %523 = sbr.rel (%p521) target = $region20
        $region19: #{tpu_custom_call.1} parent=11 // pred_region
          _
        $region20: #{tpu_custom_call.1} parent=11 // pred_fallthru
          _
        // Predicated region
        $region21: #{tpu_custom_call.1} parent=11 // pred_check
          %p524 = pneg %p154
        $region22: #{tpu_custom_call.1} parent=11 // pred_check_branch
          %526 = sbr.rel (%p524) target = $region24
        $region23: #{tpu_custom_call.1} parent=11 // pred_region
          _
        $region24: #{tpu_custom_call.1} parent=11 // pred_fallthru
          _
        // Predicated region
        $region25: #{tpu_custom_call.1} parent=11 // pred_check
          %p527 = pneg %p175
        $region26: #{tpu_custom_call.1} parent=11 // pred_check_branch
          %529 = sbr.rel (%p527) target = $region28
        $region27: #{tpu_custom_call.1} parent=11 // pred_region
          _
        $region28: #{tpu_custom_call.1} parent=11 // pred_fallthru
          _
        // Predicated region
        $region29: #{tpu_custom_call.1} parent=11 // pred_check
          %p530 = pneg %p196
        $region30: #{tpu_custom_call.1} parent=11 // pred_check_branch
          %532 = sbr.rel (%p530) target = $region32
        $region31: #{tpu_custom_call.1} parent=11 // pred_region
          _
        $region32: #{tpu_custom_call.1} parent=11 // pred_fallthru
          _
        // Predicated region
        $region33: #{tpu_custom_call.1} parent=11 // pred_check
          %p533 = pneg %p217
        $region34: #{tpu_custom_call.1} parent=11 // pred_check_branch
          %535 = sbr.rel (%p533) target = $region36
        $region35: #{tpu_custom_call.1} parent=11 // pred_region
          _
        $region36: #{tpu_custom_call.1} parent=11 // pred_fallthru
          _
        // Predicated region
        $region37: #{tpu_custom_call.1} parent=11 // pred_check
          %p536 = pneg %p238
        $region38: #{tpu_custom_call.1} parent=11 // pred_check_branch
          %538 = sbr.rel (%p536) target = $region40
        $region39: #{tpu_custom_call.1} parent=11 // pred_region
          _
        $region40: #{tpu_custom_call.1} parent=11 // pred_fallthru
          _
        // Predicated region
        $region41: #{tpu_custom_call.1} parent=11 // pred_check
          %p539 = pneg %p259
        $region42: #{tpu_custom_call.1} parent=11 // pred_check_branch
          %541 = sbr.rel (%p539) target = $region44
        $region43: #{tpu_custom_call.1} parent=11 // pred_region
          %s543 = ssub.s32 16, 16
          %544 = vsyncadd [#allocation9], %s543
          %s546 = sshll.u32 [#allocation8], 4
          %s547 = int_to_ptr.vmem [resolvable:$true] %s546
          %549 = dma.hbm_to_vmem [thread:$0]  %s9, 16, %s547, [#allocation9]
        $region44: #{tpu_custom_call.1} parent=11 // pred_fallthru
          _
        // Predicated region
        $region45: #{tpu_custom_call.1} parent=11 // pred_check
          %p550 = pneg %p280
        $region46: #{tpu_custom_call.1} parent=11 // pred_check_branch
          %552 = sbr.rel (%p550) target = $region48
        $region47: #{tpu_custom_call.1} parent=11 // pred_region
          %s554 = ssub.s32 512, 512
          %555 = vsyncadd [#allocation9], %s554
          %s556 = sshll.u32 [#allocation10], 4
          %s557 = int_to_ptr.vmem [resolvable:$true] %s556
          %562 = dma.hbm_to_vmem [thread:$0]  %s10, 512, %s557, [#allocation9], 128, 128, 8
        $region48: #{tpu_custom_call.1} parent=11 // pred_fallthru
          _
        // Predicated region
        $region49: #{tpu_custom_call.1} parent=11 // pred_check
          %p563 = pneg %p301
        $region50: #{tpu_custom_call.1} parent=11 // pred_check_branch
          %565 = sbr.rel (%p563) target = $region52
        $region51: #{tpu_custom_call.1} parent=11 // pred_region
          %s567 = ssub.s32 16, 16
          %568 = vsyncadd [#allocation12], %s567
          %s570 = sshll.u32 [#allocation11], 4
          %s571 = int_to_ptr.vmem [resolvable:$true] %s570
          %573 = dma.hbm_to_vmem [thread:$0]  %s11, 16, %s571, [#allocation12]
        $region52: #{tpu_custom_call.1} parent=11 // pred_fallthru
          _
        // Predicated region
        $region53: #{tpu_custom_call.1} parent=11 // pred_check
          %p574 = pneg %p322
        $region54: #{tpu_custom_call.1} parent=11 // pred_check_branch
          %576 = sbr.rel (%p574) target = $region56
        $region55: #{tpu_custom_call.1} parent=11 // pred_region
          %s578 = ssub.s32 512, 512
          %579 = vsyncadd [#allocation12], %s578
          %s580 = sshll.u32 [#allocation13], 4
          %s581 = int_to_ptr.vmem [resolvable:$true] %s580
          %586 = dma.hbm_to_vmem [thread:$0]  %s12, 512, %s581, [#allocation12], 128, 128, 8
        $region56: #{tpu_custom_call.1} parent=11 // pred_fallthru
          _
        // Predicated region
        $region57: #{tpu_custom_call.1} parent=11 // pred_check
          %p587 = pneg %p343
        $region58: #{tpu_custom_call.1} parent=11 // pred_check_branch
          %589 = sbr.rel (%p587) target = $region60
        $region59: #{tpu_custom_call.1} parent=11 // pred_region
          %s591 = ssub.s32 16, 16
          %592 = vsyncadd [#allocation15], %s591
          %s594 = sshll.u32 [#allocation14], 4
          %s595 = int_to_ptr.vmem [resolvable:$true] %s594
          %597 = dma.hbm_to_vmem [thread:$0]  %s13, 16, %s595, [#allocation15]
        $region60: #{tpu_custom_call.1} parent=11 // pred_fallthru
          _
        // Predicated region
        $region61: #{tpu_custom_call.1} parent=11 // pred_check
          %p598 = pneg %p364
        $region62: #{tpu_custom_call.1} parent=11 // pred_check_branch
          %600 = sbr.rel (%p598) target = $region64
        $region63: #{tpu_custom_call.1} parent=11 // pred_region
          %s602 = ssub.s32 512, 512
          %603 = vsyncadd [#allocation15], %s602
          %s604 = sshll.u32 [#allocation16], 4
          %s605 = int_to_ptr.vmem [resolvable:$true] %s604
          %610 = dma.hbm_to_vmem [thread:$0]  %s14, 512, %s605, [#allocation15], 128, 128, 8
        $region64: #{tpu_custom_call.1} parent=11 // pred_fallthru
          _
        // Predicated region
        $region65: #{tpu_custom_call.1} parent=11 // pred_check
          %p611 = pneg %p385
        $region66: #{tpu_custom_call.1} parent=11 // pred_check_branch
          %613 = sbr.rel (%p611) target = $region68
        $region67: #{tpu_custom_call.1} parent=11 // pred_region
          %s615 = ssub.s32 16, 16
          %616 = vsyncadd [#allocation18], %s615
          %s618 = sshll.u32 [#allocation17], 4
          %s619 = int_to_ptr.vmem [resolvable:$true] %s618
          %621 = dma.hbm_to_vmem [thread:$0]  %s15, 16, %s619, [#allocation18]
        $region68: #{tpu_custom_call.1} parent=11 // pred_fallthru
          _
        // Predicated region
        $region69: #{tpu_custom_call.1} parent=11 // pred_check
          %p622 = pneg %p406
        $region70: #{tpu_custom_call.1} parent=11 // pred_check_branch
          %624 = sbr.rel (%p622) target = $region72
        $region71: #{tpu_custom_call.1} parent=11 // pred_region
          _
        $region72: #{tpu_custom_call.1} parent=11 // pred_fallthru
          _
        // Predicated region
        $region73: #{tpu_custom_call.1} parent=11 // pred_check
          %p625 = pneg %p427
        $region74: #{tpu_custom_call.1} parent=11 // pred_check_branch
          %627 = sbr.rel (%p625) target = $region76
        $region75: #{tpu_custom_call.1} parent=11 // pred_region
          _
        $region76: #{tpu_custom_call.1} parent=11 // pred_fallthru
          _
        // Predicated region
        $region77: #{tpu_custom_call.1} parent=11 // pred_check
          %p628 = pneg %p448
        $region78: #{tpu_custom_call.1} parent=11 // pred_check_branch
          %630 = sbr.rel (%p628) target = $region80
        $region79: #{tpu_custom_call.1} parent=11 // pred_region
          _
        $region80: #{tpu_custom_call.1} parent=11 // pred_fallthru
          _
        // Predicated region
        $region81: #{tpu_custom_call.1} parent=11 // pred_check
          %p631 = pneg %p469
        $region82: #{tpu_custom_call.1} parent=11 // pred_check_branch
          %633 = sbr.rel (%p631) target = $region84
        $region83: #{tpu_custom_call.1} parent=11 // pred_region
          _
        $region84: #{tpu_custom_call.1} parent=11 // pred_fallthru
          _
      $region12: #{tpu_custom_call.1} parent=5 // pred_fallthru
        _
      %p634 = scmp.lt.s32.totalorder %s39, 2
      // Predicated region
      $region85: #{tpu_custom_call.1} parent=5 // pred_check
        %p635 = pneg %p634
      $region86: #{tpu_custom_call.1} parent=5 // pred_check_branch
        %637 = sbr.rel (%p635) target = $region88
      $region87: #{tpu_custom_call.1} parent=5 // pred_region
        // Predicated region
        $region89: #{tpu_custom_call.1} parent=87 // pred_check
          %p638 = pneg %p59
        $region90: #{tpu_custom_call.1} parent=87 // pred_check_branch
          %640 = sbr.rel (%p638) target = $region92
        $region91: #{tpu_custom_call.1} parent=87 // pred_region
          %s641 = sand.u32 %s49, 1
          %s642 = scalar_lea.sflag [#allocation3], %s641
          %s643 = sand.u32 %s49, 1
          %s644 = smul.addr %s643, 8
          %s645 = scalar_lea.vmem [#allocation2], %s644
          %s647 = ssub.s32 128, 128
          %648 = vsyncadd %s642, %s647
          %s649 = smul.addr %s39, 128
          %s650 = scalar_lea.hbm %s0, %s649
          %s652 = sshll.u32 %s645, 4
          %s653 = int_to_ptr.vmem [resolvable:$true] %s652
          %655 = dma.hbm_to_vmem [thread:$0]  %s650, 128, %s653, %s642
        $region92: #{tpu_custom_call.1} parent=87 // pred_fallthru
          _
        // Predicated region
        $region93: #{tpu_custom_call.1} parent=87 // pred_check
          %p656 = pneg %p85
        $region94: #{tpu_custom_call.1} parent=87 // pred_check_branch
          %658 = sbr.rel (%p656) target = $region96
        $region95: #{tpu_custom_call.1} parent=87 // pred_region
          %s659 = sand.u32 %s39, 1
          %s660 = scalar_lea.sflag [#allocation6], %s659
          %s661 = sand.u32 %s75, 1
          %s662 = smul.addr %s661, 8
          %s663 = scalar_lea.vmem [#allocation5], %s662
          %s665 = ssub.s32 128, 128
          %666 = vsyncadd %s660, %s665
          %s667 = smul.addr %s39, 128
          %s668 = scalar_lea.hbm %s1, %s667
          %s670 = sshll.u32 %s663, 4
          %s671 = int_to_ptr.vmem [resolvable:$true] %s670
          %673 = dma.hbm_to_vmem [thread:$0]  %s668, 128, %s671, %s660
        $region96: #{tpu_custom_call.1} parent=87 // pred_fallthru
          _
      $region88: #{tpu_custom_call.1} parent=5 // pred_fallthru
        _
      %p674 = scmp.le.s32.totalorder 1, %s39
      %p675 = scmp.lt.s32.totalorder %s39, 3
      %p676 = pnand %p674, %p675
      %p677 = pneg %p676
      // Predicated region
      $region97: #{tpu_custom_call.1} parent=5 // pred_check
        _
      $region98: #{tpu_custom_call.1} parent=5 // pred_check_branch
        %679 = sbr.rel (%p676) target = $region100
      $region99: #{tpu_custom_call.1} parent=5 // pred_region
        %s680 = ssub.s32 %s39, 1
        %s681 = sand.u32 %s52, 1
        %s682 = scalar_lea.sflag [#allocation3], %s681
        %s683 = sand.u32 %s52, 1
        %s684 = smul.addr %s683, 8
        %s685 = scalar_lea.vmem [#allocation2], %s684
        // Predicated region
        $region101: #{tpu_custom_call.1} parent=99 // pred_check
          %p686 = pneg %p65
        $region102: #{tpu_custom_call.1} parent=99 // pred_check_branch
          %688 = sbr.rel (%p686) target = $region104
        $region103: #{tpu_custom_call.1} parent=99 // pred_region
          %689 = dma.done %s682, 128
        $region104: #{tpu_custom_call.1} parent=99 // pred_fallthru
          _
        %s690 = sand.u32 %s44, 1
        %s691 = scalar_lea.sflag [#allocation6], %s690
        %s692 = sand.u32 %s78, 1
        %s693 = smul.addr %s692, 8
        %s694 = scalar_lea.vmem [#allocation5], %s693
        // Predicated region
        $region105: #{tpu_custom_call.1} parent=99 // pred_check
          %p695 = pneg %p91
        $region106: #{tpu_custom_call.1} parent=99 // pred_check_branch
          %697 = sbr.rel (%p695) target = $region108
        $region107: #{tpu_custom_call.1} parent=99 // pred_region
          %698 = dma.done %s691, 128
        $region108: #{tpu_custom_call.1} parent=99 // pred_fallthru
          _
        // Predicated region
        $region109: #{tpu_custom_call.1} parent=99 // pred_check
          %p699 = pneg %p112
        $region110: #{tpu_custom_call.1} parent=99 // pred_check_branch
          %701 = sbr.rel (%p699) target = $region112
        $region111: #{tpu_custom_call.1} parent=99 // pred_region
          %702 = dma.done [#allocation6], 128
        $region112: #{tpu_custom_call.1} parent=99 // pred_fallthru
          _
        // Predicated region
        $region113: #{tpu_custom_call.1} parent=99 // pred_check
          %p703 = pneg %p259
        $region114: #{tpu_custom_call.1} parent=99 // pred_check_branch
          %705 = sbr.rel (%p703) target = $region116
        $region115: #{tpu_custom_call.1} parent=99 // pred_region
          %706 = dma.done [#allocation9], 16
        $region116: #{tpu_custom_call.1} parent=99 // pred_fallthru
          _
        // Predicated region
        $region117: #{tpu_custom_call.1} parent=99 // pred_check
          %p707 = pneg %p280
        $region118: #{tpu_custom_call.1} parent=99 // pred_check_branch
          %709 = sbr.rel (%p707) target = $region120
        $region119: #{tpu_custom_call.1} parent=99 // pred_region
          %710 = dma.done [#allocation9], 512
        $region120: #{tpu_custom_call.1} parent=99 // pred_fallthru
          _
        // Predicated region
        $region121: #{tpu_custom_call.1} parent=99 // pred_check
          %p711 = pneg %p301
        $region122: #{tpu_custom_call.1} parent=99 // pred_check_branch
          %713 = sbr.rel (%p711) target = $region124
        $region123: #{tpu_custom_call.1} parent=99 // pred_region
          %714 = dma.done [#allocation12], 16
        $region124: #{tpu_custom_call.1} parent=99 // pred_fallthru
          _
        // Predicated region
        $region125: #{tpu_custom_call.1} parent=99 // pred_check
          %p715 = pneg %p322
        $region126: #{tpu_custom_call.1} parent=99 // pred_check_branch
          %717 = sbr.rel (%p715) target = $region128
        $region127: #{tpu_custom_call.1} parent=99 // pred_region
          %718 = dma.done [#allocation12], 512
        $region128: #{tpu_custom_call.1} parent=99 // pred_fallthru
          _
        // Predicated region
        $region129: #{tpu_custom_call.1} parent=99 // pred_check
          %p719 = pneg %p343
        $region130: #{tpu_custom_call.1} parent=99 // pred_check_branch
          %721 = sbr.rel (%p719) target = $region132
        $region131: #{tpu_custom_call.1} parent=99 // pred_region
          %722 = dma.done [#allocation15], 16
        $region132: #{tpu_custom_call.1} parent=99 // pred_fallthru
          _
        // Predicated region
        $region133: #{tpu_custom_call.1} parent=99 // pred_check
          %p723 = pneg %p364
        $region134: #{tpu_custom_call.1} parent=99 // pred_check_branch
          %725 = sbr.rel (%p723) target = $region136
        $region135: #{tpu_custom_call.1} parent=99 // pred_region
          %726 = dma.done [#allocation15], 512
        $region136: #{tpu_custom_call.1} parent=99 // pred_fallthru
          _
        // Predicated region
        $region137: #{tpu_custom_call.1} parent=99 // pred_check
          %p727 = pneg %p385
        $region138: #{tpu_custom_call.1} parent=99 // pred_check_branch
          %729 = sbr.rel (%p727) target = $region140
        $region139: #{tpu_custom_call.1} parent=99 // pred_region
          %730 = dma.done [#allocation18], 16
        $region140: #{tpu_custom_call.1} parent=99 // pred_fallthru
          _
        %s731 = sand.u32 %s52, 1
        %s732 = scalar_lea.sflag [#allocation3], %s731
        %s733 = sand.u32 %s52, 1
        %s734 = smul.addr %s733, 8
        %s735 = scalar_lea.vmem [#allocation2], %s734
        %p736 = pneg %p65
        %p737 = pneg %p62
        %s738 = sand.u32 %s44, 1
        %s739 = scalar_lea.sflag [#allocation6], %s738
        %s740 = sand.u32 %s78, 1
        %s741 = smul.addr %s740, 8
        %s742 = scalar_lea.vmem [#allocation5], %s741
        %p743 = pneg %p91
        %p744 = pneg %p88
        %p745 = pneg %p112
        %p746 = pneg %p109
        %p747 = pneg %p133
        %p748 = pneg %p130
        %p749 = pneg %p154
        %p750 = pneg %p151
        %p751 = pneg %p175
        %p752 = pneg %p172
        %p753 = pneg %p196
        %p754 = pneg %p193
        %p755 = pneg %p217
        %p756 = pneg %p214
        %p757 = pneg %p238
        %p758 = pneg %p235
        %p759 = pneg %p259
        %p760 = pneg %p256
        %p761 = pneg %p280
        %p762 = pneg %p277
        %p763 = pneg %p301
        %p764 = pneg %p298
        %p765 = pneg %p322
        %p766 = pneg %p319
        %p767 = pneg %p343
        %p768 = pneg %p340
        %p769 = pneg %p364
        %p770 = pneg %p361
        %p771 = pneg %p385
        %p772 = pneg %p382
        %p773 = pneg %p406
        %p774 = pneg %p403
        %p775 = pneg %p427
        %p776 = pneg %p424
        %p777 = pneg %p448
        %p778 = pneg %p445
        %p779 = pneg %p469
        %p780 = pneg %p466
        %p781 = pneg %p495
        %p782 = pneg %p492
        %s783 = sand.u32 %s482, 1
        %s784 = scalar_lea.sflag [#allocation4], %s783
        %s785 = sand.u32 %s482, 1
        %s786 = smul.addr %s785, 8
        %s787 = scalar_lea.vmem [#allocation19], %s786
        %v788 = vld [vmem:[%s685] sm:$0xff]
        %v789 = vld [vmem:[%s694] sm:$0xff]
        %v790 = vld [vmem:[%s3] sm:$0x7]
        %v791 = vld [vmem:[#allocation7] sm:$0xff]
        %vm792 = vcmask 261120
        %v793 = vsel %vm792, %v788, 0.0
        %794 = vadd.xlane.f32.xlu0 %v793
        %v795 = vpop.xlane.xlu0 %794
        %v796 = vrcp.pop 32.0
        %v797 = vmul.f32 %v795, %v796
        %v798 = vsub.f32 %v788, %v797
        %v799 = vmul.f32 %v798, %v798
        %v800 = vsel %vm792, %v799, 0.0
        %801 = vadd.xlane.f32.xlu0 %v800
        %v802 = vpop.xlane.xlu0 %801
        %v803 = vmul.f32 %v802, 0.032258064
        %v804 = vrsqrt.pop %v803
        %v805 = vmul.f32 %v803, %v804
        %vm806 = vcmp.eq.f32.partialorder %v803, inf
        %v807 = vsel %vm806, %v803, %v805
        %vm808 = vcmp.eq.f32.partialorder %v803, 0.0
        %v809 = vand.u32 %v803, 2147483648
        %v810 = vsel %vm808, %v809, %v807
        %v811 = vadd.f32 %v810, 1e-06
        %v812 = vrcp.pop %v811
        %v813 = vmul.f32 %v811, %v812
        %v814 = vsub.f32 2.0, %v813
        %v815 = vmul.f32 %v812, %v814
        %v816 = vmul.f32 %v798, %v815
        %s818 = vtos %v790
        %v819 = vstv %s818
        %v821 = vmul.f32 %v816, %v819
        %822 = vrot.lane.b32.xlu0 %v790, 127
        %v823 = vpop.permute.xlu0 %822
        %s824 = vtos %v823
        %v825 = vstv %s824
        %v827 = vadd.f32 %v821, %v825
        %v828 = vld [vmem:[%s4] sm:$0xff]
        %v829 = vld [vmem:[%s4 + $0x8] sm:$0xff]
        %v830 = vld [vmem:[%s4 + $0x10] sm:$0xff]
        %v831 = vld [vmem:[%s4 + $0x18] sm:$0xff]
        %v832 = vld [vmem:[%s5] sm:$0x1]
        %v833 = vld [vmem:[%s6] sm:$0xff]
        %v834 = vld [vmem:[%s6 + $0x8] sm:$0xff]
        %v835 = vld [vmem:[%s6 + $0x10] sm:$0xff]
        %v836 = vld [vmem:[%s6 + $0x18] sm:$0xff]
        %v837 = vld [vmem:[%s7] sm:$0x1]
        %v838 = vld [vmem:[%s8] sm:$0xff]
        %v839 = vld [vmem:[%s8 + $0x8] sm:$0xff]
        %v840 = vld [vmem:[%s8 + $0x10] sm:$0xff]
        %v841 = vld [vmem:[%s8 + $0x18] sm:$0xff]
        %v842 = vld [vmem:[#allocation8] sm:$0x1]
        %v844 = vlaneseq
        %v845 = vshrl.u32 %v844, 7
        %v846 = vsub.s32 0, %v845
        %v847 = vrot.slane %v832, %v846
        %v850 = vsel %vm792, %v827, 0
        %852 = vmatprep.subr.mxu0 0.0
        %853 = vmatpush1.msra.mxu0 %v828
        %854 = vmatprep.subr.mxu0 0.0
        %855 = vmatpush1.msra.mxu0 %v829
        %856 = vmatprep.subr.mxu0 0.0
        %857 = vmatpush1.msra.mxu0 %v830
        %858 = vmatprep.subr.mxu0 0.0
        %859 = vmatpush1.msra.mxu0 %v831
        %860 = vmatprep.subr.mxu0 0.0
        %861 = vmatpush1.msra.mxu0 0.0
        %862 = vmatprep.subr.mxu0 0.0
        %863 = vmatpush1.msra.mxu0 0.0
        %864 = vmatprep.subr.mxu0 0.0
        %865 = vmatpush1.msra.mxu0 0.0
        %866 = vmatprep.subr.mxu0 0.0
        %867 = vmatpush1.msra.mxu0 0.0
        %868 = vmatprep.subr.mxu0 0.0
        %869 = vmatpush1.msra.mxu0 0.0
        %870 = vmatprep.subr.mxu0 0.0
        %871 = vmatpush1.msra.mxu0 0.0
        %872 = vmatprep.subr.mxu0 0.0
        %873 = vmatpush1.msra.mxu0 0.0
        %874 = vmatprep.subr.mxu0 0.0
        %875 = vmatpush1.msra.mxu0 0.0
        %876 = vmatprep.subr.mxu0 0.0
        %877 = vmatpush1.msra.mxu0 0.0
        %878 = vmatprep.subr.mxu0 0.0
        %879 = vmatpush1.msra.mxu0 0.0
        %880 = vmatprep.subr.mxu0 0.0
        %881 = vmatpush1.msra.mxu0 0.0
        %882 = vmatprep.subr.mxu0 0.0
        %883 = vmatpush1.msra.mxu0 0.0
        %884 = vmatprep.subr.mxu0 0.0
        %885 = vmatpush1.msra.mxu0 0.0
        %886 = vmatprep.subr.mxu0 0.0
        %887 = vmatpush1.msra.mxu0 0.0
        %888 = vmatprep.subr.mxu0 0.0
        %889 = vmatpush1.msra.mxu0 0.0
        %890 = vmatprep.subr.mxu0 0.0
        %891 = vmatpush1.msra.mxu0 0.0
        %892 = vmatprep.subr.mxu0 0.0
        %893 = vmatpush1.msra.mxu0 0.0
        %894 = vmatprep.subr.mxu0 0.0
        %895 = vmatpush1.msra.mxu0 0.0
        %896 = vmatprep.subr.mxu0 0.0
        %897 = vmatpush1.msra.mxu0 0.0
        %898 = vmatprep.subr.mxu0 0.0
        %899 = vmatpush1.msra.mxu0 0.0
        %900 = vmatprep.subr.mxu0 0.0
        %901 = vmatpush1.msra.mxu0 0.0
        %902 = vmatprep.subr.mxu0 0.0
        %903 = vmatpush1.msra.mxu0 0.0
        %904 = vmatprep.subr.mxu0 0.0
        %905 = vmatpush1.msra.mxu0 0.0
        %906 = vmatprep.subr.mxu0 0.0
        %907 = vmatpush1.msra.mxu0 0.0
        %908 = vmatprep.subr.mxu0 0.0
        %909 = vmatpush1.msra.mxu0 0.0
        %910 = vmatprep.subr.mxu0 0.0
        %911 = vmatpush1.msra.mxu0 0.0
        %912 = vmatprep.subr.mxu0 0.0
        %913 = vmatpush1.msra.mxu0 0.0
        %914 = vmatprep.subr.mxu0 0.0
        %915 = vmatpush1.msra.mxu0 0.0
        %916 = vmatprep.mubr.f32.mxu0 0.0
        %917 = vmatmul.mubr.f32.gmra.mrb[0].mxu0 %v850
        %v918 = vpop.f32.mrb[0].mxu0
        %v919 = vadd.f32 %v847, %v918
        %v920 = vpop.f32.mrb[0].mxu0
        %921 = vdwg.mxu0
        %v923 = vlaneseq
        %v924 = vshrl.u32 %v923, 7
        %v925 = vsub.s32 0, %v924
        %v926 = vrot.slane %v837, %v925
        %928 = vmatprep.subr.mxu0 0.0
        %929 = vmatpush1.msra.mxu0 %v833
        %930 = vmatprep.subr.mxu0 0.0
        %931 = vmatpush1.msra.mxu0 %v834
        %932 = vmatprep.subr.mxu0 0.0
        %933 = vmatpush1.msra.mxu0 %v835
        %934 = vmatprep.subr.mxu0 0.0
        %935 = vmatpush1.msra.mxu0 %v836
        %936 = vmatprep.subr.mxu0 0.0
        %937 = vmatpush1.msra.mxu0 0.0
        %938 = vmatprep.subr.mxu0 0.0
        %939 = vmatpush1.msra.mxu0 0.0
        %940 = vmatprep.subr.mxu0 0.0
        %941 = vmatpush1.msra.mxu0 0.0
        %942 = vmatprep.subr.mxu0 0.0
        %943 = vmatpush1.msra.mxu0 0.0
        %944 = vmatprep.subr.mxu0 0.0
        %945 = vmatpush1.msra.mxu0 0.0
        %946 = vmatprep.subr.mxu0 0.0
        %947 = vmatpush1.msra.mxu0 0.0
        %948 = vmatprep.subr.mxu0 0.0
        %949 = vmatpush1.msra.mxu0 0.0
        %950 = vmatprep.subr.mxu0 0.0
        %951 = vmatpush1.msra.mxu0 0.0
        %952 = vmatprep.subr.mxu0 0.0
        %953 = vmatpush1.msra.mxu0 0.0
        %954 = vmatprep.subr.mxu0 0.0
        %955 = vmatpush1.msra.mxu0 0.0
        %956 = vmatprep.subr.mxu0 0.0
        %957 = vmatpush1.msra.mxu0 0.0
        %958 = vmatprep.subr.mxu0 0.0
        %959 = vmatpush1.msra.mxu0 0.0
        %960 = vmatprep.subr.mxu0 0.0
        %961 = vmatpush1.msra.mxu0 0.0
        %962 = vmatprep.subr.mxu0 0.0
        %963 = vmatpush1.msra.mxu0 0.0
        %964 = vmatprep.subr.mxu0 0.0
        %965 = vmatpush1.msra.mxu0 0.0
        %966 = vmatprep.subr.mxu0 0.0
        %967 = vmatpush1.msra.mxu0 0.0
        %968 = vmatprep.subr.mxu0 0.0
        %969 = vmatpush1.msra.mxu0 0.0
        %970 = vmatprep.subr.mxu0 0.0
        %971 = vmatpush1.msra.mxu0 0.0
        %972 = vmatprep.subr.mxu0 0.0
        %973 = vmatpush1.msra.mxu0 0.0
        %974 = vmatprep.subr.mxu0 0.0
        %975 = vmatpush1.msra.mxu0 0.0
        %976 = vmatprep.subr.mxu0 0.0
        %977 = vmatpush1.msra.mxu0 0.0
        %978 = vmatprep.subr.mxu0 0.0
        %979 = vmatpush1.msra.mxu0 0.0
        %980 = vmatprep.subr.mxu0 0.0
        %981 = vmatpush1.msra.mxu0 0.0
        %982 = vmatprep.subr.mxu0 0.0
        %983 = vmatpush1.msra.mxu0 0.0
        %984 = vmatprep.subr.mxu0 0.0
        %985 = vmatpush1.msra.mxu0 0.0
        %986 = vmatprep.subr.mxu0 0.0
        %987 = vmatpush1.msra.mxu0 0.0
        %988 = vmatprep.subr.mxu0 0.0
        %989 = vmatpush1.msra.mxu0 0.0
        %990 = vmatprep.subr.mxu0 0.0
        %991 = vmatpush1.msra.mxu0 0.0
        %992 = vmatprep.mubr.f32.mxu0 0.0
        %993 = vmatmul.mubr.f32.gmra.mrb[0].mxu0 %v850
        %v994 = vpop.f32.mrb[0].mxu0
        %v995 = vadd.f32 %v926, %v994
        %v996 = vpop.f32.mrb[0].mxu0
        %997 = vdwg.mxu0
        %vm998 = vcmask 64512
        %v1000 = vsel %vm998, %v919, 0
        %v1003 = vsel %vm998, %v995, 0
        %1005 = vmatprep.subr.mxu0 0.0
        %1006 = vmatpush1.xpose.msra.mxu0 %v1003
        %1007 = vmatprep.subr.mxu0 0.0
        %1008 = vmatpush1.xpose.msra.mxu0 0.0
        %1009 = vmatprep.subr.mxu0 0.0
        %1010 = vmatpush1.xpose.msra.mxu0 0.0
        %1011 = vmatprep.subr.mxu0 0.0
        %1012 = vmatpush1.xpose.msra.mxu0 0.0
        %1013 = vmatprep.subr.mxu0 0.0
        %1014 = vmatpush1.xpose.msra.mxu0 0.0
        %1015 = vmatprep.subr.mxu0 0.0
        %1016 = vmatpush1.xpose.msra.mxu0 0.0
        %1017 = vmatprep.subr.mxu0 0.0
        %1018 = vmatpush1.xpose.msra.mxu0 0.0
        %1019 = vmatprep.subr.mxu0 0.0
        %1020 = vmatpush1.xpose.msra.mxu0 0.0
        %1021 = vmatprep.subr.mxu0 0.0
        %1022 = vmatpush1.xpose.msra.mxu0 0.0
        %1023 = vmatprep.subr.mxu0 0.0
        %1024 = vmatpush1.xpose.msra.mxu0 0.0
        %1025 = vmatprep.subr.mxu0 0.0
        %1026 = vmatpush1.xpose.msra.mxu0 0.0
        %1027 = vmatprep.subr.mxu0 0.0
        %1028 = vmatpush1.xpose.msra.mxu0 0.0
        %1029 = vmatprep.subr.mxu0 0.0
        %1030 = vmatpush1.xpose.msra.mxu0 0.0
        %1031 = vmatprep.subr.mxu0 0.0
        %1032 = vmatpush1.xpose.msra.mxu0 0.0
        %1033 = vmatprep.subr.mxu0 0.0
        %1034 = vmatpush1.xpose.msra.mxu0 0.0
        %1035 = vmatprep.subr.mxu0 0.0
        %1036 = vmatpush1.xpose.msra.mxu0 0.0
        %1037 = vmatprep.subr.mxu0 0.0
        %1038 = vmatpush1.xpose.msra.mxu0 0.0
        %1039 = vmatprep.subr.mxu0 0.0
        %1040 = vmatpush1.xpose.msra.mxu0 0.0
        %1041 = vmatprep.subr.mxu0 0.0
        %1042 = vmatpush1.xpose.msra.mxu0 0.0
        %1043 = vmatprep.subr.mxu0 0.0
        %1044 = vmatpush1.xpose.msra.mxu0 0.0
        %1045 = vmatprep.subr.mxu0 0.0
        %1046 = vmatpush1.xpose.msra.mxu0 0.0
        %1047 = vmatprep.subr.mxu0 0.0
        %1048 = vmatpush1.xpose.msra.mxu0 0.0
        %1049 = vmatprep.subr.mxu0 0.0
        %1050 = vmatpush1.xpose.msra.mxu0 0.0
        %1051 = vmatprep.subr.mxu0 0.0
        %1052 = vmatpush1.xpose.msra.mxu0 0.0
        %1053 = vmatprep.subr.mxu0 0.0
        %1054 = vmatpush1.xpose.msra.mxu0 0.0
        %1055 = vmatprep.subr.mxu0 0.0
        %1056 = vmatpush1.xpose.msra.mxu0 0.0
        %1057 = vmatprep.subr.mxu0 0.0
        %1058 = vmatpush1.xpose.msra.mxu0 0.0
        %1059 = vmatprep.subr.mxu0 0.0
        %1060 = vmatpush1.xpose.msra.mxu0 0.0
        %1061 = vmatprep.subr.mxu0 0.0
        %1062 = vmatpush1.xpose.msra.mxu0 0.0
        %1063 = vmatprep.subr.mxu0 0.0
        %1064 = vmatpush1.xpose.msra.mxu0 0.0
        %1065 = vmatprep.subr.mxu0 0.0
        %1066 = vmatpush1.xpose.msra.mxu0 0.0
        %1067 = vmatprep.subr.mxu0 0.0
        %1068 = vmatpush1.xpose.msra.mxu0 0.0
        %1069 = vmatprep.mubr.f32.mxu0 0.0
        %1070 = vmatmul.mubr.f32.gmra.mrb[0].mxu0 %v1000
        %v1071 = vpop.f32.mrb[0].mxu0
        %v1072 = vadd.f32 0.0, %v1071
        %v1073 = vpop.f32.mrb[0].mxu0
        %1074 = vdwg.mxu0
        %v1075 = vmul.f32 %v1072, 0.35355338
        %v1076 = vadd.f32 %v1075, %v791
        %v1077 = vsel %vm998, %v1076, -inf
        %1078 = vmax.xlane.f32.xlu0 %v1077
        %v1079 = vpop.xlane.xlu0 %1078
        %v1080 = vsub.f32 %v1076, %v1079
        %v1081 = vmul.f32 %v1080, 1.442695
        %v1082 = vpow.pop %v1081
        %v1083 = vsel %vm998, %v1082, 0.0
        %1084 = vadd.xlane.f32.xlu0 %v1083
        %v1085 = vpop.xlane.xlu0 %1084
        %v1086 = vrcp.pop %v1085
        %v1087 = vmul.f32 %v1085, %v1086
        %v1088 = vsub.f32 2.0, %v1087
        %v1089 = vmul.f32 %v1086, %v1088
        %v1090 = vmul.f32 %v1082, %v1089
        %1091 = vrot.lane.b32.xlu0 %v995, 96
        %v1092 = vpop.permute.xlu0 %1091
        %v1095 = vsel %vm998, %v1090, 0
        %1097 = vmatprep.subr.mxu0 0.0
        %1098 = vmatpush1.msra.mxu0 %v1092
        %1099 = vmatprep.subr.mxu0 0.0
        %1100 = vmatpush1.msra.mxu0 0.0
        %1101 = vmatprep.subr.mxu0 0.0
        %1102 = vmatpush1.msra.mxu0 0.0
        %1103 = vmatprep.subr.mxu0 0.0
        %1104 = vmatpush1.msra.mxu0 0.0
        %1105 = vmatprep.subr.mxu0 0.0
        %1106 = vmatpush1.msra.mxu0 0.0
        %1107 = vmatprep.subr.mxu0 0.0
        %1108 = vmatpush1.msra.mxu0 0.0
        %1109 = vmatprep.subr.mxu0 0.0
        %1110 = vmatpush1.msra.mxu0 0.0
        %1111 = vmatprep.subr.mxu0 0.0
        %1112 = vmatpush1.msra.mxu0 0.0
        %1113 = vmatprep.subr.mxu0 0.0
        %1114 = vmatpush1.msra.mxu0 0.0
        %1115 = vmatprep.subr.mxu0 0.0
        %1116 = vmatpush1.msra.mxu0 0.0
        %1117 = vmatprep.subr.mxu0 0.0
        %1118 = vmatpush1.msra.mxu0 0.0
        %1119 = vmatprep.subr.mxu0 0.0
        %1120 = vmatpush1.msra.mxu0 0.0
        %1121 = vmatprep.subr.mxu0 0.0
        %1122 = vmatpush1.msra.mxu0 0.0
        %1123 = vmatprep.subr.mxu0 0.0
        %1124 = vmatpush1.msra.mxu0 0.0
        %1125 = vmatprep.subr.mxu0 0.0
        %1126 = vmatpush1.msra.mxu0 0.0
        %1127 = vmatprep.subr.mxu0 0.0
        %1128 = vmatpush1.msra.mxu0 0.0
        %1129 = vmatprep.subr.mxu0 0.0
        %1130 = vmatpush1.msra.mxu0 0.0
        %1131 = vmatprep.subr.mxu0 0.0
        %1132 = vmatpush1.msra.mxu0 0.0
        %1133 = vmatprep.subr.mxu0 0.0
        %1134 = vmatpush1.msra.mxu0 0.0
        %1135 = vmatprep.subr.mxu0 0.0
        %1136 = vmatpush1.msra.mxu0 0.0
        %1137 = vmatprep.subr.mxu0 0.0
        %1138 = vmatpush1.msra.mxu0 0.0
        %1139 = vmatprep.subr.mxu0 0.0
        %1140 = vmatpush1.msra.mxu0 0.0
        %1141 = vmatprep.subr.mxu0 0.0
        %1142 = vmatpush1.msra.mxu0 0.0
        %1143 = vmatprep.subr.mxu0 0.0
        %1144 = vmatpush1.msra.mxu0 0.0
        %1145 = vmatprep.subr.mxu0 0.0
        %1146 = vmatpush1.msra.mxu0 0.0
        %1147 = vmatprep.subr.mxu0 0.0
        %1148 = vmatpush1.msra.mxu0 0.0
        %1149 = vmatprep.subr.mxu0 0.0
        %1150 = vmatpush1.msra.mxu0 0.0
        %1151 = vmatprep.subr.mxu0 0.0
        %1152 = vmatpush1.msra.mxu0 0.0
        %1153 = vmatprep.subr.mxu0 0.0
        %1154 = vmatpush1.msra.mxu0 0.0
        %1155 = vmatprep.subr.mxu0 0.0
        %1156 = vmatpush1.msra.mxu0 0.0
        %1157 = vmatprep.subr.mxu0 0.0
        %1158 = vmatpush1.msra.mxu0 0.0
        %1159 = vmatprep.subr.mxu0 0.0
        %1160 = vmatpush1.msra.mxu0 0.0
        %1161 = vmatprep.mubr.f32.mxu0 0.0
        %1162 = vmatmul.mubr.f32.gmra.mrb[0].mxu0 %v1095
        %v1163 = vpop.f32.mrb[0].mxu0
        %v1164 = vadd.f32 0.0, %v1163
        %v1165 = vpop.f32.mrb[0].mxu0
        %1166 = vdwg.mxu0
        %1167 = vrot.lane.b32.xlu0 %v919, 120
        %v1168 = vpop.permute.xlu0 %1167
        %1169 = vrot.lane.b32.xlu0 %v995, 120
        %v1170 = vpop.permute.xlu0 %1169
        %v1171 = vsel %vm998, %v1168, 0
        %v1173 = vsel %vm998, %v1170, 0
        %1175 = vmatprep.subr.mxu0 0.0
        %1176 = vmatpush1.xpose.msra.mxu0 %v1173
        %1177 = vmatprep.subr.mxu0 0.0
        %1178 = vmatpush1.xpose.msra.mxu0 0.0
        %1179 = vmatprep.subr.mxu0 0.0
        %1180 = vmatpush1.xpose.msra.mxu0 0.0
        %1181 = vmatprep.subr.mxu0 0.0
        %1182 = vmatpush1.xpose.msra.mxu0 0.0
        %1183 = vmatprep.subr.mxu0 0.0
        %1184 = vmatpush1.xpose.msra.mxu0 0.0
        %1185 = vmatprep.subr.mxu0 0.0
        %1186 = vmatpush1.xpose.msra.mxu0 0.0
        %1187 = vmatprep.subr.mxu0 0.0
        %1188 = vmatpush1.xpose.msra.mxu0 0.0
        %1189 = vmatprep.subr.mxu0 0.0
        %1190 = vmatpush1.xpose.msra.mxu0 0.0
        %1191 = vmatprep.subr.mxu0 0.0
        %1192 = vmatpush1.xpose.msra.mxu0 0.0
        %1193 = vmatprep.subr.mxu0 0.0
        %1194 = vmatpush1.xpose.msra.mxu0 0.0
        %1195 = vmatprep.subr.mxu0 0.0
        %1196 = vmatpush1.xpose.msra.mxu0 0.0
        %1197 = vmatprep.subr.mxu0 0.0
        %1198 = vmatpush1.xpose.msra.mxu0 0.0
        %1199 = vmatprep.subr.mxu0 0.0
        %1200 = vmatpush1.xpose.msra.mxu0 0.0
        %1201 = vmatprep.subr.mxu0 0.0
        %1202 = vmatpush1.xpose.msra.mxu0 0.0
        %1203 = vmatprep.subr.mxu0 0.0
        %1204 = vmatpush1.xpose.msra.mxu0 0.0
        %1205 = vmatprep.subr.mxu0 0.0
        %1206 = vmatpush1.xpose.msra.mxu0 0.0
        %1207 = vmatprep.subr.mxu0 0.0
        %1208 = vmatpush1.xpose.msra.mxu0 0.0
        %1209 = vmatprep.subr.mxu0 0.0
        %1210 = vmatpush1.xpose.msra.mxu0 0.0
        %1211 = vmatprep.subr.mxu0 0.0
        %1212 = vmatpush1.xpose.msra.mxu0 0.0
        %1213 = vmatprep.subr.mxu0 0.0
        %1214 = vmatpush1.xpose.msra.mxu0 0.0
        %1215 = vmatprep.subr.mxu0 0.0
        %1216 = vmatpush1.xpose.msra.mxu0 0.0
        %1217 = vmatprep.subr.mxu0 0.0
        %1218 = vmatpush1.xpose.msra.mxu0 0.0
        %1219 = vmatprep.subr.mxu0 0.0
        %1220 = vmatpush1.xpose.msra.mxu0 0.0
        %1221 = vmatprep.subr.mxu0 0.0
        %1222 = vmatpush1.xpose.msra.mxu0 0.0
        %1223 = vmatprep.subr.mxu0 0.0
        %1224 = vmatpush1.xpose.msra.mxu0 0.0
        %1225 = vmatprep.subr.mxu0 0.0
        %1226 = vmatpush1.xpose.msra.mxu0 0.0
        %1227 = vmatprep.subr.mxu0 0.0
        %1228 = vmatpush1.xpose.msra.mxu0 0.0
        %1229 = vmatprep.subr.mxu0 0.0
        %1230 = vmatpush1.xpose.msra.mxu0 0.0
        %1231 = vmatprep.subr.mxu0 0.0
        %1232 = vmatpush1.xpose.msra.mxu0 0.0
        %1233 = vmatprep.subr.mxu0 0.0
        %1234 = vmatpush1.xpose.msra.mxu0 0.0
        %1235 = vmatprep.subr.mxu0 0.0
        %1236 = vmatpush1.xpose.msra.mxu0 0.0
        %1237 = vmatprep.subr.mxu0 0.0
        %1238 = vmatpush1.xpose.msra.mxu0 0.0
        %1239 = vmatprep.mubr.f32.mxu0 0.0
        %1240 = vmatmul.mubr.f32.gmra.mrb[0].mxu0 %v1171
        %v1241 = vpop.f32.mrb[0].mxu0
        %v1242 = vadd.f32 0.0, %v1241
        %v1243 = vpop.f32.mrb[0].mxu0
        %1244 = vdwg.mxu0
        %v1245 = vmul.f32 %v1242, 0.35355338
        %v1246 = vadd.f32 %v1245, %v791
        %v1247 = vsel %vm998, %v1246, -inf
        %1248 = vmax.xlane.f32.xlu0 %v1247
        %v1249 = vpop.xlane.xlu0 %1248
        %v1250 = vsub.f32 %v1246, %v1249
        %v1251 = vmul.f32 %v1250, 1.442695
        %v1252 = vpow.pop %v1251
        %v1253 = vsel %vm998, %v1252, 0.0
        %1254 = vadd.xlane.f32.xlu0 %v1253
        %v1255 = vpop.xlane.xlu0 %1254
        %v1256 = vrcp.pop %v1255
        %v1257 = vmul.f32 %v1255, %v1256
        %v1258 = vsub.f32 2.0, %v1257
        %v1259 = vmul.f32 %v1256, %v1258
        %v1260 = vmul.f32 %v1252, %v1259
        %1261 = vrot.lane.b32.xlu0 %v995, 88
        %v1262 = vpop.permute.xlu0 %1261
        %v1265 = vsel %vm998, %v1260, 0
        %1267 = vmatprep.subr.mxu0 0.0
        %1268 = vmatpush1.msra.mxu0 %v1262
        %1269 = vmatprep.subr.mxu0 0.0
        %1270 = vmatpush1.msra.mxu0 0.0
        %1271 = vmatprep.subr.mxu0 0.0
        %1272 = vmatpush1.msra.mxu0 0.0
        %1273 = vmatprep.subr.mxu0 0.0
        %1274 = vmatpush1.msra.mxu0 0.0
        %1275 = vmatprep.subr.mxu0 0.0
        %1276 = vmatpush1.msra.mxu0 0.0
        %1277 = vmatprep.subr.mxu0 0.0
        %1278 = vmatpush1.msra.mxu0 0.0
        %1279 = vmatprep.subr.mxu0 0.0
        %1280 = vmatpush1.msra.mxu0 0.0
        %1281 = vmatprep.subr.mxu0 0.0
        %1282 = vmatpush1.msra.mxu0 0.0
        %1283 = vmatprep.subr.mxu0 0.0
        %1284 = vmatpush1.msra.mxu0 0.0
        %1285 = vmatprep.subr.mxu0 0.0
        %1286 = vmatpush1.msra.mxu0 0.0
        %1287 = vmatprep.subr.mxu0 0.0
        %1288 = vmatpush1.msra.mxu0 0.0
        %1289 = vmatprep.subr.mxu0 0.0
        %1290 = vmatpush1.msra.mxu0 0.0
        %1291 = vmatprep.subr.mxu0 0.0
        %1292 = vmatpush1.msra.mxu0 0.0
        %1293 = vmatprep.subr.mxu0 0.0
        %1294 = vmatpush1.msra.mxu0 0.0
        %1295 = vmatprep.subr.mxu0 0.0
        %1296 = vmatpush1.msra.mxu0 0.0
        %1297 = vmatprep.subr.mxu0 0.0
        %1298 = vmatpush1.msra.mxu0 0.0
        %1299 = vmatprep.subr.mxu0 0.0
        %1300 = vmatpush1.msra.mxu0 0.0
        %1301 = vmatprep.subr.mxu0 0.0
        %1302 = vmatpush1.msra.mxu0 0.0
        %1303 = vmatprep.subr.mxu0 0.0
        %1304 = vmatpush1.msra.mxu0 0.0
        %1305 = vmatprep.subr.mxu0 0.0
        %1306 = vmatpush1.msra.mxu0 0.0
        %1307 = vmatprep.subr.mxu0 0.0
        %1308 = vmatpush1.msra.mxu0 0.0
        %1309 = vmatprep.subr.mxu0 0.0
        %1310 = vmatpush1.msra.mxu0 0.0
        %1311 = vmatprep.subr.mxu0 0.0
        %1312 = vmatpush1.msra.mxu0 0.0
        %1313 = vmatprep.subr.mxu0 0.0
        %1314 = vmatpush1.msra.mxu0 0.0
        %1315 = vmatprep.subr.mxu0 0.0
        %1316 = vmatpush1.msra.mxu0 0.0
        %1317 = vmatprep.subr.mxu0 0.0
        %1318 = vmatpush1.msra.mxu0 0.0
        %1319 = vmatprep.subr.mxu0 0.0
        %1320 = vmatpush1.msra.mxu0 0.0
        %1321 = vmatprep.subr.mxu0 0.0
        %1322 = vmatpush1.msra.mxu0 0.0
        %1323 = vmatprep.subr.mxu0 0.0
        %1324 = vmatpush1.msra.mxu0 0.0
        %1325 = vmatprep.subr.mxu0 0.0
        %1326 = vmatpush1.msra.mxu0 0.0
        %1327 = vmatprep.subr.mxu0 0.0
        %1328 = vmatpush1.msra.mxu0 0.0
        %1329 = vmatprep.subr.mxu0 0.0
        %1330 = vmatpush1.msra.mxu0 0.0
        %1331 = vmatprep.mubr.f32.mxu0 0.0
        %1332 = vmatmul.mubr.f32.gmra.mrb[0].mxu0 %v1265
        %v1333 = vpop.f32.mrb[0].mxu0
        %v1334 = vadd.f32 0.0, %v1333
        %v1335 = vpop.f32.mrb[0].mxu0
        %1336 = vdwg.mxu0
        %1337 = vrot.lane.b32.xlu0 %v919, 112
        %v1338 = vpop.permute.xlu0 %1337
        %1339 = vrot.lane.b32.xlu0 %v995, 112
        %v1340 = vpop.permute.xlu0 %1339
        %v1341 = vsel %vm998, %v1338, 0
        %v1343 = vsel %vm998, %v1340, 0
        %1345 = vmatprep.subr.mxu0 0.0
        %1346 = vmatpush1.xpose.msra.mxu0 %v1343
        %1347 = vmatprep.subr.mxu0 0.0
        %1348 = vmatpush1.xpose.msra.mxu0 0.0
        %1349 = vmatprep.subr.mxu0 0.0
        %1350 = vmatpush1.xpose.msra.mxu0 0.0
        %1351 = vmatprep.subr.mxu0 0.0
        %1352 = vmatpush1.xpose.msra.mxu0 0.0
        %1353 = vmatprep.subr.mxu0 0.0
        %1354 = vmatpush1.xpose.msra.mxu0 0.0
        %1355 = vmatprep.subr.mxu0 0.0
        %1356 = vmatpush1.xpose.msra.mxu0 0.0
        %1357 = vmatprep.subr.mxu0 0.0
        %1358 = vmatpush1.xpose.msra.mxu0 0.0
        %1359 = vmatprep.subr.mxu0 0.0
        %1360 = vmatpush1.xpose.msra.mxu0 0.0
        %1361 = vmatprep.subr.mxu0 0.0
        %1362 = vmatpush1.xpose.msra.mxu0 0.0
        %1363 = vmatprep.subr.mxu0 0.0
        %1364 = vmatpush1.xpose.msra.mxu0 0.0
        %1365 = vmatprep.subr.mxu0 0.0
        %1366 = vmatpush1.xpose.msra.mxu0 0.0
        %1367 = vmatprep.subr.mxu0 0.0
        %1368 = vmatpush1.xpose.msra.mxu0 0.0
        %1369 = vmatprep.subr.mxu0 0.0
        %1370 = vmatpush1.xpose.msra.mxu0 0.0
        %1371 = vmatprep.subr.mxu0 0.0
        %1372 = vmatpush1.xpose.msra.mxu0 0.0
        %1373 = vmatprep.subr.mxu0 0.0
        %1374 = vmatpush1.xpose.msra.mxu0 0.0
        %1375 = vmatprep.subr.mxu0 0.0
        %1376 = vmatpush1.xpose.msra.mxu0 0.0
        %1377 = vmatprep.subr.mxu0 0.0
        %1378 = vmatpush1.xpose.msra.mxu0 0.0
        %1379 = vmatprep.subr.mxu0 0.0
        %1380 = vmatpush1.xpose.msra.mxu0 0.0
        %1381 = vmatprep.subr.mxu0 0.0
        %1382 = vmatpush1.xpose.msra.mxu0 0.0
        %1383 = vmatprep.subr.mxu0 0.0
        %1384 = vmatpush1.xpose.msra.mxu0 0.0
        %1385 = vmatprep.subr.mxu0 0.0
        %1386 = vmatpush1.xpose.msra.mxu0 0.0
        %1387 = vmatprep.subr.mxu0 0.0
        %1388 = vmatpush1.xpose.msra.mxu0 0.0
        %1389 = vmatprep.subr.mxu0 0.0
        %1390 = vmatpush1.xpose.msra.mxu0 0.0
        %1391 = vmatprep.subr.mxu0 0.0
        %1392 = vmatpush1.xpose.msra.mxu0 0.0
        %1393 = vmatprep.subr.mxu0 0.0
        %1394 = vmatpush1.xpose.msra.mxu0 0.0
        %1395 = vmatprep.subr.mxu0 0.0
        %1396 = vmatpush1.xpose.msra.mxu0 0.0
        %1397 = vmatprep.subr.mxu0 0.0
        %1398 = vmatpush1.xpose.msra.mxu0 0.0
        %1399 = vmatprep.subr.mxu0 0.0
        %1400 = vmatpush1.xpose.msra.mxu0 0.0
        %1401 = vmatprep.subr.mxu0 0.0
        %1402 = vmatpush1.xpose.msra.mxu0 0.0
        %1403 = vmatprep.subr.mxu0 0.0
        %1404 = vmatpush1.xpose.msra.mxu0 0.0
        %1405 = vmatprep.subr.mxu0 0.0
        %1406 = vmatpush1.xpose.msra.mxu0 0.0
        %1407 = vmatprep.subr.mxu0 0.0
        %1408 = vmatpush1.xpose.msra.mxu0 0.0
        %1409 = vmatprep.mubr.f32.mxu0 0.0
        %1410 = vmatmul.mubr.f32.gmra.mrb[0].mxu0 %v1341
        %v1411 = vpop.f32.mrb[0].mxu0
        %v1412 = vadd.f32 0.0, %v1411
        %v1413 = vpop.f32.mrb[0].mxu0
        %1414 = vdwg.mxu0
        %v1415 = vmul.f32 %v1412, 0.35355338
        %v1416 = vadd.f32 %v1415, %v791
        %v1417 = vsel %vm998, %v1416, -inf
        %1418 = vmax.xlane.f32.xlu0 %v1417
        %v1419 = vpop.xlane.xlu0 %1418
        %v1420 = vsub.f32 %v1416, %v1419
        %v1421 = vmul.f32 %v1420, 1.442695
        %v1422 = vpow.pop %v1421
        %v1423 = vsel %vm998, %v1422, 0.0
        %1424 = vadd.xlane.f32.xlu0 %v1423
        %v1425 = vpop.xlane.xlu0 %1424
        %v1426 = vrcp.pop %v1425
        %v1427 = vmul.f32 %v1425, %v1426
        %v1428 = vsub.f32 2.0, %v1427
        %v1429 = vmul.f32 %v1426, %v1428
        %v1430 = vmul.f32 %v1422, %v1429
        %1431 = vrot.lane.b32.xlu0 %v995, 80
        %v1432 = vpop.permute.xlu0 %1431
        %v1435 = vsel %vm998, %v1430, 0
        %1437 = vmatprep.subr.mxu0 0.0
        %1438 = vmatpush1.msra.mxu0 %v1432
        %1439 = vmatprep.subr.mxu0 0.0
        %1440 = vmatpush1.msra.mxu0 0.0
        %1441 = vmatprep.subr.mxu0 0.0
        %1442 = vmatpush1.msra.mxu0 0.0
        %1443 = vmatprep.subr.mxu0 0.0
        %1444 = vmatpush1.msra.mxu0 0.0
        %1445 = vmatprep.subr.mxu0 0.0
        %1446 = vmatpush1.msra.mxu0 0.0
        %1447 = vmatprep.subr.mxu0 0.0
        %1448 = vmatpush1.msra.mxu0 0.0
        %1449 = vmatprep.subr.mxu0 0.0
        %1450 = vmatpush1.msra.mxu0 0.0
        %1451 = vmatprep.subr.mxu0 0.0
        %1452 = vmatpush1.msra.mxu0 0.0
        %1453 = vmatprep.subr.mxu0 0.0
        %1454 = vmatpush1.msra.mxu0 0.0
        %1455 = vmatprep.subr.mxu0 0.0
        %1456 = vmatpush1.msra.mxu0 0.0
        %1457 = vmatprep.subr.mxu0 0.0
        %1458 = vmatpush1.msra.mxu0 0.0
        %1459 = vmatprep.subr.mxu0 0.0
        %1460 = vmatpush1.msra.mxu0 0.0
        %1461 = vmatprep.subr.mxu0 0.0
        %1462 = vmatpush1.msra.mxu0 0.0
        %1463 = vmatprep.subr.mxu0 0.0
        %1464 = vmatpush1.msra.mxu0 0.0
        %1465 = vmatprep.subr.mxu0 0.0
        %1466 = vmatpush1.msra.mxu0 0.0
        %1467 = vmatprep.subr.mxu0 0.0
        %1468 = vmatpush1.msra.mxu0 0.0
        %1469 = vmatprep.subr.mxu0 0.0
        %1470 = vmatpush1.msra.mxu0 0.0
        %1471 = vmatprep.subr.mxu0 0.0
        %1472 = vmatpush1.msra.mxu0 0.0
        %1473 = vmatprep.subr.mxu0 0.0
        %1474 = vmatpush1.msra.mxu0 0.0
        %1475 = vmatprep.subr.mxu0 0.0
        %1476 = vmatpush1.msra.mxu0 0.0
        %1477 = vmatprep.subr.mxu0 0.0
        %1478 = vmatpush1.msra.mxu0 0.0
        %1479 = vmatprep.subr.mxu0 0.0
        %1480 = vmatpush1.msra.mxu0 0.0
        %1481 = vmatprep.subr.mxu0 0.0
        %1482 = vmatpush1.msra.mxu0 0.0
        %1483 = vmatprep.subr.mxu0 0.0
        %1484 = vmatpush1.msra.mxu0 0.0
        %1485 = vmatprep.subr.mxu0 0.0
        %1486 = vmatpush1.msra.mxu0 0.0
        %1487 = vmatprep.subr.mxu0 0.0
        %1488 = vmatpush1.msra.mxu0 0.0
        %1489 = vmatprep.subr.mxu0 0.0
        %1490 = vmatpush1.msra.mxu0 0.0
        %1491 = vmatprep.subr.mxu0 0.0
        %1492 = vmatpush1.msra.mxu0 0.0
        %1493 = vmatprep.subr.mxu0 0.0
        %1494 = vmatpush1.msra.mxu0 0.0
        %1495 = vmatprep.subr.mxu0 0.0
        %1496 = vmatpush1.msra.mxu0 0.0
        %1497 = vmatprep.subr.mxu0 0.0
        %1498 = vmatpush1.msra.mxu0 0.0
        %1499 = vmatprep.subr.mxu0 0.0
        %1500 = vmatpush1.msra.mxu0 0.0
        %1501 = vmatprep.mubr.f32.mxu0 0.0
        %1502 = vmatmul.mubr.f32.gmra.mrb[0].mxu0 %v1435
        %v1503 = vpop.f32.mrb[0].mxu0
        %v1504 = vadd.f32 0.0, %v1503
        %v1505 = vpop.f32.mrb[0].mxu0
        %1506 = vdwg.mxu0
        %1507 = vrot.lane.b32.xlu0 %v919, 104
        %v1508 = vpop.permute.xlu0 %1507
        %1509 = vrot.lane.b32.xlu0 %v995, 104
        %v1510 = vpop.permute.xlu0 %1509
        %v1511 = vsel %vm998, %v1508, 0
        %v1513 = vsel %vm998, %v1510, 0
        %1515 = vmatprep.subr.mxu0 0.0
        %1516 = vmatpush1.xpose.msra.mxu0 %v1513
        %1517 = vmatprep.subr.mxu0 0.0
        %1518 = vmatpush1.xpose.msra.mxu0 0.0
        %1519 = vmatprep.subr.mxu0 0.0
        %1520 = vmatpush1.xpose.msra.mxu0 0.0
        %1521 = vmatprep.subr.mxu0 0.0
        %1522 = vmatpush1.xpose.msra.mxu0 0.0
        %1523 = vmatprep.subr.mxu0 0.0
        %1524 = vmatpush1.xpose.msra.mxu0 0.0
        %1525 = vmatprep.subr.mxu0 0.0
        %1526 = vmatpush1.xpose.msra.mxu0 0.0
        %1527 = vmatprep.subr.mxu0 0.0
        %1528 = vmatpush1.xpose.msra.mxu0 0.0
        %1529 = vmatprep.subr.mxu0 0.0
        %1530 = vmatpush1.xpose.msra.mxu0 0.0
        %1531 = vmatprep.subr.mxu0 0.0
        %1532 = vmatpush1.xpose.msra.mxu0 0.0
        %1533 = vmatprep.subr.mxu0 0.0
        %1534 = vmatpush1.xpose.msra.mxu0 0.0
        %1535 = vmatprep.subr.mxu0 0.0
        %1536 = vmatpush1.xpose.msra.mxu0 0.0
        %1537 = vmatprep.subr.mxu0 0.0
        %1538 = vmatpush1.xpose.msra.mxu0 0.0
        %1539 = vmatprep.subr.mxu0 0.0
        %1540 = vmatpush1.xpose.msra.mxu0 0.0
        %1541 = vmatprep.subr.mxu0 0.0
        %1542 = vmatpush1.xpose.msra.mxu0 0.0
        %1543 = vmatprep.subr.mxu0 0.0
        %1544 = vmatpush1.xpose.msra.mxu0 0.0
        %1545 = vmatprep.subr.mxu0 0.0
        %1546 = vmatpush1.xpose.msra.mxu0 0.0
        %1547 = vmatprep.subr.mxu0 0.0
        %1548 = vmatpush1.xpose.msra.mxu0 0.0
        %1549 = vmatprep.subr.mxu0 0.0
        %1550 = vmatpush1.xpose.msra.mxu0 0.0
        %1551 = vmatprep.subr.mxu0 0.0
        %1552 = vmatpush1.xpose.msra.mxu0 0.0
        %1553 = vmatprep.subr.mxu0 0.0
        %1554 = vmatpush1.xpose.msra.mxu0 0.0
        %1555 = vmatprep.subr.mxu0 0.0
        %1556 = vmatpush1.xpose.msra.mxu0 0.0
        %1557 = vmatprep.subr.mxu0 0.0
        %1558 = vmatpush1.xpose.msra.mxu0 0.0
        %1559 = vmatprep.subr.mxu0 0.0
        %1560 = vmatpush1.xpose.msra.mxu0 0.0
        %1561 = vmatprep.subr.mxu0 0.0
        %1562 = vmatpush1.xpose.msra.mxu0 0.0
        %1563 = vmatprep.subr.mxu0 0.0
        %1564 = vmatpush1.xpose.msra.mxu0 0.0
        %1565 = vmatprep.subr.mxu0 0.0
        %1566 = vmatpush1.xpose.msra.mxu0 0.0
        %1567 = vmatprep.subr.mxu0 0.0
        %1568 = vmatpush1.xpose.msra.mxu0 0.0
        %1569 = vmatprep.subr.mxu0 0.0
        %1570 = vmatpush1.xpose.msra.mxu0 0.0
        %1571 = vmatprep.subr.mxu0 0.0
        %1572 = vmatpush1.xpose.msra.mxu0 0.0
        %1573 = vmatprep.subr.mxu0 0.0
        %1574 = vmatpush1.xpose.msra.mxu0 0.0
        %1575 = vmatprep.subr.mxu0 0.0
        %1576 = vmatpush1.xpose.msra.mxu0 0.0
        %1577 = vmatprep.subr.mxu0 0.0
        %1578 = vmatpush1.xpose.msra.mxu0 0.0
        %1579 = vmatprep.mubr.f32.mxu0 0.0
        %1580 = vmatmul.mubr.f32.gmra.mrb[0].mxu0 %v1511
        %v1581 = vpop.f32.mrb[0].mxu0
        %v1582 = vadd.f32 0.0, %v1581
        %v1583 = vpop.f32.mrb[0].mxu0
        %1584 = vdwg.mxu0
        %v1585 = vmul.f32 %v1582, 0.35355338
        %v1586 = vadd.f32 %v1585, %v791
        %v1587 = vsel %vm998, %v1586, -inf
        %1588 = vmax.xlane.f32.xlu0 %v1587
        %v1589 = vpop.xlane.xlu0 %1588
        %v1590 = vsub.f32 %v1586, %v1589
        %v1591 = vmul.f32 %v1590, 1.442695
        %v1592 = vpow.pop %v1591
        %v1593 = vsel %vm998, %v1592, 0.0
        %1594 = vadd.xlane.f32.xlu0 %v1593
        %v1595 = vpop.xlane.xlu0 %1594
        %v1596 = vrcp.pop %v1595
        %v1597 = vmul.f32 %v1595, %v1596
        %v1598 = vsub.f32 2.0, %v1597
        %v1599 = vmul.f32 %v1596, %v1598
        %v1600 = vmul.f32 %v1592, %v1599
        %1601 = vrot.lane.b32.xlu0 %v995, 72
        %v1602 = vpop.permute.xlu0 %1601
        %v1605 = vsel %vm998, %v1600, 0
        %1607 = vmatprep.subr.mxu0 0.0
        %1608 = vmatpush1.msra.mxu0 %v1602
        %1609 = vmatprep.subr.mxu0 0.0
        %1610 = vmatpush1.msra.mxu0 0.0
        %1611 = vmatprep.subr.mxu0 0.0
        %1612 = vmatpush1.msra.mxu0 0.0
        %1613 = vmatprep.subr.mxu0 0.0
        %1614 = vmatpush1.msra.mxu0 0.0
        %1615 = vmatprep.subr.mxu0 0.0
        %1616 = vmatpush1.msra.mxu0 0.0
        %1617 = vmatprep.subr.mxu0 0.0
        %1618 = vmatpush1.msra.mxu0 0.0
        %1619 = vmatprep.subr.mxu0 0.0
        %1620 = vmatpush1.msra.mxu0 0.0
        %1621 = vmatprep.subr.mxu0 0.0
        %1622 = vmatpush1.msra.mxu0 0.0
        %1623 = vmatprep.subr.mxu0 0.0
        %1624 = vmatpush1.msra.mxu0 0.0
        %1625 = vmatprep.subr.mxu0 0.0
        %1626 = vmatpush1.msra.mxu0 0.0
        %1627 = vmatprep.subr.mxu0 0.0
        %1628 = vmatpush1.msra.mxu0 0.0
        %1629 = vmatprep.subr.mxu0 0.0
        %1630 = vmatpush1.msra.mxu0 0.0
        %1631 = vmatprep.subr.mxu0 0.0
        %1632 = vmatpush1.msra.mxu0 0.0
        %1633 = vmatprep.subr.mxu0 0.0
        %1634 = vmatpush1.msra.mxu0 0.0
        %1635 = vmatprep.subr.mxu0 0.0
        %1636 = vmatpush1.msra.mxu0 0.0
        %1637 = vmatprep.subr.mxu0 0.0
        %1638 = vmatpush1.msra.mxu0 0.0
        %1639 = vmatprep.subr.mxu0 0.0
        %1640 = vmatpush1.msra.mxu0 0.0
        %1641 = vmatprep.subr.mxu0 0.0
        %1642 = vmatpush1.msra.mxu0 0.0
        %1643 = vmatprep.subr.mxu0 0.0
        %1644 = vmatpush1.msra.mxu0 0.0
        %1645 = vmatprep.subr.mxu0 0.0
        %1646 = vmatpush1.msra.mxu0 0.0
        %1647 = vmatprep.subr.mxu0 0.0
        %1648 = vmatpush1.msra.mxu0 0.0
        %1649 = vmatprep.subr.mxu0 0.0
        %1650 = vmatpush1.msra.mxu0 0.0
        %1651 = vmatprep.subr.mxu0 0.0
        %1652 = vmatpush1.msra.mxu0 0.0
        %1653 = vmatprep.subr.mxu0 0.0
        %1654 = vmatpush1.msra.mxu0 0.0
        %1655 = vmatprep.subr.mxu0 0.0
        %1656 = vmatpush1.msra.mxu0 0.0
        %1657 = vmatprep.subr.mxu0 0.0
        %1658 = vmatpush1.msra.mxu0 0.0
        %1659 = vmatprep.subr.mxu0 0.0
        %1660 = vmatpush1.msra.mxu0 0.0
        %1661 = vmatprep.subr.mxu0 0.0
        %1662 = vmatpush1.msra.mxu0 0.0
        %1663 = vmatprep.subr.mxu0 0.0
        %1664 = vmatpush1.msra.mxu0 0.0
        %1665 = vmatprep.subr.mxu0 0.0
        %1666 = vmatpush1.msra.mxu0 0.0
        %1667 = vmatprep.subr.mxu0 0.0
        %1668 = vmatpush1.msra.mxu0 0.0
        %1669 = vmatprep.subr.mxu0 0.0
        %1670 = vmatpush1.msra.mxu0 0.0
        %1671 = vmatprep.mubr.f32.mxu0 0.0
        %1672 = vmatmul.mubr.f32.gmra.mrb[0].mxu0 %v1605
        %v1673 = vpop.f32.mrb[0].mxu0
        %v1674 = vadd.f32 0.0, %v1673
        %v1675 = vpop.f32.mrb[0].mxu0
        %1676 = vdwg.mxu0
        %1678 = vrot.lane.b32.xlu0 %v1334, 8
        %v1679 = vpop.permute.xlu0 %1678
        %1682 = vrot.lane.b32.xlu0 %v1504, 16
        %v1683 = vpop.permute.xlu0 %1682
        %1686 = vrot.lane.b32.xlu0 %v1674, 24
        %v1687 = vpop.permute.xlu0 %1686
        %v1689 = vsel %vm998, %v1164, %v1679
        %vm1690 = vcmask 130048
        %v1691 = vsel %vm1690, %v1689, %v1683
        %vm1692 = vcmask 195584
        %v1693 = vsel %vm1692, %v1691, %v1687
        %v1695 = vlaneseq
        %v1696 = vshrl.u32 %v1695, 7
        %v1697 = vsub.s32 0, %v1696
        %v1698 = vrot.slane %v842, %v1697
        %v1701 = vsel %vm792, %v1693, 0
        %1703 = vmatprep.subr.mxu0 0.0
        %1704 = vmatpush1.msra.mxu0 %v838
        %1705 = vmatprep.subr.mxu0 0.0
        %1706 = vmatpush1.msra.mxu0 %v839
        %1707 = vmatprep.subr.mxu0 0.0
        %1708 = vmatpush1.msra.mxu0 %v840
        %1709 = vmatprep.subr.mxu0 0.0
        %1710 = vmatpush1.msra.mxu0 %v841
        %1711 = vmatprep.subr.mxu0 0.0
        %1712 = vmatpush1.msra.mxu0 0.0
        %1713 = vmatprep.subr.mxu0 0.0
        %1714 = vmatpush1.msra.mxu0 0.0
        %1715 = vmatprep.subr.mxu0 0.0
        %1716 = vmatpush1.msra.mxu0 0.0
        %1717 = vmatprep.subr.mxu0 0.0
        %1718 = vmatpush1.msra.mxu0 0.0
        %1719 = vmatprep.subr.mxu0 0.0
        %1720 = vmatpush1.msra.mxu0 0.0
        %1721 = vmatprep.subr.mxu0 0.0
        %1722 = vmatpush1.msra.mxu0 0.0
        %1723 = vmatprep.subr.mxu0 0.0
        %1724 = vmatpush1.msra.mxu0 0.0
        %1725 = vmatprep.subr.mxu0 0.0
        %1726 = vmatpush1.msra.mxu0 0.0
        %1727 = vmatprep.subr.mxu0 0.0
        %1728 = vmatpush1.msra.mxu0 0.0
        %1729 = vmatprep.subr.mxu0 0.0
        %1730 = vmatpush1.msra.mxu0 0.0
        %1731 = vmatprep.subr.mxu0 0.0
        %1732 = vmatpush1.msra.mxu0 0.0
        %1733 = vmatprep.subr.mxu0 0.0
        %1734 = vmatpush1.msra.mxu0 0.0
        %1735 = vmatprep.subr.mxu0 0.0
        %1736 = vmatpush1.msra.mxu0 0.0
        %1737 = vmatprep.subr.mxu0 0.0
        %1738 = vmatpush1.msra.mxu0 0.0
        %1739 = vmatprep.subr.mxu0 0.0
        %1740 = vmatpush1.msra.mxu0 0.0
        %1741 = vmatprep.subr.mxu0 0.0
        %1742 = vmatpush1.msra.mxu0 0.0
        %1743 = vmatprep.subr.mxu0 0.0
        %1744 = vmatpush1.msra.mxu0 0.0
        %1745 = vmatprep.subr.mxu0 0.0
        %1746 = vmatpush1.msra.mxu0 0.0
        %1747 = vmatprep.subr.mxu0 0.0
        %1748 = vmatpush1.msra.mxu0 0.0
        %1749 = vmatprep.subr.mxu0 0.0
        %1750 = vmatpush1.msra.mxu0 0.0
        %1751 = vmatprep.subr.mxu0 0.0
        %1752 = vmatpush1.msra.mxu0 0.0
        %1753 = vmatprep.subr.mxu0 0.0
        %1754 = vmatpush1.msra.mxu0 0.0
        %1755 = vmatprep.subr.mxu0 0.0
        %1756 = vmatpush1.msra.mxu0 0.0
        %1757 = vmatprep.subr.mxu0 0.0
        %1758 = vmatpush1.msra.mxu0 0.0
        %1759 = vmatprep.subr.mxu0 0.0
        %1760 = vmatpush1.msra.mxu0 0.0
        %1761 = vmatprep.subr.mxu0 0.0
        %1762 = vmatpush1.msra.mxu0 0.0
        %1763 = vmatprep.subr.mxu0 0.0
        %1764 = vmatpush1.msra.mxu0 0.0
        %1765 = vmatprep.subr.mxu0 0.0
        %1766 = vmatpush1.msra.mxu0 0.0
        %1767 = vmatprep.mubr.f32.mxu0 0.0
        %1768 = vmatmul.mubr.f32.gmra.mrb[0].mxu0 %v1701
        %v1769 = vpop.f32.mrb[0].mxu0
        %v1770 = vadd.f32 %v1698, %v1769
        %v1771 = vpop.f32.mrb[0].mxu0
        %1772 = vdwg.mxu0
        %v1773 = vadd.f32 %v788, %v1770
        %v1774 = vsel %vm792, %v1773, 0.0
        %1775 = vadd.xlane.f32.xlu0 %v1774
        %v1776 = vpop.xlane.xlu0 %1775
        %v1777 = vmul.f32 %v1776, %v796
        %v1778 = vsub.f32 %v1773, %v1777
        %v1779 = vmul.f32 %v1778, %v1778
        %v1780 = vsel %vm792, %v1779, 0.0
        %1781 = vadd.xlane.f32.xlu0 %v1780
        %v1782 = vpop.xlane.xlu0 %1781
        %v1783 = vmul.f32 %v1782, 0.032258064
        %v1784 = vrsqrt.pop %v1783
        %v1785 = vmul.f32 %v1783, %v1784
        %vm1786 = vcmp.eq.f32.partialorder %v1783, inf
        %v1787 = vsel %vm1786, %v1783, %v1785
        %vm1788 = vcmp.eq.f32.partialorder %v1783, 0.0
        %v1789 = vand.u32 %v1783, 2147483648
        %v1790 = vsel %vm1788, %v1789, %v1787
        %v1791 = vadd.f32 %v1790, 1e-06
        %v1792 = vrcp.pop %v1791
        %v1793 = vmul.f32 %v1791, %v1792
        %v1794 = vsub.f32 2.0, %v1793
        %v1795 = vmul.f32 %v1792, %v1794
        %v1796 = vmul.f32 %v1778, %v1795
        %v1797 = vrot.slane %v790, 1
        %s1798 = vtos %v1797
        %v1799 = vstv %s1798
        %v1801 = vmul.f32 %v1796, %v1799
        %1802 = vrot.lane.b32.xlu0 %v1797, 127
        %v1803 = vpop.permute.xlu0 %1802
        %s1804 = vtos %v1803
        %v1805 = vstv %s1804
        %v1807 = vadd.f32 %v1801, %v1805
        %v1808 = vld [vmem:[#allocation10] sm:$0xff]
        %v1809 = vld [vmem:[#allocation10 + $0x8] sm:$0xff]
        %v1810 = vld [vmem:[#allocation10 + $0x10] sm:$0xff]
        %v1811 = vld [vmem:[#allocation10 + $0x18] sm:$0xff]
        %v1812 = vld [vmem:[#allocation11] sm:$0x1]
        %v1813 = vld [vmem:[#allocation13] sm:$0xff]
        %v1814 = vld [vmem:[#allocation13 + $0x8] sm:$0xff]
        %v1815 = vld [vmem:[#allocation13 + $0x10] sm:$0xff]
        %v1816 = vld [vmem:[#allocation13 + $0x18] sm:$0xff]
        %v1817 = vld [vmem:[#allocation14] sm:$0x1]
        %v1818 = vld [vmem:[#allocation16] sm:$0xff]
        %v1819 = vld [vmem:[#allocation16 + $0x8] sm:$0xff]
        %v1820 = vld [vmem:[#allocation16 + $0x10] sm:$0xff]
        %v1821 = vld [vmem:[#allocation16 + $0x18] sm:$0xff]
        %v1822 = vld [vmem:[#allocation17] sm:$0x1]
        %v1824 = vlaneseq
        %v1825 = vshrl.u32 %v1824, 7
        %v1826 = vsub.s32 0, %v1825
        %v1827 = vrot.slane %v1812, %v1826
        %v1830 = vsel %vm792, %v1807, 0
        %1832 = vmatprep.subr.mxu0 0.0
        %1833 = vmatpush1.msra.mxu0 %v1808
        %1834 = vmatprep.subr.mxu0 0.0
        %1835 = vmatpush1.msra.mxu0 %v1809
        %1836 = vmatprep.subr.mxu0 0.0
        %1837 = vmatpush1.msra.mxu0 %v1810
        %1838 = vmatprep.subr.mxu0 0.0
        %1839 = vmatpush1.msra.mxu0 %v1811
        %1840 = vmatprep.subr.mxu0 0.0
        %1841 = vmatpush1.msra.mxu0 0.0
        %1842 = vmatprep.subr.mxu0 0.0
        %1843 = vmatpush1.msra.mxu0 0.0
        %1844 = vmatprep.subr.mxu0 0.0
        %1845 = vmatpush1.msra.mxu0 0.0
        %1846 = vmatprep.subr.mxu0 0.0
        %1847 = vmatpush1.msra.mxu0 0.0
        %1848 = vmatprep.subr.mxu0 0.0
        %1849 = vmatpush1.msra.mxu0 0.0
        %1850 = vmatprep.subr.mxu0 0.0
        %1851 = vmatpush1.msra.mxu0 0.0
        %1852 = vmatprep.subr.mxu0 0.0
        %1853 = vmatpush1.msra.mxu0 0.0
        %1854 = vmatprep.subr.mxu0 0.0
        %1855 = vmatpush1.msra.mxu0 0.0
        %1856 = vmatprep.subr.mxu0 0.0
        %1857 = vmatpush1.msra.mxu0 0.0
        %1858 = vmatprep.subr.mxu0 0.0
        %1859 = vmatpush1.msra.mxu0 0.0
        %1860 = vmatprep.subr.mxu0 0.0
        %1861 = vmatpush1.msra.mxu0 0.0
        %1862 = vmatprep.subr.mxu0 0.0
        %1863 = vmatpush1.msra.mxu0 0.0
        %1864 = vmatprep.subr.mxu0 0.0
        %1865 = vmatpush1.msra.mxu0 0.0
        %1866 = vmatprep.subr.mxu0 0.0
        %1867 = vmatpush1.msra.mxu0 0.0
        %1868 = vmatprep.subr.mxu0 0.0
        %1869 = vmatpush1.msra.mxu0 0.0
        %1870 = vmatprep.subr.mxu0 0.0
        %1871 = vmatpush1.msra.mxu0 0.0
        %1872 = vmatprep.subr.mxu0 0.0
        %1873 = vmatpush1.msra.mxu0 0.0
        %1874 = vmatprep.subr.mxu0 0.0
        %1875 = vmatpush1.msra.mxu0 0.0
        %1876 = vmatprep.subr.mxu0 0.0
        %1877 = vmatpush1.msra.mxu0 0.0
        %1878 = vmatprep.subr.mxu0 0.0
        %1879 = vmatpush1.msra.mxu0 0.0
        %1880 = vmatprep.subr.mxu0 0.0
        %1881 = vmatpush1.msra.mxu0 0.0
        %1882 = vmatprep.subr.mxu0 0.0
        %1883 = vmatpush1.msra.mxu0 0.0
        %1884 = vmatprep.subr.mxu0 0.0
        %1885 = vmatpush1.msra.mxu0 0.0
        %1886 = vmatprep.subr.mxu0 0.0
        %1887 = vmatpush1.msra.mxu0 0.0
        %1888 = vmatprep.subr.mxu0 0.0
        %1889 = vmatpush1.msra.mxu0 0.0
        %1890 = vmatprep.subr.mxu0 0.0
        %1891 = vmatpush1.msra.mxu0 0.0
        %1892 = vmatprep.subr.mxu0 0.0
        %1893 = vmatpush1.msra.mxu0 0.0
        %1894 = vmatprep.subr.mxu0 0.0
        %1895 = vmatpush1.msra.mxu0 0.0
        %1896 = vmatprep.mubr.f32.mxu0 0.0
        %1897 = vmatmul.mubr.f32.gmra.mrb[0].mxu0 %v1830
        %v1898 = vpop.f32.mrb[0].mxu0
        %v1899 = vadd.f32 %v1827, %v1898
        %v1900 = vpop.f32.mrb[0].mxu0
        %1901 = vdwg.mxu0
        %v1903 = vlaneseq
        %v1904 = vshrl.u32 %v1903, 7
        %v1905 = vsub.s32 0, %v1904
        %v1906 = vrot.slane %v1817, %v1905
        %v1909 = vsel %vm792, %v789, 0
        %1911 = vmatprep.subr.mxu0 0.0
        %1912 = vmatpush1.msra.mxu0 %v1813
        %1913 = vmatprep.subr.mxu0 0.0
        %1914 = vmatpush1.msra.mxu0 %v1814
        %1915 = vmatprep.subr.mxu0 0.0
        %1916 = vmatpush1.msra.mxu0 %v1815
        %1917 = vmatprep.subr.mxu0 0.0
        %1918 = vmatpush1.msra.mxu0 %v1816
        %1919 = vmatprep.subr.mxu0 0.0
        %1920 = vmatpush1.msra.mxu0 0.0
        %1921 = vmatprep.subr.mxu0 0.0
        %1922 = vmatpush1.msra.mxu0 0.0
        %1923 = vmatprep.subr.mxu0 0.0
        %1924 = vmatpush1.msra.mxu0 0.0
        %1925 = vmatprep.subr.mxu0 0.0
        %1926 = vmatpush1.msra.mxu0 0.0
        %1927 = vmatprep.subr.mxu0 0.0
        %1928 = vmatpush1.msra.mxu0 0.0
        %1929 = vmatprep.subr.mxu0 0.0
        %1930 = vmatpush1.msra.mxu0 0.0
        %1931 = vmatprep.subr.mxu0 0.0
        %1932 = vmatpush1.msra.mxu0 0.0
        %1933 = vmatprep.subr.mxu0 0.0
        %1934 = vmatpush1.msra.mxu0 0.0
        %1935 = vmatprep.subr.mxu0 0.0
        %1936 = vmatpush1.msra.mxu0 0.0
        %1937 = vmatprep.subr.mxu0 0.0
        %1938 = vmatpush1.msra.mxu0 0.0
        %1939 = vmatprep.subr.mxu0 0.0
        %1940 = vmatpush1.msra.mxu0 0.0
        %1941 = vmatprep.subr.mxu0 0.0
        %1942 = vmatpush1.msra.mxu0 0.0
        %1943 = vmatprep.subr.mxu0 0.0
        %1944 = vmatpush1.msra.mxu0 0.0
        %1945 = vmatprep.subr.mxu0 0.0
        %1946 = vmatpush1.msra.mxu0 0.0
        %1947 = vmatprep.subr.mxu0 0.0
        %1948 = vmatpush1.msra.mxu0 0.0
        %1949 = vmatprep.subr.mxu0 0.0
        %1950 = vmatpush1.msra.mxu0 0.0
        %1951 = vmatprep.subr.mxu0 0.0
        %1952 = vmatpush1.msra.mxu0 0.0
        %1953 = vmatprep.subr.mxu0 0.0
        %1954 = vmatpush1.msra.mxu0 0.0
        %1955 = vmatprep.subr.mxu0 0.0
        %1956 = vmatpush1.msra.mxu0 0.0
        %1957 = vmatprep.subr.mxu0 0.0
        %1958 = vmatpush1.msra.mxu0 0.0
        %1959 = vmatprep.subr.mxu0 0.0
        %1960 = vmatpush1.msra.mxu0 0.0
        %1961 = vmatprep.subr.mxu0 0.0
        %1962 = vmatpush1.msra.mxu0 0.0
        %1963 = vmatprep.subr.mxu0 0.0
        %1964 = vmatpush1.msra.mxu0 0.0
        %1965 = vmatprep.subr.mxu0 0.0
        %1966 = vmatpush1.msra.mxu0 0.0
        %1967 = vmatprep.subr.mxu0 0.0
        %1968 = vmatpush1.msra.mxu0 0.0
        %1969 = vmatprep.subr.mxu0 0.0
        %1970 = vmatpush1.msra.mxu0 0.0
        %1971 = vmatprep.subr.mxu0 0.0
        %1972 = vmatpush1.msra.mxu0 0.0
        %1973 = vmatprep.subr.mxu0 0.0
        %1974 = vmatpush1.msra.mxu0 0.0
        %1975 = vmatprep.mubr.f32.mxu0 0.0
        %1976 = vmatmul.mubr.f32.gmra.mrb[0].mxu0 %v1909
        %v1977 = vpop.f32.mrb[0].mxu0
        %v1978 = vadd.f32 %v1906, %v1977
        %v1979 = vpop.f32.mrb[0].mxu0
        %1980 = vdwg.mxu0
        %v1982 = vsel %vm998, %v1899, 0
        %v1985 = vsel %vm998, %v1978, 0
        %1987 = vmatprep.subr.mxu0 0.0
        %1988 = vmatpush1.xpose.msra.mxu0 %v1985
        %1989 = vmatprep.subr.mxu0 0.0
        %1990 = vmatpush1.xpose.msra.mxu0 0.0
        %1991 = vmatprep.subr.mxu0 0.0
        %1992 = vmatpush1.xpose.msra.mxu0 0.0
        %1993 = vmatprep.subr.mxu0 0.0
        %1994 = vmatpush1.xpose.msra.mxu0 0.0
        %1995 = vmatprep.subr.mxu0 0.0
        %1996 = vmatpush1.xpose.msra.mxu0 0.0
        %1997 = vmatprep.subr.mxu0 0.0
        %1998 = vmatpush1.xpose.msra.mxu0 0.0
        %1999 = vmatprep.subr.mxu0 0.0
        %2000 = vmatpush1.xpose.msra.mxu0 0.0
        %2001 = vmatprep.subr.mxu0 0.0
        %2002 = vmatpush1.xpose.msra.mxu0 0.0
        %2003 = vmatprep.subr.mxu0 0.0
        %2004 = vmatpush1.xpose.msra.mxu0 0.0
        %2005 = vmatprep.subr.mxu0 0.0
        %2006 = vmatpush1.xpose.msra.mxu0 0.0
        %2007 = vmatprep.subr.mxu0 0.0
        %2008 = vmatpush1.xpose.msra.mxu0 0.0
        %2009 = vmatprep.subr.mxu0 0.0
        %2010 = vmatpush1.xpose.msra.mxu0 0.0
        %2011 = vmatprep.subr.mxu0 0.0
        %2012 = vmatpush1.xpose.msra.mxu0 0.0
        %2013 = vmatprep.subr.mxu0 0.0
        %2014 = vmatpush1.xpose.msra.mxu0 0.0
        %2015 = vmatprep.subr.mxu0 0.0
        %2016 = vmatpush1.xpose.msra.mxu0 0.0
        %2017 = vmatprep.subr.mxu0 0.0
        %2018 = vmatpush1.xpose.msra.mxu0 0.0
        %2019 = vmatprep.subr.mxu0 0.0
        %2020 = vmatpush1.xpose.msra.mxu0 0.0
        %2021 = vmatprep.subr.mxu0 0.0
        %2022 = vmatpush1.xpose.msra.mxu0 0.0
        %2023 = vmatprep.subr.mxu0 0.0
        %2024 = vmatpush1.xpose.msra.mxu0 0.0
        %2025 = vmatprep.subr.mxu0 0.0
        %2026 = vmatpush1.xpose.msra.mxu0 0.0
        %2027 = vmatprep.subr.mxu0 0.0
        %2028 = vmatpush1.xpose.msra.mxu0 0.0
        %2029 = vmatprep.subr.mxu0 0.0
        %2030 = vmatpush1.xpose.msra.mxu0 0.0
        %2031 = vmatprep.subr.mxu0 0.0
        %2032 = vmatpush1.xpose.msra.mxu0 0.0
        %2033 = vmatprep.subr.mxu0 0.0
        %2034 = vmatpush1.xpose.msra.mxu0 0.0
        %2035 = vmatprep.subr.mxu0 0.0
        %2036 = vmatpush1.xpose.msra.mxu0 0.0
        %2037 = vmatprep.subr.mxu0 0.0
        %2038 = vmatpush1.xpose.msra.mxu0 0.0
        %2039 = vmatprep.subr.mxu0 0.0
        %2040 = vmatpush1.xpose.msra.mxu0 0.0
        %2041 = vmatprep.subr.mxu0 0.0
        %2042 = vmatpush1.xpose.msra.mxu0 0.0
        %2043 = vmatprep.subr.mxu0 0.0
        %2044 = vmatpush1.xpose.msra.mxu0 0.0
        %2045 = vmatprep.subr.mxu0 0.0
        %2046 = vmatpush1.xpose.msra.mxu0 0.0
        %2047 = vmatprep.subr.mxu0 0.0
        %2048 = vmatpush1.xpose.msra.mxu0 0.0
        %2049 = vmatprep.subr.mxu0 0.0
        %2050 = vmatpush1.xpose.msra.mxu0 0.0
        %2051 = vmatprep.mubr.f32.mxu0 0.0
        %2052 = vmatmul.mubr.f32.gmra.mrb[0].mxu0 %v1982
        %v2053 = vpop.f32.mrb[0].mxu0
        %v2054 = vadd.f32 0.0, %v2053
        %v2055 = vpop.f32.mrb[0].mxu0
        %2056 = vdwg.mxu0
        %v2057 = vmul.f32 %v2054, 0.35355338
        %v2058 = vsel %vm998, %v2057, -inf
        %2059 = vmax.xlane.f32.xlu0 %v2058
        %v2060 = vpop.xlane.xlu0 %2059
        %v2061 = vsub.f32 %v2057, %v2060
        %v2062 = vmul.f32 %v2061, 1.442695
        %v2063 = vpow.pop %v2062
        %v2064 = vsel %vm998, %v2063, 0.0
        %2065 = vadd.xlane.f32.xlu0 %v2064
        %v2066 = vpop.xlane.xlu0 %2065
        %v2067 = vrcp.pop %v2066
        %v2068 = vmul.f32 %v2066, %v2067
        %v2069 = vsub.f32 2.0, %v2068
        %v2070 = vmul.f32 %v2067, %v2069
        %v2071 = vmul.f32 %v2063, %v2070
        %2072 = vrot.lane.b32.xlu0 %v1978, 96
        %v2073 = vpop.permute.xlu0 %2072
        %v2076 = vsel %vm998, %v2071, 0
        %2078 = vmatprep.subr.mxu0 0.0
        %2079 = vmatpush1.msra.mxu0 %v2073
        %2080 = vmatprep.subr.mxu0 0.0
        %2081 = vmatpush1.msra.mxu0 0.0
        %2082 = vmatprep.subr.mxu0 0.0
        %2083 = vmatpush1.msra.mxu0 0.0
        %2084 = vmatprep.subr.mxu0 0.0
        %2085 = vmatpush1.msra.mxu0 0.0
        %2086 = vmatprep.subr.mxu0 0.0
        %2087 = vmatpush1.msra.mxu0 0.0
        %2088 = vmatprep.subr.mxu0 0.0
        %2089 = vmatpush1.msra.mxu0 0.0
        %2090 = vmatprep.subr.mxu0 0.0
        %2091 = vmatpush1.msra.mxu0 0.0
        %2092 = vmatprep.subr.mxu0 0.0
        %2093 = vmatpush1.msra.mxu0 0.0
        %2094 = vmatprep.subr.mxu0 0.0
        %2095 = vmatpush1.msra.mxu0 0.0
        %2096 = vmatprep.subr.mxu0 0.0
        %2097 = vmatpush1.msra.mxu0 0.0
        %2098 = vmatprep.subr.mxu0 0.0
        %2099 = vmatpush1.msra.mxu0 0.0
        %2100 = vmatprep.subr.mxu0 0.0
        %2101 = vmatpush1.msra.mxu0 0.0
        %2102 = vmatprep.subr.mxu0 0.0
        %2103 = vmatpush1.msra.mxu0 0.0
        %2104 = vmatprep.subr.mxu0 0.0
        %2105 = vmatpush1.msra.mxu0 0.0
        %2106 = vmatprep.subr.mxu0 0.0
        %2107 = vmatpush1.msra.mxu0 0.0
        %2108 = vmatprep.subr.mxu0 0.0
        %2109 = vmatpush1.msra.mxu0 0.0
        %2110 = vmatprep.subr.mxu0 0.0
        %2111 = vmatpush1.msra.mxu0 0.0
        %2112 = vmatprep.subr.mxu0 0.0
        %2113 = vmatpush1.msra.mxu0 0.0
        %2114 = vmatprep.subr.mxu0 0.0
        %2115 = vmatpush1.msra.mxu0 0.0
        %2116 = vmatprep.subr.mxu0 0.0
        %2117 = vmatpush1.msra.mxu0 0.0
        %2118 = vmatprep.subr.mxu0 0.0
        %2119 = vmatpush1.msra.mxu0 0.0
        %2120 = vmatprep.subr.mxu0 0.0
        %2121 = vmatpush1.msra.mxu0 0.0
        %2122 = vmatprep.subr.mxu0 0.0
        %2123 = vmatpush1.msra.mxu0 0.0
        %2124 = vmatprep.subr.mxu0 0.0
        %2125 = vmatpush1.msra.mxu0 0.0
        %2126 = vmatprep.subr.mxu0 0.0
        %2127 = vmatpush1.msra.mxu0 0.0
        %2128 = vmatprep.subr.mxu0 0.0
        %2129 = vmatpush1.msra.mxu0 0.0
        %2130 = vmatprep.subr.mxu0 0.0
        %2131 = vmatpush1.msra.mxu0 0.0
        %2132 = vmatprep.subr.mxu0 0.0
        %2133 = vmatpush1.msra.mxu0 0.0
        %2134 = vmatprep.subr.mxu0 0.0
        %2135 = vmatpush1.msra.mxu0 0.0
        %2136 = vmatprep.subr.mxu0 0.0
        %2137 = vmatpush1.msra.mxu0 0.0
        %2138 = vmatprep.subr.mxu0 0.0
        %2139 = vmatpush1.msra.mxu0 0.0
        %2140 = vmatprep.subr.mxu0 0.0
        %2141 = vmatpush1.msra.mxu0 0.0
        %2142 = vmatprep.mubr.f32.mxu0 0.0
        %2143 = vmatmul.mubr.f32.gmra.mrb[0].mxu0 %v2076
        %v2144 = vpop.f32.mrb[0].mxu0
        %v2145 = vadd.f32 0.0, %v2144
        %v2146 = vpop.f32.mrb[0].mxu0
        %2147 = vdwg.mxu0
        %2148 = vrot.lane.b32.xlu0 %v1899, 120
        %v2149 = vpop.permute.xlu0 %2148
        %2150 = vrot.lane.b32.xlu0 %v1978, 120
        %v2151 = vpop.permute.xlu0 %2150
        %v2152 = vsel %vm998, %v2149, 0
        %v2154 = vsel %vm998, %v2151, 0
        %2156 = vmatprep.subr.mxu0 0.0
        %2157 = vmatpush1.xpose.msra.mxu0 %v2154
        %2158 = vmatprep.subr.mxu0 0.0
        %2159 = vmatpush1.xpose.msra.mxu0 0.0
        %2160 = vmatprep.subr.mxu0 0.0
        %2161 = vmatpush1.xpose.msra.mxu0 0.0
        %2162 = vmatprep.subr.mxu0 0.0
        %2163 = vmatpush1.xpose.msra.mxu0 0.0
        %2164 = vmatprep.subr.mxu0 0.0
        %2165 = vmatpush1.xpose.msra.mxu0 0.0
        %2166 = vmatprep.subr.mxu0 0.0
        %2167 = vmatpush1.xpose.msra.mxu0 0.0
        %2168 = vmatprep.subr.mxu0 0.0
        %2169 = vmatpush1.xpose.msra.mxu0 0.0
        %2170 = vmatprep.subr.mxu0 0.0
        %2171 = vmatpush1.xpose.msra.mxu0 0.0
        %2172 = vmatprep.subr.mxu0 0.0
        %2173 = vmatpush1.xpose.msra.mxu0 0.0
        %2174 = vmatprep.subr.mxu0 0.0
        %2175 = vmatpush1.xpose.msra.mxu0 0.0
        %2176 = vmatprep.subr.mxu0 0.0
        %2177 = vmatpush1.xpose.msra.mxu0 0.0
        %2178 = vmatprep.subr.mxu0 0.0
        %2179 = vmatpush1.xpose.msra.mxu0 0.0
        %2180 = vmatprep.subr.mxu0 0.0
        %2181 = vmatpush1.xpose.msra.mxu0 0.0
        %2182 = vmatprep.subr.mxu0 0.0
        %2183 = vmatpush1.xpose.msra.mxu0 0.0
        %2184 = vmatprep.subr.mxu0 0.0
        %2185 = vmatpush1.xpose.msra.mxu0 0.0
        %2186 = vmatprep.subr.mxu0 0.0
        %2187 = vmatpush1.xpose.msra.mxu0 0.0
        %2188 = vmatprep.subr.mxu0 0.0
        %2189 = vmatpush1.xpose.msra.mxu0 0.0
        %2190 = vmatprep.subr.mxu0 0.0
        %2191 = vmatpush1.xpose.msra.mxu0 0.0
        %2192 = vmatprep.subr.mxu0 0.0
        %2193 = vmatpush1.xpose.msra.mxu0 0.0
        %2194 = vmatprep.subr.mxu0 0.0
        %2195 = vmatpush1.xpose.msra.mxu0 0.0
        %2196 = vmatprep.subr.mxu0 0.0
        %2197 = vmatpush1.xpose.msra.mxu0 0.0
        %2198 = vmatprep.subr.mxu0 0.0
        %2199 = vmatpush1.xpose.msra.mxu0 0.0
        %2200 = vmatprep.subr.mxu0 0.0
        %2201 = vmatpush1.xpose.msra.mxu0 0.0
        %2202 = vmatprep.subr.mxu0 0.0
        %2203 = vmatpush1.xpose.msra.mxu0 0.0
        %2204 = vmatprep.subr.mxu0 0.0
        %2205 = vmatpush1.xpose.msra.mxu0 0.0
        %2206 = vmatprep.subr.mxu0 0.0
        %2207 = vmatpush1.xpose.msra.mxu0 0.0
        %2208 = vmatprep.subr.mxu0 0.0
        %2209 = vmatpush1.xpose.msra.mxu0 0.0
        %2210 = vmatprep.subr.mxu0 0.0
        %2211 = vmatpush1.xpose.msra.mxu0 0.0
        %2212 = vmatprep.subr.mxu0 0.0
        %2213 = vmatpush1.xpose.msra.mxu0 0.0
        %2214 = vmatprep.subr.mxu0 0.0
        %2215 = vmatpush1.xpose.msra.mxu0 0.0
        %2216 = vmatprep.subr.mxu0 0.0
        %2217 = vmatpush1.xpose.msra.mxu0 0.0
        %2218 = vmatprep.subr.mxu0 0.0
        %2219 = vmatpush1.xpose.msra.mxu0 0.0
        %2220 = vmatprep.mubr.f32.mxu0 0.0
        %2221 = vmatmul.mubr.f32.gmra.mrb[0].mxu0 %v2152
        %v2222 = vpop.f32.mrb[0].mxu0
        %v2223 = vadd.f32 0.0, %v2222
        %v2224 = vpop.f32.mrb[0].mxu0
        %2225 = vdwg.mxu0
        %v2226 = vmul.f32 %v2223, 0.35355338
        %v2227 = vsel %vm998, %v2226, -inf
        %2228 = vmax.xlane.f32.xlu0 %v2227
        %v2229 = vpop.xlane.xlu0 %2228
        %v2230 = vsub.f32 %v2226, %v2229
        %v2231 = vmul.f32 %v2230, 1.442695
        %v2232 = vpow.pop %v2231
        %v2233 = vsel %vm998, %v2232, 0.0
        %2234 = vadd.xlane.f32.xlu0 %v2233
        %v2235 = vpop.xlane.xlu0 %2234
        %v2236 = vrcp.pop %v2235
        %v2237 = vmul.f32 %v2235, %v2236
        %v2238 = vsub.f32 2.0, %v2237
        %v2239 = vmul.f32 %v2236, %v2238
        %v2240 = vmul.f32 %v2232, %v2239
        %2241 = vrot.lane.b32.xlu0 %v1978, 88
        %v2242 = vpop.permute.xlu0 %2241
        %v2245 = vsel %vm998, %v2240, 0
        %2247 = vmatprep.subr.mxu0 0.0
        %2248 = vmatpush1.msra.mxu0 %v2242
        %2249 = vmatprep.subr.mxu0 0.0
        %2250 = vmatpush1.msra.mxu0 0.0
        %2251 = vmatprep.subr.mxu0 0.0
        %2252 = vmatpush1.msra.mxu0 0.0
        %2253 = vmatprep.subr.mxu0 0.0
        %2254 = vmatpush1.msra.mxu0 0.0
        %2255 = vmatprep.subr.mxu0 0.0
        %2256 = vmatpush1.msra.mxu0 0.0
        %2257 = vmatprep.subr.mxu0 0.0
        %2258 = vmatpush1.msra.mxu0 0.0
        %2259 = vmatprep.subr.mxu0 0.0
        %2260 = vmatpush1.msra.mxu0 0.0
        %2261 = vmatprep.subr.mxu0 0.0
        %2262 = vmatpush1.msra.mxu0 0.0
        %2263 = vmatprep.subr.mxu0 0.0
        %2264 = vmatpush1.msra.mxu0 0.0
        %2265 = vmatprep.subr.mxu0 0.0
        %2266 = vmatpush1.msra.mxu0 0.0
        %2267 = vmatprep.subr.mxu0 0.0
        %2268 = vmatpush1.msra.mxu0 0.0
        %2269 = vmatprep.subr.mxu0 0.0
        %2270 = vmatpush1.msra.mxu0 0.0
        %2271 = vmatprep.subr.mxu0 0.0
        %2272 = vmatpush1.msra.mxu0 0.0
        %2273 = vmatprep.subr.mxu0 0.0
        %2274 = vmatpush1.msra.mxu0 0.0
        %2275 = vmatprep.subr.mxu0 0.0
        %2276 = vmatpush1.msra.mxu0 0.0
        %2277 = vmatprep.subr.mxu0 0.0
        %2278 = vmatpush1.msra.mxu0 0.0
        %2279 = vmatprep.subr.mxu0 0.0
        %2280 = vmatpush1.msra.mxu0 0.0
        %2281 = vmatprep.subr.mxu0 0.0
        %2282 = vmatpush1.msra.mxu0 0.0
        %2283 = vmatprep.subr.mxu0 0.0
        %2284 = vmatpush1.msra.mxu0 0.0
        %2285 = vmatprep.subr.mxu0 0.0
        %2286 = vmatpush1.msra.mxu0 0.0
        %2287 = vmatprep.subr.mxu0 0.0
        %2288 = vmatpush1.msra.mxu0 0.0
        %2289 = vmatprep.subr.mxu0 0.0
        %2290 = vmatpush1.msra.mxu0 0.0
        %2291 = vmatprep.subr.mxu0 0.0
        %2292 = vmatpush1.msra.mxu0 0.0
        %2293 = vmatprep.subr.mxu0 0.0
        %2294 = vmatpush1.msra.mxu0 0.0
        %2295 = vmatprep.subr.mxu0 0.0
        %2296 = vmatpush1.msra.mxu0 0.0
        %2297 = vmatprep.subr.mxu0 0.0
        %2298 = vmatpush1.msra.mxu0 0.0
        %2299 = vmatprep.subr.mxu0 0.0
        %2300 = vmatpush1.msra.mxu0 0.0
        %2301 = vmatprep.subr.mxu0 0.0
        %2302 = vmatpush1.msra.mxu0 0.0
        %2303 = vmatprep.subr.mxu0 0.0
        %2304 = vmatpush1.msra.mxu0 0.0
        %2305 = vmatprep.subr.mxu0 0.0
        %2306 = vmatpush1.msra.mxu0 0.0
        %2307 = vmatprep.subr.mxu0 0.0
        %2308 = vmatpush1.msra.mxu0 0.0
        %2309 = vmatprep.subr.mxu0 0.0
        %2310 = vmatpush1.msra.mxu0 0.0
        %2311 = vmatprep.mubr.f32.mxu0 0.0
        %2312 = vmatmul.mubr.f32.gmra.mrb[0].mxu0 %v2245
        %v2313 = vpop.f32.mrb[0].mxu0
        %v2314 = vadd.f32 0.0, %v2313
        %v2315 = vpop.f32.mrb[0].mxu0
        %2316 = vdwg.mxu0
        %2317 = vrot.lane.b32.xlu0 %v1899, 112
        %v2318 = vpop.permute.xlu0 %2317
        %2319 = vrot.lane.b32.xlu0 %v1978, 112
        %v2320 = vpop.permute.xlu0 %2319
        %v2321 = vsel %vm998, %v2318, 0
        %v2323 = vsel %vm998, %v2320, 0
        %2325 = vmatprep.subr.mxu0 0.0
        %2326 = vmatpush1.xpose.msra.mxu0 %v2323
        %2327 = vmatprep.subr.mxu0 0.0
        %2328 = vmatpush1.xpose.msra.mxu0 0.0
        %2329 = vmatprep.subr.mxu0 0.0
        %2330 = vmatpush1.xpose.msra.mxu0 0.0
        %2331 = vmatprep.subr.mxu0 0.0
        %2332 = vmatpush1.xpose.msra.mxu0 0.0
        %2333 = vmatprep.subr.mxu0 0.0
        %2334 = vmatpush1.xpose.msra.mxu0 0.0
        %2335 = vmatprep.subr.mxu0 0.0
        %2336 = vmatpush1.xpose.msra.mxu0 0.0
        %2337 = vmatprep.subr.mxu0 0.0
        %2338 = vmatpush1.xpose.msra.mxu0 0.0
        %2339 = vmatprep.subr.mxu0 0.0
        %2340 = vmatpush1.xpose.msra.mxu0 0.0
        %2341 = vmatprep.subr.mxu0 0.0
        %2342 = vmatpush1.xpose.msra.mxu0 0.0
        %2343 = vmatprep.subr.mxu0 0.0
        %2344 = vmatpush1.xpose.msra.mxu0 0.0
        %2345 = vmatprep.subr.mxu0 0.0
        %2346 = vmatpush1.xpose.msra.mxu0 0.0
        %2347 = vmatprep.subr.mxu0 0.0
        %2348 = vmatpush1.xpose.msra.mxu0 0.0
        %2349 = vmatprep.subr.mxu0 0.0
        %2350 = vmatpush1.xpose.msra.mxu0 0.0
        %2351 = vmatprep.subr.mxu0 0.0
        %2352 = vmatpush1.xpose.msra.mxu0 0.0
        %2353 = vmatprep.subr.mxu0 0.0
        %2354 = vmatpush1.xpose.msra.mxu0 0.0
        %2355 = vmatprep.subr.mxu0 0.0
        %2356 = vmatpush1.xpose.msra.mxu0 0.0
        %2357 = vmatprep.subr.mxu0 0.0
        %2358 = vmatpush1.xpose.msra.mxu0 0.0
        %2359 = vmatprep.subr.mxu0 0.0
        %2360 = vmatpush1.xpose.msra.mxu0 0.0
        %2361 = vmatprep.subr.mxu0 0.0
        %2362 = vmatpush1.xpose.msra.mxu0 0.0
        %2363 = vmatprep.subr.mxu0 0.0
        %2364 = vmatpush1.xpose.msra.mxu0 0.0
        %2365 = vmatprep.subr.mxu0 0.0
        %2366 = vmatpush1.xpose.msra.mxu0 0.0
        %2367 = vmatprep.subr.mxu0 0.0
        %2368 = vmatpush1.xpose.msra.mxu0 0.0
        %2369 = vmatprep.subr.mxu0 0.0
        %2370 = vmatpush1.xpose.msra.mxu0 0.0
        %2371 = vmatprep.subr.mxu0 0.0
        %2372 = vmatpush1.xpose.msra.mxu0 0.0
        %2373 = vmatprep.subr.mxu0 0.0
        %2374 = vmatpush1.xpose.msra.mxu0 0.0
        %2375 = vmatprep.subr.mxu0 0.0
        %2376 = vmatpush1.xpose.msra.mxu0 0.0
        %2377 = vmatprep.subr.mxu0 0.0
        %2378 = vmatpush1.xpose.msra.mxu0 0.0
        %2379 = vmatprep.subr.mxu0 0.0
        %2380 = vmatpush1.xpose.msra.mxu0 0.0
        %2381 = vmatprep.subr.mxu0 0.0
        %2382 = vmatpush1.xpose.msra.mxu0 0.0
        %2383 = vmatprep.subr.mxu0 0.0
        %2384 = vmatpush1.xpose.msra.mxu0 0.0
        %2385 = vmatprep.subr.mxu0 0.0
        %2386 = vmatpush1.xpose.msra.mxu0 0.0
        %2387 = vmatprep.subr.mxu0 0.0
        %2388 = vmatpush1.xpose.msra.mxu0 0.0
        %2389 = vmatprep.mubr.f32.mxu0 0.0
        %2390 = vmatmul.mubr.f32.gmra.mrb[0].mxu0 %v2321
        %v2391 = vpop.f32.mrb[0].mxu0
        %v2392 = vadd.f32 0.0, %v2391
        %v2393 = vpop.f32.mrb[0].mxu0
        %2394 = vdwg.mxu0
        %v2395 = vmul.f32 %v2392, 0.35355338
        %v2396 = vsel %vm998, %v2395, -inf
        %2397 = vmax.xlane.f32.xlu0 %v2396
        %v2398 = vpop.xlane.xlu0 %2397
        %v2399 = vsub.f32 %v2395, %v2398
        %v2400 = vmul.f32 %v2399, 1.442695
        %v2401 = vpow.pop %v2400
        %v2402 = vsel %vm998, %v2401, 0.0
        %2403 = vadd.xlane.f32.xlu0 %v2402
        %v2404 = vpop.xlane.xlu0 %2403
        %v2405 = vrcp.pop %v2404
        %v2406 = vmul.f32 %v2404, %v2405
        %v2407 = vsub.f32 2.0, %v2406
        %v2408 = vmul.f32 %v2405, %v2407
        %v2409 = vmul.f32 %v2401, %v2408
        %2410 = vrot.lane.b32.xlu0 %v1978, 80
        %v2411 = vpop.permute.xlu0 %2410
        %v2414 = vsel %vm998, %v2409, 0
        %2416 = vmatprep.subr.mxu0 0.0
        %2417 = vmatpush1.msra.mxu0 %v2411
        %2418 = vmatprep.subr.mxu0 0.0
        %2419 = vmatpush1.msra.mxu0 0.0
        %2420 = vmatprep.subr.mxu0 0.0
        %2421 = vmatpush1.msra.mxu0 0.0
        %2422 = vmatprep.subr.mxu0 0.0
        %2423 = vmatpush1.msra.mxu0 0.0
        %2424 = vmatprep.subr.mxu0 0.0
        %2425 = vmatpush1.msra.mxu0 0.0
        %2426 = vmatprep.subr.mxu0 0.0
        %2427 = vmatpush1.msra.mxu0 0.0
        %2428 = vmatprep.subr.mxu0 0.0
        %2429 = vmatpush1.msra.mxu0 0.0
        %2430 = vmatprep.subr.mxu0 0.0
        %2431 = vmatpush1.msra.mxu0 0.0
        %2432 = vmatprep.subr.mxu0 0.0
        %2433 = vmatpush1.msra.mxu0 0.0
        %2434 = vmatprep.subr.mxu0 0.0
        %2435 = vmatpush1.msra.mxu0 0.0
        %2436 = vmatprep.subr.mxu0 0.0
        %2437 = vmatpush1.msra.mxu0 0.0
        %2438 = vmatprep.subr.mxu0 0.0
        %2439 = vmatpush1.msra.mxu0 0.0
        %2440 = vmatprep.subr.mxu0 0.0
        %2441 = vmatpush1.msra.mxu0 0.0
        %2442 = vmatprep.subr.mxu0 0.0
        %2443 = vmatpush1.msra.mxu0 0.0
        %2444 = vmatprep.subr.mxu0 0.0
        %2445 = vmatpush1.msra.mxu0 0.0
        %2446 = vmatprep.subr.mxu0 0.0
        %2447 = vmatpush1.msra.mxu0 0.0
        %2448 = vmatprep.subr.mxu0 0.0
        %2449 = vmatpush1.msra.mxu0 0.0
        %2450 = vmatprep.subr.mxu0 0.0
        %2451 = vmatpush1.msra.mxu0 0.0
        %2452 = vmatprep.subr.mxu0 0.0
        %2453 = vmatpush1.msra.mxu0 0.0
        %2454 = vmatprep.subr.mxu0 0.0
        %2455 = vmatpush1.msra.mxu0 0.0
        %2456 = vmatprep.subr.mxu0 0.0
        %2457 = vmatpush1.msra.mxu0 0.0
        %2458 = vmatprep.subr.mxu0 0.0
        %2459 = vmatpush1.msra.mxu0 0.0
        %2460 = vmatprep.subr.mxu0 0.0
        %2461 = vmatpush1.msra.mxu0 0.0
        %2462 = vmatprep.subr.mxu0 0.0
        %2463 = vmatpush1.msra.mxu0 0.0
        %2464 = vmatprep.subr.mxu0 0.0
        %2465 = vmatpush1.msra.mxu0 0.0
        %2466 = vmatprep.subr.mxu0 0.0
        %2467 = vmatpush1.msra.mxu0 0.0
        %2468 = vmatprep.subr.mxu0 0.0
        %2469 = vmatpush1.msra.mxu0 0.0
        %2470 = vmatprep.subr.mxu0 0.0
        %2471 = vmatpush1.msra.mxu0 0.0
        %2472 = vmatprep.subr.mxu0 0.0
        %2473 = vmatpush1.msra.mxu0 0.0
        %2474 = vmatprep.subr.mxu0 0.0
        %2475 = vmatpush1.msra.mxu0 0.0
        %2476 = vmatprep.subr.mxu0 0.0
        %2477 = vmatpush1.msra.mxu0 0.0
        %2478 = vmatprep.subr.mxu0 0.0
        %2479 = vmatpush1.msra.mxu0 0.0
        %2480 = vmatprep.mubr.f32.mxu0 0.0
        %2481 = vmatmul.mubr.f32.gmra.mrb[0].mxu0 %v2414
        %v2482 = vpop.f32.mrb[0].mxu0
        %v2483 = vadd.f32 0.0, %v2482
        %v2484 = vpop.f32.mrb[0].mxu0
        %2485 = vdwg.mxu0
        %2486 = vrot.lane.b32.xlu0 %v1899, 104
        %v2487 = vpop.permute.xlu0 %2486
        %2488 = vrot.lane.b32.xlu0 %v1978, 104
        %v2489 = vpop.permute.xlu0 %2488
        %v2490 = vsel %vm998, %v2487, 0
        %v2492 = vsel %vm998, %v2489, 0
        %2494 = vmatprep.subr.mxu0 0.0
        %2495 = vmatpush1.xpose.msra.mxu0 %v2492
        %2496 = vmatprep.subr.mxu0 0.0
        %2497 = vmatpush1.xpose.msra.mxu0 0.0
        %2498 = vmatprep.subr.mxu0 0.0
        %2499 = vmatpush1.xpose.msra.mxu0 0.0
        %2500 = vmatprep.subr.mxu0 0.0
        %2501 = vmatpush1.xpose.msra.mxu0 0.0
        %2502 = vmatprep.subr.mxu0 0.0
        %2503 = vmatpush1.xpose.msra.mxu0 0.0
        %2504 = vmatprep.subr.mxu0 0.0
        %2505 = vmatpush1.xpose.msra.mxu0 0.0
        %2506 = vmatprep.subr.mxu0 0.0
        %2507 = vmatpush1.xpose.msra.mxu0 0.0
        %2508 = vmatprep.subr.mxu0 0.0
        %2509 = vmatpush1.xpose.msra.mxu0 0.0
        %2510 = vmatprep.subr.mxu0 0.0
        %2511 = vmatpush1.xpose.msra.mxu0 0.0
        %2512 = vmatprep.subr.mxu0 0.0
        %2513 = vmatpush1.xpose.msra.mxu0 0.0
        %2514 = vmatprep.subr.mxu0 0.0
        %2515 = vmatpush1.xpose.msra.mxu0 0.0
        %2516 = vmatprep.subr.mxu0 0.0
        %2517 = vmatpush1.xpose.msra.mxu0 0.0
        %2518 = vmatprep.subr.mxu0 0.0
        %2519 = vmatpush1.xpose.msra.mxu0 0.0
        %2520 = vmatprep.subr.mxu0 0.0
        %2521 = vmatpush1.xpose.msra.mxu0 0.0
        %2522 = vmatprep.subr.mxu0 0.0
        %2523 = vmatpush1.xpose.msra.mxu0 0.0
        %2524 = vmatprep.subr.mxu0 0.0
        %2525 = vmatpush1.xpose.msra.mxu0 0.0
        %2526 = vmatprep.subr.mxu0 0.0
        %2527 = vmatpush1.xpose.msra.mxu0 0.0
        %2528 = vmatprep.subr.mxu0 0.0
        %2529 = vmatpush1.xpose.msra.mxu0 0.0
        %2530 = vmatprep.subr.mxu0 0.0
        %2531 = vmatpush1.xpose.msra.mxu0 0.0
        %2532 = vmatprep.subr.mxu0 0.0
        %2533 = vmatpush1.xpose.msra.mxu0 0.0
        %2534 = vmatprep.subr.mxu0 0.0
        %2535 = vmatpush1.xpose.msra.mxu0 0.0
        %2536 = vmatprep.subr.mxu0 0.0
        %2537 = vmatpush1.xpose.msra.mxu0 0.0
        %2538 = vmatprep.subr.mxu0 0.0
        %2539 = vmatpush1.xpose.msra.mxu0 0.0
        %2540 = vmatprep.subr.mxu0 0.0
        %2541 = vmatpush1.xpose.msra.mxu0 0.0
        %2542 = vmatprep.subr.mxu0 0.0
        %2543 = vmatpush1.xpose.msra.mxu0 0.0
        %2544 = vmatprep.subr.mxu0 0.0
        %2545 = vmatpush1.xpose.msra.mxu0 0.0
        %2546 = vmatprep.subr.mxu0 0.0
        %2547 = vmatpush1.xpose.msra.mxu0 0.0
        %2548 = vmatprep.subr.mxu0 0.0
        %2549 = vmatpush1.xpose.msra.mxu0 0.0
        %2550 = vmatprep.subr.mxu0 0.0
        %2551 = vmatpush1.xpose.msra.mxu0 0.0
        %2552 = vmatprep.subr.mxu0 0.0
        %2553 = vmatpush1.xpose.msra.mxu0 0.0
        %2554 = vmatprep.subr.mxu0 0.0
        %2555 = vmatpush1.xpose.msra.mxu0 0.0
        %2556 = vmatprep.subr.mxu0 0.0
        %2557 = vmatpush1.xpose.msra.mxu0 0.0
        %2558 = vmatprep.mubr.f32.mxu0 0.0
        %2559 = vmatmul.mubr.f32.gmra.mrb[0].mxu0 %v2490
        %v2560 = vpop.f32.mrb[0].mxu0
        %v2561 = vadd.f32 0.0, %v2560
        %v2562 = vpop.f32.mrb[0].mxu0
        %2563 = vdwg.mxu0
        %v2564 = vmul.f32 %v2561, 0.35355338
        %v2565 = vsel %vm998, %v2564, -inf
        %2566 = vmax.xlane.f32.xlu0 %v2565
        %v2567 = vpop.xlane.xlu0 %2566
        %v2568 = vsub.f32 %v2564, %v2567
        %v2569 = vmul.f32 %v2568, 1.442695
        %v2570 = vpow.pop %v2569
        %v2571 = vsel %vm998, %v2570, 0.0
        %2572 = vadd.xlane.f32.xlu0 %v2571
        %v2573 = vpop.xlane.xlu0 %2572
        %v2574 = vrcp.pop %v2573
        %v2575 = vmul.f32 %v2573, %v2574
        %v2576 = vsub.f32 2.0, %v2575
        %v2577 = vmul.f32 %v2574, %v2576
        %v2578 = vmul.f32 %v2570, %v2577
        %2579 = vrot.lane.b32.xlu0 %v1978, 72
        %v2580 = vpop.permute.xlu0 %2579
        %v2583 = vsel %vm998, %v2578, 0
        %2585 = vmatprep.subr.mxu0 0.0
        %2586 = vmatpush1.msra.mxu0 %v2580
        %2587 = vmatprep.subr.mxu0 0.0
        %2588 = vmatpush1.msra.mxu0 0.0
        %2589 = vmatprep.subr.mxu0 0.0
        %2590 = vmatpush1.msra.mxu0 0.0
        %2591 = vmatprep.subr.mxu0 0.0
        %2592 = vmatpush1.msra.mxu0 0.0
        %2593 = vmatprep.subr.mxu0 0.0
        %2594 = vmatpush1.msra.mxu0 0.0
        %2595 = vmatprep.subr.mxu0 0.0
        %2596 = vmatpush1.msra.mxu0 0.0
        %2597 = vmatprep.subr.mxu0 0.0
        %2598 = vmatpush1.msra.mxu0 0.0
        %2599 = vmatprep.subr.mxu0 0.0
        %2600 = vmatpush1.msra.mxu0 0.0
        %2601 = vmatprep.subr.mxu0 0.0
        %2602 = vmatpush1.msra.mxu0 0.0
        %2603 = vmatprep.subr.mxu0 0.0
        %2604 = vmatpush1.msra.mxu0 0.0
        %2605 = vmatprep.subr.mxu0 0.0
        %2606 = vmatpush1.msra.mxu0 0.0
        %2607 = vmatprep.subr.mxu0 0.0
        %2608 = vmatpush1.msra.mxu0 0.0
        %2609 = vmatprep.subr.mxu0 0.0
        %2610 = vmatpush1.msra.mxu0 0.0
        %2611 = vmatprep.subr.mxu0 0.0
        %2612 = vmatpush1.msra.mxu0 0.0
        %2613 = vmatprep.subr.mxu0 0.0
        %2614 = vmatpush1.msra.mxu0 0.0
        %2615 = vmatprep.subr.mxu0 0.0
        %2616 = vmatpush1.msra.mxu0 0.0
        %2617 = vmatprep.subr.mxu0 0.0
        %2618 = vmatpush1.msra.mxu0 0.0
        %2619 = vmatprep.subr.mxu0 0.0
        %2620 = vmatpush1.msra.mxu0 0.0
        %2621 = vmatprep.subr.mxu0 0.0
        %2622 = vmatpush1.msra.mxu0 0.0
        %2623 = vmatprep.subr.mxu0 0.0
        %2624 = vmatpush1.msra.mxu0 0.0
        %2625 = vmatprep.subr.mxu0 0.0
        %2626 = vmatpush1.msra.mxu0 0.0
        %2627 = vmatprep.subr.mxu0 0.0
        %2628 = vmatpush1.msra.mxu0 0.0
        %2629 = vmatprep.subr.mxu0 0.0
        %2630 = vmatpush1.msra.mxu0 0.0
        %2631 = vmatprep.subr.mxu0 0.0
        %2632 = vmatpush1.msra.mxu0 0.0
        %2633 = vmatprep.subr.mxu0 0.0
        %2634 = vmatpush1.msra.mxu0 0.0
        %2635 = vmatprep.subr.mxu0 0.0
        %2636 = vmatpush1.msra.mxu0 0.0
        %2637 = vmatprep.subr.mxu0 0.0
        %2638 = vmatpush1.msra.mxu0 0.0
        %2639 = vmatprep.subr.mxu0 0.0
        %2640 = vmatpush1.msra.mxu0 0.0
        %2641 = vmatprep.subr.mxu0 0.0
        %2642 = vmatpush1.msra.mxu0 0.0
        %2643 = vmatprep.subr.mxu0 0.0
        %2644 = vmatpush1.msra.mxu0 0.0
        %2645 = vmatprep.subr.mxu0 0.0
        %2646 = vmatpush1.msra.mxu0 0.0
        %2647 = vmatprep.subr.mxu0 0.0
        %2648 = vmatpush1.msra.mxu0 0.0
        %2649 = vmatprep.mubr.f32.mxu0 0.0
        %2650 = vmatmul.mubr.f32.gmra.mrb[0].mxu0 %v2583
        %v2651 = vpop.f32.mrb[0].mxu0
        %v2652 = vadd.f32 0.0, %v2651
        %v2653 = vpop.f32.mrb[0].mxu0
        %2654 = vdwg.mxu0
        %2656 = vrot.lane.b32.xlu0 %v2314, 8
        %v2657 = vpop.permute.xlu0 %2656
        %2660 = vrot.lane.b32.xlu0 %v2483, 16
        %v2661 = vpop.permute.xlu0 %2660
        %2664 = vrot.lane.b32.xlu0 %v2652, 24
        %v2665 = vpop.permute.xlu0 %2664
        %v2667 = vsel %vm998, %v2145, %v2657
        %v2668 = vsel %vm1690, %v2667, %v2661
        %v2669 = vsel %vm1692, %v2668, %v2665
        %v2671 = vlaneseq
        %v2672 = vshrl.u32 %v2671, 7
        %v2673 = vsub.s32 0, %v2672
        %v2674 = vrot.slane %v1822, %v2673
        %v2677 = vsel %vm792, %v2669, 0
        %2679 = vmatprep.subr.mxu0 0.0
        %2680 = vmatpush1.msra.mxu0 %v1818
        %2681 = vmatprep.subr.mxu0 0.0
        %2682 = vmatpush1.msra.mxu0 %v1819
        %2683 = vmatprep.subr.mxu0 0.0
        %2684 = vmatpush1.msra.mxu0 %v1820
        %2685 = vmatprep.subr.mxu0 0.0
        %2686 = vmatpush1.msra.mxu0 %v1821
        %2687 = vmatprep.subr.mxu0 0.0
        %2688 = vmatpush1.msra.mxu0 0.0
        %2689 = vmatprep.subr.mxu0 0.0
        %2690 = vmatpush1.msra.mxu0 0.0
        %2691 = vmatprep.subr.mxu0 0.0
        %2692 = vmatpush1.msra.mxu0 0.0
        %2693 = vmatprep.subr.mxu0 0.0
        %2694 = vmatpush1.msra.mxu0 0.0
        %2695 = vmatprep.subr.mxu0 0.0
        %2696 = vmatpush1.msra.mxu0 0.0
        %2697 = vmatprep.subr.mxu0 0.0
        %2698 = vmatpush1.msra.mxu0 0.0
        %2699 = vmatprep.subr.mxu0 0.0
        %2700 = vmatpush1.msra.mxu0 0.0
        %2701 = vmatprep.subr.mxu0 0.0
        %2702 = vmatpush1.msra.mxu0 0.0
        %2703 = vmatprep.subr.mxu0 0.0
        %2704 = vmatpush1.msra.mxu0 0.0
        %2705 = vmatprep.subr.mxu0 0.0
        %2706 = vmatpush1.msra.mxu0 0.0
        %2707 = vmatprep.subr.mxu0 0.0
        %2708 = vmatpush1.msra.mxu0 0.0
        %2709 = vmatprep.subr.mxu0 0.0
        %2710 = vmatpush1.msra.mxu0 0.0
        %2711 = vmatprep.subr.mxu0 0.0
        %2712 = vmatpush1.msra.mxu0 0.0
        %2713 = vmatprep.subr.mxu0 0.0
        %2714 = vmatpush1.msra.mxu0 0.0
        %2715 = vmatprep.subr.mxu0 0.0
        %2716 = vmatpush1.msra.mxu0 0.0
        %2717 = vmatprep.subr.mxu0 0.0
        %2718 = vmatpush1.msra.mxu0 0.0
        %2719 = vmatprep.subr.mxu0 0.0
        %2720 = vmatpush1.msra.mxu0 0.0
        %2721 = vmatprep.subr.mxu0 0.0
        %2722 = vmatpush1.msra.mxu0 0.0
        %2723 = vmatprep.subr.mxu0 0.0
        %2724 = vmatpush1.msra.mxu0 0.0
        %2725 = vmatprep.subr.mxu0 0.0
        %2726 = vmatpush1.msra.mxu0 0.0
        %2727 = vmatprep.subr.mxu0 0.0
        %2728 = vmatpush1.msra.mxu0 0.0
        %2729 = vmatprep.subr.mxu0 0.0
        %2730 = vmatpush1.msra.mxu0 0.0
        %2731 = vmatprep.subr.mxu0 0.0
        %2732 = vmatpush1.msra.mxu0 0.0
        %2733 = vmatprep.subr.mxu0 0.0
        %2734 = vmatpush1.msra.mxu0 0.0
        %2735 = vmatprep.subr.mxu0 0.0
        %2736 = vmatpush1.msra.mxu0 0.0
        %2737 = vmatprep.subr.mxu0 0.0
        %2738 = vmatpush1.msra.mxu0 0.0
        %2739 = vmatprep.subr.mxu0 0.0
        %2740 = vmatpush1.msra.mxu0 0.0
        %2741 = vmatprep.subr.mxu0 0.0
        %2742 = vmatpush1.msra.mxu0 0.0
        %2743 = vmatprep.mubr.f32.mxu0 0.0
        %2744 = vmatmul.mubr.f32.gmra.mrb[0].mxu0 %v2677
        %v2745 = vpop.f32.mrb[0].mxu0
        %v2746 = vadd.f32 %v2674, %v2745
        %v2747 = vpop.f32.mrb[0].mxu0
        %2748 = vdwg.mxu0
        %v2749 = vadd.f32 %v1773, %v2746
        %v2750 = vsel %vm792, %v2749, 0.0
        %2751 = vadd.xlane.f32.xlu0 %v2750
        %v2752 = vpop.xlane.xlu0 %2751
        %v2753 = vmul.f32 %v2752, %v796
        %v2754 = vsub.f32 %v2749, %v2753
        %v2755 = vmul.f32 %v2754, %v2754
        %v2756 = vsel %vm792, %v2755, 0.0
        %2757 = vadd.xlane.f32.xlu0 %v2756
        %v2758 = vpop.xlane.xlu0 %2757
        %v2759 = vmul.f32 %v2758, 0.032258064
        %v2760 = vrsqrt.pop %v2759
        %v2761 = vmul.f32 %v2759, %v2760
        %vm2762 = vcmp.eq.f32.partialorder %v2759, inf
        %v2763 = vsel %vm2762, %v2759, %v2761
        %vm2764 = vcmp.eq.f32.partialorder %v2759, 0.0
        %v2765 = vand.u32 %v2759, 2147483648
        %v2766 = vsel %vm2764, %v2765, %v2763
        %v2767 = vadd.f32 %v2766, 1e-06
        %v2768 = vrcp.pop %v2767
        %v2769 = vmul.f32 %v2767, %v2768
        %v2770 = vsub.f32 2.0, %v2769
        %v2771 = vmul.f32 %v2768, %v2770
        %v2772 = vmul.f32 %v2754, %v2771
        %v2773 = vrot.slane %v790, 2
        %s2774 = vtos %v2773
        %v2775 = vstv %s2774
        %v2777 = vmul.f32 %v2772, %v2775
        %2778 = vrot.lane.b32.xlu0 %v2773, 127
        %v2779 = vpop.permute.xlu0 %2778
        %s2780 = vtos %v2779
        %v2781 = vstv %s2780
        %v2783 = vadd.f32 %v2777, %v2781
        %v2784 = vld [vmem:[%s16] sm:$0xff]
        %v2785 = vld [vmem:[%s16 + $0x8] sm:$0xff]
        %v2786 = vld [vmem:[%s16 + $0x10] sm:$0xff]
        %v2787 = vld [vmem:[%s16 + $0x18] sm:$0xff]
        %v2788 = vld [vmem:[%s17] sm:$0x1]
        %v2790 = vlaneseq
        %v2791 = vshrl.u32 %v2790, 7
        %v2792 = vsub.s32 0, %v2791
        %v2793 = vrot.slane %v2788, %v2792
        %v2796 = vsel %vm792, %v2783, 0
        %2798 = vmatprep.subr.mxu0 0.0
        %2799 = vmatpush1.msra.mxu0 %v2784
        %2800 = vmatprep.subr.mxu0 0.0
        %2801 = vmatpush1.msra.mxu0 %v2785
        %2802 = vmatprep.subr.mxu0 0.0
        %2803 = vmatpush1.msra.mxu0 %v2786
        %2804 = vmatprep.subr.mxu0 0.0
        %2805 = vmatpush1.msra.mxu0 %v2787
        %2806 = vmatprep.subr.mxu0 0.0
        %2807 = vmatpush1.msra.mxu0 0.0
        %2808 = vmatprep.subr.mxu0 0.0
        %2809 = vmatpush1.msra.mxu0 0.0
        %2810 = vmatprep.subr.mxu0 0.0
        %2811 = vmatpush1.msra.mxu0 0.0
        %2812 = vmatprep.subr.mxu0 0.0
        %2813 = vmatpush1.msra.mxu0 0.0
        %2814 = vmatprep.subr.mxu0 0.0
        %2815 = vmatpush1.msra.mxu0 0.0
        %2816 = vmatprep.subr.mxu0 0.0
        %2817 = vmatpush1.msra.mxu0 0.0
        %2818 = vmatprep.subr.mxu0 0.0
        %2819 = vmatpush1.msra.mxu0 0.0
        %2820 = vmatprep.subr.mxu0 0.0
        %2821 = vmatpush1.msra.mxu0 0.0
        %2822 = vmatprep.subr.mxu0 0.0
        %2823 = vmatpush1.msra.mxu0 0.0
        %2824 = vmatprep.subr.mxu0 0.0
        %2825 = vmatpush1.msra.mxu0 0.0
        %2826 = vmatprep.subr.mxu0 0.0
        %2827 = vmatpush1.msra.mxu0 0.0
        %2828 = vmatprep.subr.mxu0 0.0
        %2829 = vmatpush1.msra.mxu0 0.0
        %2830 = vmatprep.subr.mxu0 0.0
        %2831 = vmatpush1.msra.mxu0 0.0
        %2832 = vmatprep.subr.mxu0 0.0
        %2833 = vmatpush1.msra.mxu0 0.0
        %2834 = vmatprep.subr.mxu0 0.0
        %2835 = vmatpush1.msra.mxu0 0.0
        %2836 = vmatprep.subr.mxu0 0.0
        %2837 = vmatpush1.msra.mxu0 0.0
        %2838 = vmatprep.subr.mxu0 0.0
        %2839 = vmatpush1.msra.mxu0 0.0
        %2840 = vmatprep.subr.mxu0 0.0
        %2841 = vmatpush1.msra.mxu0 0.0
        %2842 = vmatprep.subr.mxu0 0.0
        %2843 = vmatpush1.msra.mxu0 0.0
        %2844 = vmatprep.subr.mxu0 0.0
        %2845 = vmatpush1.msra.mxu0 0.0
        %2846 = vmatprep.subr.mxu0 0.0
        %2847 = vmatpush1.msra.mxu0 0.0
        %2848 = vmatprep.subr.mxu0 0.0
        %2849 = vmatpush1.msra.mxu0 0.0
        %2850 = vmatprep.subr.mxu0 0.0
        %2851 = vmatpush1.msra.mxu0 0.0
        %2852 = vmatprep.subr.mxu0 0.0
        %2853 = vmatpush1.msra.mxu0 0.0
        %2854 = vmatprep.subr.mxu0 0.0
        %2855 = vmatpush1.msra.mxu0 0.0
        %2856 = vmatprep.subr.mxu0 0.0
        %2857 = vmatpush1.msra.mxu0 0.0
        %2858 = vmatprep.subr.mxu0 0.0
        %2859 = vmatpush1.msra.mxu0 0.0
        %2860 = vmatprep.subr.mxu0 0.0
        %2861 = vmatpush1.msra.mxu0 0.0
        %2862 = vmatprep.mubr.f32.mxu0 0.0
        %2863 = vmatmul.mubr.f32.gmra.mrb[0].mxu0 %v2796
        %v2864 = vpop.f32.mrb[0].mxu0
        %v2865 = vadd.f32 %v2793, %v2864
        %v2866 = vpop.f32.mrb[0].mxu0
        %2867 = vdwg.mxu0
        %v2868 = vmax.f32 %v2865, 0.0
        %v2869 = vld [vmem:[%s18] sm:$0xff]
        %v2870 = vld [vmem:[%s18 + $0x8] sm:$0xff]
        %v2871 = vld [vmem:[%s18 + $0x10] sm:$0xff]
        %v2872 = vld [vmem:[%s18 + $0x18] sm:$0xff]
        %v2873 = vld [vmem:[%s18 + $0x20] sm:$0xff]
        %v2874 = vld [vmem:[%s18 + $0x28] sm:$0xff]
        %v2875 = vld [vmem:[%s18 + $0x30] sm:$0xff]
        %v2876 = vld [vmem:[%s18 + $0x38] sm:$0xff]
        %vm2877 = vcmask 523264
        %v2879 = vsel %vm2877, %v2868, 0
        %2881 = vmatprep.subr.mxu0 0.0
        %2882 = vmatpush1.msra.mxu0 %v2869
        %2883 = vmatprep.subr.mxu0 0.0
        %2884 = vmatpush1.msra.mxu0 %v2870
        %2885 = vmatprep.subr.mxu0 0.0
        %2886 = vmatpush1.msra.mxu0 %v2871
        %2887 = vmatprep.subr.mxu0 0.0
        %2888 = vmatpush1.msra.mxu0 %v2872
        %2889 = vmatprep.subr.mxu0 0.0
        %2890 = vmatpush1.msra.mxu0 %v2873
        %2891 = vmatprep.subr.mxu0 0.0
        %2892 = vmatpush1.msra.mxu0 %v2874
        %2893 = vmatprep.subr.mxu0 0.0
        %2894 = vmatpush1.msra.mxu0 %v2875
        %2895 = vmatprep.subr.mxu0 0.0
        %2896 = vmatpush1.msra.mxu0 %v2876
        %2897 = vmatprep.subr.mxu0 0.0
        %2898 = vmatpush1.msra.mxu0 0.0
        %2899 = vmatprep.subr.mxu0 0.0
        %2900 = vmatpush1.msra.mxu0 0.0
        %2901 = vmatprep.subr.mxu0 0.0
        %2902 = vmatpush1.msra.mxu0 0.0
        %2903 = vmatprep.subr.mxu0 0.0
        %2904 = vmatpush1.msra.mxu0 0.0
        %2905 = vmatprep.subr.mxu0 0.0
        %2906 = vmatpush1.msra.mxu0 0.0
        %2907 = vmatprep.subr.mxu0 0.0
        %2908 = vmatpush1.msra.mxu0 0.0
        %2909 = vmatprep.subr.mxu0 0.0
        %2910 = vmatpush1.msra.mxu0 0.0
        %2911 = vmatprep.subr.mxu0 0.0
        %2912 = vmatpush1.msra.mxu0 0.0
        %2913 = vmatprep.subr.mxu0 0.0
        %2914 = vmatpush1.msra.mxu0 0.0
        %2915 = vmatprep.subr.mxu0 0.0
        %2916 = vmatpush1.msra.mxu0 0.0
        %2917 = vmatprep.subr.mxu0 0.0
        %2918 = vmatpush1.msra.mxu0 0.0
        %2919 = vmatprep.subr.mxu0 0.0
        %2920 = vmatpush1.msra.mxu0 0.0
        %2921 = vmatprep.subr.mxu0 0.0
        %2922 = vmatpush1.msra.mxu0 0.0
        %2923 = vmatprep.subr.mxu0 0.0
        %2924 = vmatpush1.msra.mxu0 0.0
        %2925 = vmatprep.subr.mxu0 0.0
        %2926 = vmatpush1.msra.mxu0 0.0
        %2927 = vmatprep.subr.mxu0 0.0
        %2928 = vmatpush1.msra.mxu0 0.0
        %2929 = vmatprep.subr.mxu0 0.0
        %2930 = vmatpush1.msra.mxu0 0.0
        %2931 = vmatprep.subr.mxu0 0.0
        %2932 = vmatpush1.msra.mxu0 0.0
        %2933 = vmatprep.subr.mxu0 0.0
        %2934 = vmatpush1.msra.mxu0 0.0
        %2935 = vmatprep.subr.mxu0 0.0
        %2936 = vmatpush1.msra.mxu0 0.0
        %2937 = vmatprep.subr.mxu0 0.0
        %2938 = vmatpush1.msra.mxu0 0.0
        %2939 = vmatprep.subr.mxu0 0.0
        %2940 = vmatpush1.msra.mxu0 0.0
        %2941 = vmatprep.subr.mxu0 0.0
        %2942 = vmatpush1.msra.mxu0 0.0
        %2943 = vmatprep.subr.mxu0 0.0
        %2944 = vmatpush1.msra.mxu0 0.0
        %2945 = vmatprep.mubr.f32.mxu0 0.0
        %2946 = vmatmul.mubr.f32.gmra.mrb[0].mxu0 %v2879
        %v2947 = vpop.f32.mrb[0].mxu0
        %v2948 = vadd.f32 0.0, %v2947
        %v2949 = vpop.f32.mrb[0].mxu0
        %2950 = vdwg.mxu0
        %v2951 = vadd.f32 %v2749, %v2948
        %v2952 = vld [vmem:[%s19] sm:$0x1]
        %v2954 = vlaneseq
        %v2955 = vshrl.u32 %v2954, 7
        %v2956 = vsub.s32 0, %v2955
        %v2957 = vrot.slane %v2952, %v2956
        %v2959 = vadd.f32 %v2951, %v2957
        %2960 = vst.msk [vmem:[%s787] sm:$0xff] %vm792, %v2959
        %s2961 = sand.u32 %s482, 1
        %s2962 = scalar_lea.sflag [#allocation4], %s2961
        %s2963 = sand.u32 %s482, 1
        %s2964 = smul.addr %s2963, 8
        %s2965 = scalar_lea.vmem [#allocation19], %s2964
        // Predicated region
        $region141: #{tpu_custom_call.1} parent=99 // pred_check
          %p2966 = pneg %p492
        $region142: #{tpu_custom_call.1} parent=99 // pred_check_branch
          %2968 = sbr.rel (%p2966) target = $region144
        $region143: #{tpu_custom_call.1} parent=99 // pred_region
          %s2970 = ssub.s32 128, 128
          %2971 = vsyncadd %s2962, %s2970
          %s2972 = smul.addr %s44, 128
          %s2973 = scalar_lea.hbm %s20, %s2972
          %s2975 = sshll.u32 %s2965, 4
          %s2976 = int_to_ptr.vmem [resolvable:$true] %s2975
          %2978 = dma.vmem_to_hbm [thread:$0]  %s2976, 128, %s2973, %s2962
        $region144: #{tpu_custom_call.1} parent=99 // pred_fallthru
          _
      $region100: #{tpu_custom_call.1} parent=5 // pred_fallthru
        _
      %p2979 = scmp.le.s32.totalorder 2, %s39
      // Predicated region
      $region145: #{tpu_custom_call.1} parent=5 // pred_check
        %p2980 = pneg %p2979
      $region146: #{tpu_custom_call.1} parent=5 // pred_check_branch
        %2982 = sbr.rel (%p2980) target = $region148
      $region147: #{tpu_custom_call.1} parent=5 // pred_region
        %s2983 = ssub.s32 %s39, 2
        // Predicated region
        $region149: #{tpu_custom_call.1} parent=147 // pred_check
          %p2984 = pneg %p498
        $region150: #{tpu_custom_call.1} parent=147 // pred_check_branch
          %2986 = sbr.rel (%p2984) target = $region152
        $region151: #{tpu_custom_call.1} parent=147 // pred_region
          %s2987 = sand.u32 %s483, 1
          %s2988 = scalar_lea.sflag [#allocation4], %s2987
          %s2989 = sand.u32 %s483, 1
          %s2990 = smul.addr %s2989, 8
          %s2991 = scalar_lea.vmem [#allocation19], %s2990
          %2992 = dma.done %s2988, 128
        $region152: #{tpu_custom_call.1} parent=147 // pred_fallthru
          _
      $region148: #{tpu_custom_call.1} parent=5 // pred_fallthru
        _
    $region6: #{tpu_custom_call.1} parent=1 // loop_footer
      %s43 = sadd.s32 1, %s39
    $region7: #{tpu_custom_call.1} parent=1 // loop_footer_branch
      %38 = sbr.rel target = $region3
    $region8: #{tpu_custom_call.1} parent=1 // loop_exit
      _
    %2993 = vsyncpa [#allocation3], 1
    %s2994 = scalar_lea.sflag [#allocation3], 1
    %2995 = vsyncpa %s2994, 1
    %2996 = vsyncpa [#allocation6], 1
    %s2997 = scalar_lea.sflag [#allocation6], 1
    %2998 = vsyncpa %s2997, 1
    %2999 = vsyncpa [#allocation9], 1
    %3000 = vsyncpa [#allocation12], 1
    %3001 = vsyncpa [#allocation15], 1
    %3002 = vsyncpa [#allocation18], 1
    %3003 = vsyncpa [#allocation4], 1
    %s3004 = scalar_lea.sflag [#allocation4], 1
    %3005 = vsyncpa %s3004, 1

</llo_original>
